<compile_context>
chip_gen: v7x
topology: tpu7x:2x2x1
jax: 0.10.0
libtpu: 0.0.40
codegen_flags: <defaults>
</compile_context>

<pallas_src>
import numpy as np
import jax
import jax.numpy as jnp
from jax.experimental import pallas as pl
from jax.experimental.pallas import tpu as pltpu


# ----------------------------- fused kernel --------------------------------

def _lenet_kernel(x_ref, w1_ref, b1_ref, s1w_ref, s1h_ref,
                  w2_ref, b2_ref, s2w_ref, s2h_ref,
                  wf1_ref, bf1_ref, wf2_ref, bf2_ref, wf3_ref, bf3_ref,
                  o_ref):
    f32 = jnp.float32
    x = x_ref[0]                                        # (32, 128), lane = w*4 + c

    # conv1 + bias + ReLU: 5 structured matmuls (one per kernel row).
    y1 = jnp.dot(x[0:28, :], w1_ref[0], preferred_element_type=f32)
    for i in range(1, 5):
        y1 = y1 + jnp.dot(x[i:i + 28, :], w1_ref[i], preferred_element_type=f32)
    y1 = jnp.maximum(y1 + b1_ref[...], 0.0)             # (28, 224), lane = ow*8 + oc

    # pool1 fused: pairwise max + 0/1 selection matmuls (W then H).
    t = jnp.maximum(y1[:, 0:216], y1[:, 8:224])         # max over (ow, ow+1)
    t = jnp.dot(t, s1w_ref[...], preferred_element_type=f32)      # (28, 112)
    t = jnp.maximum(t[0:27, :], t[1:28, :])             # max over (oh, oh+1)
    p1 = jnp.dot(s1h_ref[...], t, preferred_element_type=f32)     # (14, 112), lane = w*8 + c

    # conv2 + bias + ReLU.
    y2 = jnp.dot(p1[0:10, :], w2_ref[0], preferred_element_type=f32)
    for i in range(1, 5):
        y2 = y2 + jnp.dot(p1[i:i + 10, :], w2_ref[i], preferred_element_type=f32)
    y2 = jnp.maximum(y2 + b2_ref[...], 0.0)             # (10, 160), lane = ow*16 + oc

    # pool2 fused.
    u = jnp.maximum(y2[:, 0:144], y2[:, 16:160])
    u = jnp.dot(u, s2w_ref[...], preferred_element_type=f32)      # (10, 80)
    u = jnp.maximum(u[0:9, :], u[1:10, :])
    p2 = jnp.dot(s2h_ref[...], u, preferred_element_type=f32)     # (5, 80), lane = w*16 + c

    # fc1: torch.flatten folded into 5 accumulated row-matmuls (weights
    # pre-reordered at init to the (a, b, c) layout the kernel produces).
    h = jnp.dot(p2[0:1, :], wf1_ref[0], preferred_element_type=f32)
    for a in range(1, 5):
        h = h + jnp.dot(p2[a:a + 1, :], wf1_ref[a], preferred_element_type=f32)
    h = jnp.maximum(h + bf1_ref[...], 0.0)                                       # (1, 128)
    h = jnp.maximum(jnp.dot(h, wf2_ref[...], preferred_element_type=f32)
                    + bf2_ref[...], 0.0)                                         # (1, 128)
    y = jnp.dot(h, wf3_ref[...], preferred_element_type=f32) + bf3_ref[...]      # (1, 128)
    o_ref[0] = y[:, 0:10]


def lenet_forward(x_nchw, params):
    n = x_nchw.shape[0]
    # Only remaining glue: repack the 24 KB input to (N, H, W*Cpad).
    x = jnp.transpose(x_nchw, (0, 2, 3, 1))                  # NHWC
    x = jnp.pad(x, ((0, 0), (0, 0), (0, 0), (0, 1)))         # C 3 -> 4
    x = x.reshape(n, 32, 128)                                # lane = w*4 + c

    order = ("w1", "b1", "s1w", "s1h", "w2", "b2", "s2w", "s2h",
             "wf1", "bf1", "wf2", "bf2", "wf3", "bf3")
    weights = [params[k] for k in order]

    def const_spec(a):
        return pl.BlockSpec(a.shape, lambda i, _nd=a.ndim: (0,) * _nd)

    flops_per_img = 2 * (5 * 28 * 128 * 224 + 28 * 216 * 112 + 14 * 27 * 112
                         + 5 * 10 * 112 * 160 + 10 * 144 * 80 + 5 * 9 * 80
                         + 5 * 80 * 128 + 128 * 128 + 128 * 128)
    cost = pl.CostEstimate(
        flops=n * flops_per_img, transcendentals=0,
        bytes_accessed=int(4 * (sum(int(w.size) for w in weights)
                                + x.size + n * 10)))

    out = pl.pallas_call(
        _lenet_kernel,
        out_shape=jax.ShapeDtypeStruct((n, 1, 10), jnp.float32),
        grid=(n,),
        in_specs=[pl.BlockSpec((1, 32, 128), lambda i: (i, 0, 0))]
                 + [const_spec(w) for w in weights],
        out_specs=pl.BlockSpec((1, 1, 10), lambda i: (i, 0, 0)),
        compiler_params=pltpu.CompilerParams(
            dimension_semantics=("parallel",)),   # 2 TensorCores on v7x
        cost_estimate=cost,
    )(x, *weights)
    return out.reshape(n, 10)


# ----------------------------- parameter prep ------------------------------

def init_params(key):
    ks = jax.random.split(key, 10)

    def u(k, shape, fan_in):
        bound = 1.0 / np.sqrt(fan_in)
        return np.asarray(jax.random.uniform(k, shape, jnp.float32,
                                             -bound, bound), dtype=np.float32)

    conv1_w = u(ks[0], (6, 3, 5, 5), 3 * 25)
    conv1_b = u(ks[1], (6,), 3 * 25)
    conv2_w = u(ks[2], (16, 6, 5, 5), 6 * 25)
    conv2_b = u(ks[3], (16,), 6 * 25)
    fc1_w = u(ks[4], (120, 400), 400)
    fc1_b = u(ks[5], (120,), 400)
    fc2_w = u(ks[6], (84, 120), 120)
    fc2_b = u(ks[7], (84,), 120)
    fc3_w = u(ks[8], (10, 84), 84)
    fc3_b = u(ks[9], (10,), 84)
    raw = (conv1_w, conv1_b, conv2_w, conv2_b, fc1_w, fc1_b,
           fc2_w, fc2_b, fc3_w, fc3_b)

    # conv1 structured weights: rows = w_in*4 + c_in (C pad 3->4),
    # cols = ow*8 + oc (OC pad 6->8); one matrix per kernel row i.
    w1 = np.zeros((5, 32 * 4, 28 * 8), np.float32)
    for i in range(5):
        for j in range(5):
            wij = conv1_w[:, :, i, j].T                     # (c_in=3, oc=6)
            for ow in range(28):
                w_in = ow + j
                w1[i, w_in * 4:w_in * 4 + 3, ow * 8:ow * 8 + 6] = wij
    b1 = np.tile(np.pad(conv1_b, (0, 2)), 28).reshape(1, 224).astype(np.float32)

    # pool1 0/1 selection matrices (pick even positions after pairwise max).
    s1w = np.zeros((27 * 8, 14 * 8), np.float32)
    for b in range(14):
        for c in range(8):
            s1w[2 * b * 8 + c, b * 8 + c] = 1.0
    s1h = np.zeros((14, 27), np.float32)
    for a in range(14):
        s1h[a, 2 * a] = 1.0

    # conv2 structured weights: rows = w_in*8 + c_in (C pad 6->8), cols = ow*16 + oc.
    w2 = np.zeros((5, 14 * 8, 10 * 16), np.float32)
    for i in range(5):
        for j in range(5):
            wij = conv2_w[:, :, i, j].T                     # (c_in=6, oc=16)
            for ow in range(10):
                w_in = ow + j
                w2[i, w_in * 8:w_in * 8 + 6, ow * 16:ow * 16 + 16] = wij
    b2 = np.tile(conv2_b, 10).reshape(1, 160).astype(np.float32)

    s2w = np.zeros((9 * 16, 5 * 16), np.float32)
    for b in range(5):
        for c in range(16):
            s2w[2 * b * 16 + c, b * 16 + c] = 1.0
    s2h = np.zeros((5, 9), np.float32)
    for a in range(5):
        s2h[a, 2 * a] = 1.0

    # fc1: torch feature index is c*25 + a*5 + b; kernel sees p2[a, b*16 + c].
    wf1 = np.zeros((5, 80, 128), np.float32)
    for a in range(5):
        for b in range(5):
            for c in range(16):
                wf1[a, b * 16 + c, :120] = fc1_w[:, c * 25 + a * 5 + b]
    bf1 = np.zeros((1, 128), np.float32); bf1[0, :120] = fc1_b
    wf2 = np.zeros((128, 128), np.float32); wf2[:120, :84] = fc2_w.T
    bf2 = np.zeros((1, 128), np.float32); bf2[0, :84] = fc2_b
    wf3 = np.zeros((128, 128), np.float32); wf3[:84, :10] = fc3_w.T
    bf3 = np.zeros((1, 128), np.float32); bf3[0, :10] = fc3_b

    params = {k: jnp.asarray(v) for k, v in dict(
        w1=w1, b1=b1, s1w=s1w, s1h=s1h, w2=w2, b2=b2, s2w=s2w, s2h=s2h,
        wf1=wf1, bf1=bf1, wf2=wf2, bf2=bf2, wf3=wf3, bf3=bf3).items()}
    return raw, params


# ----------------------------- numpy reference -----------------------------

def reference_forward(x, raw):
    (c1w, c1b, c2w, c2b, f1w, f1b, f2w, f2b, f3w, f3b) = [
        np.asarray(a, np.float64) for a in raw]
    x = np.asarray(x, np.float64)

    def conv(xa, w, b):
        n, cin, hh, ww = xa.shape
        oc, _, kh, kw = w.shape
        oh, ow = hh - kh + 1, ww - kw + 1
        y = np.zeros((n, oc, oh, ow))
        for i in range(kh):
            for j in range(kw):
                y += np.einsum('nchw,oc->nohw',
                               xa[:, :, i:i + oh, j:j + ow], w[:, :, i, j])
        return y + b[None, :, None, None]

    def pool(xa):
        return np.maximum(
            np.maximum(xa[:, :, 0::2, 0::2], xa[:, :, 0::2, 1::2]),
            np.maximum(xa[:, :, 1::2, 0::2], xa[:, :, 1::2, 1::2]))

    h = pool(np.maximum(conv(x, c1w, c1b), 0.0))
    h = pool(np.maximum(conv(h, c2w, c2b), 0.0))
    h = h.reshape(h.shape[0], -1)
    h = np.maximum(h @ f1w.T + f1b, 0.0)
    h = np.maximum(h @ f2w.T + f2b, 0.0)
    return h @ f3w.T + f3b


if __name__ == "__main__":
    key = jax.random.PRNGKey(0)
    k_x, k_p = jax.random.split(key)
    # fc1 expects 16*5*5 features -> spatial input must be 32x32 (CIFAR-like).
    x = jax.random.normal(k_x, (2, 3, 32, 32), dtype=jnp.float32)
    raw, params = init_params(k_p)

    fwd = jax.jit(lenet_forward)
    out = jax.block_until_ready(fwd(x, params))

    assert out.shape == (2, 10), out.shape
    assert bool(jnp.all(jnp.isfinite(out)))
    ref = reference_forward(np.asarray(x), raw)
    err = float(np.max(np.abs(np.asarray(out, np.float64) - ref)))
    assert err < 5e-3, f"max abs error vs reference: {err}"
    print("KERNEL_OK")
</pallas_src>

<mosaic_0001>
module attributes {stable_mosaic.version = 11 : i64} {
  func.func @_lenet_kernel(%arg0: i32, %arg1: memref<1x32x128xf32, #tpu.memory_space<vmem>>, %arg2: memref<5x128x224xf32, #tpu.memory_space<vmem>>, %arg3: memref<1x224xf32, #tpu.memory_space<vmem>>, %arg4: memref<216x112xf32, #tpu.memory_space<vmem>>, %arg5: memref<14x27xf32, #tpu.memory_space<vmem>>, %arg6: memref<5x112x160xf32, #tpu.memory_space<vmem>>, %arg7: memref<1x160xf32, #tpu.memory_space<vmem>>, %arg8: memref<144x80xf32, #tpu.memory_space<vmem>>, %arg9: memref<5x9xf32, #tpu.memory_space<vmem>>, %arg10: memref<5x80x128xf32, #tpu.memory_space<vmem>>, %arg11: memref<1x128xf32, #tpu.memory_space<vmem>>, %arg12: memref<128x128xf32, #tpu.memory_space<vmem>>, %arg13: memref<1x128xf32, #tpu.memory_space<vmem>>, %arg14: memref<128x128xf32, #tpu.memory_space<vmem>>, %arg15: memref<1x128xf32, #tpu.memory_space<vmem>>, %arg16: memref<1x1x10xf32, #tpu.memory_space<vmem>>) attributes {dimension_semantics = [#tpu.dimension_semantics<parallel>], iteration_bounds = array<i64: 2>, scalar_prefetch = 0 : i64, scratch_operands = 0 : i64, tpu.core_type = #tpu.core_type<tc>, window_params = [{transform_indices = @transform_0, window_bounds = array<i64: 1, 32, 128>}, {pipeline_mode = #tpu.pipeline_mode<synchronous>, transform_indices = @transform_1, window_bounds = array<i64: 5, 128, 224>}, {pipeline_mode = #tpu.pipeline_mode<synchronous>, transform_indices = @transform_2, window_bounds = array<i64: 1, 224>}, {pipeline_mode = #tpu.pipeline_mode<synchronous>, transform_indices = @transform_3, window_bounds = array<i64: 216, 112>}, {pipeline_mode = #tpu.pipeline_mode<synchronous>, transform_indices = @transform_4, window_bounds = array<i64: 14, 27>}, {pipeline_mode = #tpu.pipeline_mode<synchronous>, transform_indices = @transform_5, window_bounds = array<i64: 5, 112, 160>}, {pipeline_mode = #tpu.pipeline_mode<synchronous>, transform_indices = @transform_6, window_bounds = array<i64: 1, 160>}, {pipeline_mode = #tpu.pipeline_mode<synchronous>, transform_indices = @transform_7, window_bounds = array<i64: 144, 80>}, {pipeline_mode = #tpu.pipeline_mode<synchronous>, transform_indices = @transform_8, window_bounds = array<i64: 5, 9>}, {pipeline_mode = #tpu.pipeline_mode<synchronous>, transform_indices = @transform_9, window_bounds = array<i64: 5, 80, 128>}, {pipeline_mode = #tpu.pipeline_mode<synchronous>, transform_indices = @transform_10, window_bounds = array<i64: 1, 128>}, {pipeline_mode = #tpu.pipeline_mode<synchronous>, transform_indices = @transform_11, window_bounds = array<i64: 128, 128>}, {pipeline_mode = #tpu.pipeline_mode<synchronous>, transform_indices = @transform_12, window_bounds = array<i64: 1, 128>}, {pipeline_mode = #tpu.pipeline_mode<synchronous>, transform_indices = @transform_13, window_bounds = array<i64: 128, 128>}, {pipeline_mode = #tpu.pipeline_mode<synchronous>, transform_indices = @transform_14, window_bounds = array<i64: 1, 128>}, {transform_indices = @transform_15, window_bounds = array<i64: 1, 1, 10>}]} {
    %c0 = arith.constant 0 : index
    %c0_0 = arith.constant 0 : index
    %c0_1 = arith.constant 0 : index
    %0 = vector.load %arg1[%c0, %c0_0, %c0_1] : memref<1x32x128xf32, #tpu.memory_space<vmem>>, vector<1x32x128xf32>
    %1 = vector.shape_cast %0 : vector<1x32x128xf32> to vector<32x128xf32>
    %2 = vector.extract_strided_slice %1 {offsets = [0, 0], sizes = [28, 128], strides = [1, 1]} : vector<32x128xf32> to vector<28x128xf32>
    %c0_2 = arith.constant 0 : index
    %c0_3 = arith.constant 0 : index
    %c0_4 = arith.constant 0 : index
    %3 = vector.load %arg2[%c0_2, %c0_3, %c0_4] : memref<5x128x224xf32, #tpu.memory_space<vmem>>, vector<1x128x224xf32>
    %4 = vector.shape_cast %3 : vector<1x128x224xf32> to vector<128x224xf32>
    %cst = arith.constant dense<0.000000e+00> : vector<28x224xf32>
    %5 = tpu.matmul %2, %4, %cst {dimension_numbers = #tpu.dot_dimension_numbers<[1], [0], [0], [1], [0, 0, 1, 1], [], []>} : vector<28x128xf32>, vector<128x224xf32>, vector<28x224xf32> -> vector<28x224xf32>
    %6 = vector.extract_strided_slice %1 {offsets = [1, 0], sizes = [28, 128], strides = [1, 1]} : vector<32x128xf32> to vector<28x128xf32>
    %c1 = arith.constant 1 : index
    %c0_5 = arith.constant 0 : index
    %c0_6 = arith.constant 0 : index
    %7 = vector.load %arg2[%c1, %c0_5, %c0_6] : memref<5x128x224xf32, #tpu.memory_space<vmem>>, vector<1x128x224xf32>
    %8 = vector.shape_cast %7 : vector<1x128x224xf32> to vector<128x224xf32>
    %cst_7 = arith.constant dense<0.000000e+00> : vector<28x224xf32>
    %9 = tpu.matmul %6, %8, %cst_7 {dimension_numbers = #tpu.dot_dimension_numbers<[1], [0], [0], [1], [0, 0, 1, 1], [], []>} : vector<28x128xf32>, vector<128x224xf32>, vector<28x224xf32> -> vector<28x224xf32>
    %10 = arith.addf %5, %9 : vector<28x224xf32>
    %11 = vector.extract_strided_slice %1 {offsets = [2, 0], sizes = [28, 128], strides = [1, 1]} : vector<32x128xf32> to vector<28x128xf32>
    %c2 = arith.constant 2 : index
    %c0_8 = arith.constant 0 : index
    %c0_9 = arith.constant 0 : index
    %12 = vector.load %arg2[%c2, %c0_8, %c0_9] : memref<5x128x224xf32, #tpu.memory_space<vmem>>, vector<1x128x224xf32>
    %13 = vector.shape_cast %12 : vector<1x128x224xf32> to vector<128x224xf32>
    %cst_10 = arith.constant dense<0.000000e+00> : vector<28x224xf32>
    %14 = tpu.matmul %11, %13, %cst_10 {dimension_numbers = #tpu.dot_dimension_numbers<[1], [0], [0], [1], [0, 0, 1, 1], [], []>} : vector<28x128xf32>, vector<128x224xf32>, vector<28x224xf32> -> vector<28x224xf32>
    %15 = arith.addf %10, %14 : vector<28x224xf32>
    %16 = vector.extract_strided_slice %1 {offsets = [3, 0], sizes = [28, 128], strides = [1, 1]} : vector<32x128xf32> to vector<28x128xf32>
    %c3 = arith.constant 3 : index
    %c0_11 = arith.constant 0 : index
    %c0_12 = arith.constant 0 : index
    %17 = vector.load %arg2[%c3, %c0_11, %c0_12] : memref<5x128x224xf32, #tpu.memory_space<vmem>>, vector<1x128x224xf32>
    %18 = vector.shape_cast %17 : vector<1x128x224xf32> to vector<128x224xf32>
    %cst_13 = arith.constant dense<0.000000e+00> : vector<28x224xf32>
    %19 = tpu.matmul %16, %18, %cst_13 {dimension_numbers = #tpu.dot_dimension_numbers<[1], [0], [0], [1], [0, 0, 1, 1], [], []>} : vector<28x128xf32>, vector<128x224xf32>, vector<28x224xf32> -> vector<28x224xf32>
    %20 = arith.addf %15, %19 : vector<28x224xf32>
    %21 = vector.extract_strided_slice %1 {offsets = [4, 0], sizes = [28, 128], strides = [1, 1]} : vector<32x128xf32> to vector<28x128xf32>
    %c4 = arith.constant 4 : index
    %c0_14 = arith.constant 0 : index
    %c0_15 = arith.constant 0 : index
    %22 = vector.load %arg2[%c4, %c0_14, %c0_15] : memref<5x128x224xf32, #tpu.memory_space<vmem>>, vector<1x128x224xf32>
    %23 = vector.shape_cast %22 : vector<1x128x224xf32> to vector<128x224xf32>
    %cst_16 = arith.constant dense<0.000000e+00> : vector<28x224xf32>
    %24 = tpu.matmul %21, %23, %cst_16 {dimension_numbers = #tpu.dot_dimension_numbers<[1], [0], [0], [1], [0, 0, 1, 1], [], []>} : vector<28x128xf32>, vector<128x224xf32>, vector<28x224xf32> -> vector<28x224xf32>
    %25 = arith.addf %20, %24 : vector<28x224xf32>
    %c0_17 = arith.constant 0 : index
    %c0_18 = arith.constant 0 : index
    %26 = vector.load %arg3[%c0_17, %c0_18] : memref<1x224xf32, #tpu.memory_space<vmem>>, vector<1x224xf32>
    %27 = vector.broadcast %26 : vector<1x224xf32> to vector<28x224xf32>
    %28 = arith.addf %25, %27 : vector<28x224xf32>
    %cst_19 = arith.constant 0.000000e+00 : f32
    %29 = vector.broadcast %cst_19 : f32 to vector<28x224xf32>
    %30 = arith.maximumf %28, %29 : vector<28x224xf32>
    %31 = vector.extract_strided_slice %30 {offsets = [0, 0], sizes = [28, 216], strides = [1, 1]} : vector<28x224xf32> to vector<28x216xf32>
    %32 = vector.extract_strided_slice %30 {offsets = [0, 8], sizes = [28, 216], strides = [1, 1]} : vector<28x224xf32> to vector<28x216xf32>
    %33 = arith.maximumf %31, %32 : vector<28x216xf32>
    %c0_20 = arith.constant 0 : index
    %c0_21 = arith.constant 0 : index
    %34 = vector.load %arg4[%c0_20, %c0_21] : memref<216x112xf32, #tpu.memory_space<vmem>>, vector<216x112xf32>
    %cst_22 = arith.constant dense<0.000000e+00> : vector<28x112xf32>
    %35 = tpu.matmul %33, %34, %cst_22 {dimension_numbers = #tpu.dot_dimension_numbers<[1], [0], [0], [1], [0, 0, 1, 1], [], []>} : vector<28x216xf32>, vector<216x112xf32>, vector<28x112xf32> -> vector<28x112xf32>
    %36 = vector.extract_strided_slice %35 {offsets = [0, 0], sizes = [27, 112], strides = [1, 1]} : vector<28x112xf32> to vector<27x112xf32>
    %37 = vector.extract_strided_slice %35 {offsets = [1, 0], sizes = [27, 112], strides = [1, 1]} : vector<28x112xf32> to vector<27x112xf32>
    %38 = arith.maximumf %36, %37 : vector<27x112xf32>
    %c0_23 = arith.constant 0 : index
    %c0_24 = arith.constant 0 : index
    %39 = vector.load %arg5[%c0_23, %c0_24] : memref<14x27xf32, #tpu.memory_space<vmem>>, vector<14x27xf32>
    %cst_25 = arith.constant dense<0.000000e+00> : vector<14x112xf32>
    %40 = tpu.matmul %39, %38, %cst_25 {dimension_numbers = #tpu.dot_dimension_numbers<[1], [0], [0], [1], [0, 0, 1, 1], [], []>} : vector<14x27xf32>, vector<27x112xf32>, vector<14x112xf32> -> vector<14x112xf32>
    %41 = vector.extract_strided_slice %40 {offsets = [0, 0], sizes = [10, 112], strides = [1, 1]} : vector<14x112xf32> to vector<10x112xf32>
    %c0_26 = arith.constant 0 : index
    %c0_27 = arith.constant 0 : index
    %c0_28 = arith.constant 0 : index
    %42 = vector.load %arg6[%c0_26, %c0_27, %c0_28] : memref<5x112x160xf32, #tpu.memory_space<vmem>>, vector<1x112x160xf32>
    %43 = vector.shape_cast %42 : vector<1x112x160xf32> to vector<112x160xf32>
    %cst_29 = arith.constant dense<0.000000e+00> : vector<10x160xf32>
    %44 = tpu.matmul %41, %43, %cst_29 {dimension_numbers = #tpu.dot_dimension_numbers<[1], [0], [0], [1], [0, 0, 1, 1], [], []>} : vector<10x112xf32>, vector<112x160xf32>, vector<10x160xf32> -> vector<10x160xf32>
    %45 = vector.extract_strided_slice %40 {offsets = [1, 0], sizes = [10, 112], strides = [1, 1]} : vector<14x112xf32> to vector<10x112xf32>
    %c1_30 = arith.constant 1 : index
    %c0_31 = arith.constant 0 : index
    %c0_32 = arith.constant 0 : index
    %46 = vector.load %arg6[%c1_30, %c0_31, %c0_32] : memref<5x112x160xf32, #tpu.memory_space<vmem>>, vector<1x112x160xf32>
    %47 = vector.shape_cast %46 : vector<1x112x160xf32> to vector<112x160xf32>
    %cst_33 = arith.constant dense<0.000000e+00> : vector<10x160xf32>
    %48 = tpu.matmul %45, %47, %cst_33 {dimension_numbers = #tpu.dot_dimension_numbers<[1], [0], [0], [1], [0, 0, 1, 1], [], []>} : vector<10x112xf32>, vector<112x160xf32>, vector<10x160xf32> -> vector<10x160xf32>
    %49 = arith.addf %44, %48 : vector<10x160xf32>
    %50 = vector.extract_strided_slice %40 {offsets = [2, 0], sizes = [10, 112], strides = [1, 1]} : vector<14x112xf32> to vector<10x112xf32>
    %c2_34 = arith.constant 2 : index
    %c0_35 = arith.constant 0 : index
    %c0_36 = arith.constant 0 : index
    %51 = vector.load %arg6[%c2_34, %c0_35, %c0_36] : memref<5x112x160xf32, #tpu.memory_space<vmem>>, vector<1x112x160xf32>
    %52 = vector.shape_cast %51 : vector<1x112x160xf32> to vector<112x160xf32>
    %cst_37 = arith.constant dense<0.000000e+00> : vector<10x160xf32>
    %53 = tpu.matmul %50, %52, %cst_37 {dimension_numbers = #tpu.dot_dimension_numbers<[1], [0], [0], [1], [0, 0, 1, 1], [], []>} : vector<10x112xf32>, vector<112x160xf32>, vector<10x160xf32> -> vector<10x160xf32>
    %54 = arith.addf %49, %53 : vector<10x160xf32>
    %55 = vector.extract_strided_slice %40 {offsets = [3, 0], sizes = [10, 112], strides = [1, 1]} : vector<14x112xf32> to vector<10x112xf32>
    %c3_38 = arith.constant 3 : index
    %c0_39 = arith.constant 0 : index
    %c0_40 = arith.constant 0 : index
    %56 = vector.load %arg6[%c3_38, %c0_39, %c0_40] : memref<5x112x160xf32, #tpu.memory_space<vmem>>, vector<1x112x160xf32>
    %57 = vector.shape_cast %56 : vector<1x112x160xf32> to vector<112x160xf32>
    %cst_41 = arith.constant dense<0.000000e+00> : vector<10x160xf32>
    %58 = tpu.matmul %55, %57, %cst_41 {dimension_numbers = #tpu.dot_dimension_numbers<[1], [0], [0], [1], [0, 0, 1, 1], [], []>} : vector<10x112xf32>, vector<112x160xf32>, vector<10x160xf32> -> vector<10x160xf32>
    %59 = arith.addf %54, %58 : vector<10x160xf32>
    %60 = vector.extract_strided_slice %40 {offsets = [4, 0], sizes = [10, 112], strides = [1, 1]} : vector<14x112xf32> to vector<10x112xf32>
    %c4_42 = arith.constant 4 : index
    %c0_43 = arith.constant 0 : index
    %c0_44 = arith.constant 0 : index
    %61 = vector.load %arg6[%c4_42, %c0_43, %c0_44] : memref<5x112x160xf32, #tpu.memory_space<vmem>>, vector<1x112x160xf32>
    %62 = vector.shape_cast %61 : vector<1x112x160xf32> to vector<112x160xf32>
    %cst_45 = arith.constant dense<0.000000e+00> : vector<10x160xf32>
    %63 = tpu.matmul %60, %62, %cst_45 {dimension_numbers = #tpu.dot_dimension_numbers<[1], [0], [0], [1], [0, 0, 1, 1], [], []>} : vector<10x112xf32>, vector<112x160xf32>, vector<10x160xf32> -> vector<10x160xf32>
    %64 = arith.addf %59, %63 : vector<10x160xf32>
    %c0_46 = arith.constant 0 : index
    %c0_47 = arith.constant 0 : index
    %65 = vector.load %arg7[%c0_46, %c0_47] : memref<1x160xf32, #tpu.memory_space<vmem>>, vector<1x160xf32>
    %66 = vector.broadcast %65 : vector<1x160xf32> to vector<10x160xf32>
    %67 = arith.addf %64, %66 : vector<10x160xf32>
    %cst_48 = arith.constant 0.000000e+00 : f32
    %68 = vector.broadcast %cst_48 : f32 to vector<10x160xf32>
    %69 = arith.maximumf %67, %68 : vector<10x160xf32>
    %70 = vector.extract_strided_slice %69 {offsets = [0, 0], sizes = [10, 144], strides = [1, 1]} : vector<10x160xf32> to vector<10x144xf32>
    %71 = vector.extract_strided_slice %69 {offsets = [0, 16], sizes = [10, 144], strides = [1, 1]} : vector<10x160xf32> to vector<10x144xf32>
    %72 = arith.maximumf %70, %71 : vector<10x144xf32>
    %c0_49 = arith.constant 0 : index
    %c0_50 = arith.constant 0 : index
    %73 = vector.load %arg8[%c0_49, %c0_50] : memref<144x80xf32, #tpu.memory_space<vmem>>, vector<144x80xf32>
    %cst_51 = arith.constant dense<0.000000e+00> : vector<10x80xf32>
    %74 = tpu.matmul %72, %73, %cst_51 {dimension_numbers = #tpu.dot_dimension_numbers<[1], [0], [0], [1], [0, 0, 1, 1], [], []>} : vector<10x144xf32>, vector<144x80xf32>, vector<10x80xf32> -> vector<10x80xf32>
    %75 = vector.extract_strided_slice %74 {offsets = [0, 0], sizes = [9, 80], strides = [1, 1]} : vector<10x80xf32> to vector<9x80xf32>
    %76 = vector.extract_strided_slice %74 {offsets = [1, 0], sizes = [9, 80], strides = [1, 1]} : vector<10x80xf32> to vector<9x80xf32>
    %77 = arith.maximumf %75, %76 : vector<9x80xf32>
    %c0_52 = arith.constant 0 : index
    %c0_53 = arith.constant 0 : index
    %78 = vector.load %arg9[%c0_52, %c0_53] : memref<5x9xf32, #tpu.memory_space<vmem>>, vector<5x9xf32>
    %cst_54 = arith.constant dense<0.000000e+00> : vector<5x80xf32>
    %79 = tpu.matmul %78, %77, %cst_54 {dimension_numbers = #tpu.dot_dimension_numbers<[1], [0], [0], [1], [0, 0, 1, 1], [], []>} : vector<5x9xf32>, vector<9x80xf32>, vector<5x80xf32> -> vector<5x80xf32>
    %80 = vector.extract_strided_slice %79 {offsets = [0, 0], sizes = [1, 80], strides = [1, 1]} : vector<5x80xf32> to vector<1x80xf32>
    %c0_55 = arith.constant 0 : index
    %c0_56 = arith.constant 0 : index
    %c0_57 = arith.constant 0 : index
    %81 = vector.load %arg10[%c0_55, %c0_56, %c0_57] : memref<5x80x128xf32, #tpu.memory_space<vmem>>, vector<1x80x128xf32>
    %82 = vector.shape_cast %81 : vector<1x80x128xf32> to vector<80x128xf32>
    %cst_58 = arith.constant dense<0.000000e+00> : vector<1x128xf32>
    %83 = tpu.matmul %80, %82, %cst_58 {dimension_numbers = #tpu.dot_dimension_numbers<[1], [0], [0], [1], [0, 0, 1, 1], [], []>} : vector<1x80xf32>, vector<80x128xf32>, vector<1x128xf32> -> vector<1x128xf32>
    %84 = vector.extract_strided_slice %79 {offsets = [1, 0], sizes = [1, 80], strides = [1, 1]} : vector<5x80xf32> to vector<1x80xf32>
    %c1_59 = arith.constant 1 : index
    %c0_60 = arith.constant 0 : index
    %c0_61 = arith.constant 0 : index
    %85 = vector.load %arg10[%c1_59, %c0_60, %c0_61] : memref<5x80x128xf32, #tpu.memory_space<vmem>>, vector<1x80x128xf32>
    %86 = vector.shape_cast %85 : vector<1x80x128xf32> to vector<80x128xf32>
    %cst_62 = arith.constant dense<0.000000e+00> : vector<1x128xf32>
    %87 = tpu.matmul %84, %86, %cst_62 {dimension_numbers = #tpu.dot_dimension_numbers<[1], [0], [0], [1], [0, 0, 1, 1], [], []>} : vector<1x80xf32>, vector<80x128xf32>, vector<1x128xf32> -> vector<1x128xf32>
    %88 = arith.addf %83, %87 : vector<1x128xf32>
    %89 = vector.extract_strided_slice %79 {offsets = [2, 0], sizes = [1, 80], strides = [1, 1]} : vector<5x80xf32> to vector<1x80xf32>
    %c2_63 = arith.constant 2 : index
    %c0_64 = arith.constant 0 : index
    %c0_65 = arith.constant 0 : index
    %90 = vector.load %arg10[%c2_63, %c0_64, %c0_65] : memref<5x80x128xf32, #tpu.memory_space<vmem>>, vector<1x80x128xf32>
    %91 = vector.shape_cast %90 : vector<1x80x128xf32> to vector<80x128xf32>
    %cst_66 = arith.constant dense<0.000000e+00> : vector<1x128xf32>
    %92 = tpu.matmul %89, %91, %cst_66 {dimension_numbers = #tpu.dot_dimension_numbers<[1], [0], [0], [1], [0, 0, 1, 1], [], []>} : vector<1x80xf32>, vector<80x128xf32>, vector<1x128xf32> -> vector<1x128xf32>
    %93 = arith.addf %88, %92 : vector<1x128xf32>
    %94 = vector.extract_strided_slice %79 {offsets = [3, 0], sizes = [1, 80], strides = [1, 1]} : vector<5x80xf32> to vector<1x80xf32>
    %c3_67 = arith.constant 3 : index
    %c0_68 = arith.constant 0 : index
    %c0_69 = arith.constant 0 : index
    %95 = vector.load %arg10[%c3_67, %c0_68, %c0_69] : memref<5x80x128xf32, #tpu.memory_space<vmem>>, vector<1x80x128xf32>
    %96 = vector.shape_cast %95 : vector<1x80x128xf32> to vector<80x128xf32>
    %cst_70 = arith.constant dense<0.000000e+00> : vector<1x128xf32>
    %97 = tpu.matmul %94, %96, %cst_70 {dimension_numbers = #tpu.dot_dimension_numbers<[1], [0], [0], [1], [0, 0, 1, 1], [], []>} : vector<1x80xf32>, vector<80x128xf32>, vector<1x128xf32> -> vector<1x128xf32>
    %98 = arith.addf %93, %97 : vector<1x128xf32>
    %99 = vector.extract_strided_slice %79 {offsets = [4, 0], sizes = [1, 80], strides = [1, 1]} : vector<5x80xf32> to vector<1x80xf32>
    %c4_71 = arith.constant 4 : index
    %c0_72 = arith.constant 0 : index
    %c0_73 = arith.constant 0 : index
    %100 = vector.load %arg10[%c4_71, %c0_72, %c0_73] : memref<5x80x128xf32, #tpu.memory_space<vmem>>, vector<1x80x128xf32>
    %101 = vector.shape_cast %100 : vector<1x80x128xf32> to vector<80x128xf32>
    %cst_74 = arith.constant dense<0.000000e+00> : vector<1x128xf32>
    %102 = tpu.matmul %99, %101, %cst_74 {dimension_numbers = #tpu.dot_dimension_numbers<[1], [0], [0], [1], [0, 0, 1, 1], [], []>} : vector<1x80xf32>, vector<80x128xf32>, vector<1x128xf32> -> vector<1x128xf32>
    %103 = arith.addf %98, %102 : vector<1x128xf32>
    %c0_75 = arith.constant 0 : index
    %c0_76 = arith.constant 0 : index
    %104 = vector.load %arg11[%c0_75, %c0_76] : memref<1x128xf32, #tpu.memory_space<vmem>>, vector<1x128xf32>
    %105 = arith.addf %103, %104 : vector<1x128xf32>
    %cst_77 = arith.constant 0.000000e+00 : f32
    %106 = vector.broadcast %cst_77 : f32 to vector<1x128xf32>
    %107 = arith.maximumf %105, %106 : vector<1x128xf32>
    %c0_78 = arith.constant 0 : index
    %c0_79 = arith.constant 0 : index
    %108 = vector.load %arg12[%c0_78, %c0_79] : memref<128x128xf32, #tpu.memory_space<vmem>>, vector<128x128xf32>
    %cst_80 = arith.constant dense<0.000000e+00> : vector<1x128xf32>
    %109 = tpu.matmul %107, %108, %cst_80 {dimension_numbers = #tpu.dot_dimension_numbers<[1], [0], [0], [1], [0, 0, 1, 1], [], []>} : vector<1x128xf32>, vector<128x128xf32>, vector<1x128xf32> -> vector<1x128xf32>
    %c0_81 = arith.constant 0 : index
    %c0_82 = arith.constant 0 : index
    %110 = vector.load %arg13[%c0_81, %c0_82] : memref<1x128xf32, #tpu.memory_space<vmem>>, vector<1x128xf32>
    %111 = arith.addf %109, %110 : vector<1x128xf32>
    %cst_83 = arith.constant 0.000000e+00 : f32
    %112 = vector.broadcast %cst_83 : f32 to vector<1x128xf32>
    %113 = arith.maximumf %111, %112 : vector<1x128xf32>
    %c0_84 = arith.constant 0 : index
    %c0_85 = arith.constant 0 : index
    %114 = vector.load %arg14[%c0_84, %c0_85] : memref<128x128xf32, #tpu.memory_space<vmem>>, vector<128x128xf32>
    %cst_86 = arith.constant dense<0.000000e+00> : vector<1x128xf32>
    %115 = tpu.matmul %113, %114, %cst_86 {dimension_numbers = #tpu.dot_dimension_numbers<[1], [0], [0], [1], [0, 0, 1, 1], [], []>} : vector<1x128xf32>, vector<128x128xf32>, vector<1x128xf32> -> vector<1x128xf32>
    %c0_87 = arith.constant 0 : index
    %c0_88 = arith.constant 0 : index
    %116 = vector.load %arg15[%c0_87, %c0_88] : memref<1x128xf32, #tpu.memory_space<vmem>>, vector<1x128xf32>
    %117 = arith.addf %115, %116 : vector<1x128xf32>
    %118 = vector.extract_strided_slice %117 {offsets = [0, 0], sizes = [1, 10], strides = [1, 1]} : vector<1x128xf32> to vector<1x10xf32>
    %c0_89 = arith.constant 0 : index
    %c0_90 = arith.constant 0 : index
    %c0_91 = arith.constant 0 : index
    %119 = vector.load %arg16[%c0_89, %c0_90, %c0_91] : memref<1x1x10xf32, #tpu.memory_space<vmem>>, vector<1x1x10xf32>
    %120 = vector.shape_cast %119 : vector<1x1x10xf32> to vector<1x10xf32>
    %121 = vector.shape_cast %118 : vector<1x10xf32> to vector<1x1x10xf32>
    tpu.vector_store %arg16[%c0_89, %c0_90, %c0_91], %121 {strides = array<i32>} : memref<1x1x10xf32, #tpu.memory_space<vmem>>, vector<1x1x10xf32>,
    return
  }
  func.func @transform_0(%arg0: i32) -> (i32, i32, i32) {
    %c0_i32 = arith.constant 0 : i32
    %c0_i32_0 = arith.constant 0 : i32
    %c0_i32_1 = arith.constant 0 : i32
    return %arg0, %c0_i32, %c0_i32_0 : i32, i32, i32
  }
  func.func @transform_1(%arg0: i32) -> (i32, i32, i32) {
    %c0_i32 = arith.constant 0 : i32
    %c0_i32_0 = arith.constant 0 : i32
    %c0_i32_1 = arith.constant 0 : i32
    %c0_i32_2 = arith.constant 0 : i32
    return %c0_i32, %c0_i32_0, %c0_i32_1 : i32, i32, i32
  }
  func.func @transform_2(%arg0: i32) -> (i32, i32) {
    %c0_i32 = arith.constant 0 : i32
    %c0_i32_0 = arith.constant 0 : i32
    %c0_i32_1 = arith.constant 0 : i32
    return %c0_i32, %c0_i32_0 : i32, i32
  }
  func.func @transform_3(%arg0: i32) -> (i32, i32) {
    %c0_i32 = arith.constant 0 : i32
    %c0_i32_0 = arith.constant 0 : i32
    %c0_i32_1 = arith.constant 0 : i32
    return %c0_i32, %c0_i32_0 : i32, i32
  }
  func.func @transform_4(%arg0: i32) -> (i32, i32) {
    %c0_i32 = arith.constant 0 : i32
    %c0_i32_0 = arith.constant 0 : i32
    %c0_i32_1 = arith.constant 0 : i32
    return %c0_i32, %c0_i32_0 : i32, i32
  }
  func.func @transform_5(%arg0: i32) -> (i32, i32, i32) {
    %c0_i32 = arith.constant 0 : i32
    %c0_i32_0 = arith.constant 0 : i32
    %c0_i32_1 = arith.constant 0 : i32
    %c0_i32_2 = arith.constant 0 : i32
    return %c0_i32, %c0_i32_0, %c0_i32_1 : i32, i32, i32
  }
  func.func @transform_6(%arg0: i32) -> (i32, i32) {
    %c0_i32 = arith.constant 0 : i32
    %c0_i32_0 = arith.constant 0 : i32
    %c0_i32_1 = arith.constant 0 : i32
    return %c0_i32, %c0_i32_0 : i32, i32
  }
  func.func @transform_7(%arg0: i32) -> (i32, i32) {
    %c0_i32 = arith.constant 0 : i32
    %c0_i32_0 = arith.constant 0 : i32
    %c0_i32_1 = arith.constant 0 : i32
    return %c0_i32, %c0_i32_0 : i32, i32
  }
  func.func @transform_8(%arg0: i32) -> (i32, i32) {
    %c0_i32 = arith.constant 0 : i32
    %c0_i32_0 = arith.constant 0 : i32
    %c0_i32_1 = arith.constant 0 : i32
    return %c0_i32, %c0_i32_0 : i32, i32
  }
  func.func @transform_9(%arg0: i32) -> (i32, i32, i32) {
    %c0_i32 = arith.constant 0 : i32
    %c0_i32_0 = arith.constant 0 : i32
    %c0_i32_1 = arith.constant 0 : i32
    %c0_i32_2 = arith.constant 0 : i32
    return %c0_i32, %c0_i32_0, %c0_i32_1 : i32, i32, i32
  }
  func.func @transform_10(%arg0: i32) -> (i32, i32) {
    %c0_i32 = arith.constant 0 : i32
    %c0_i32_0 = arith.constant 0 : i32
    %c0_i32_1 = arith.constant 0 : i32
    return %c0_i32, %c0_i32_0 : i32, i32
  }
  func.func @transform_11(%arg0: i32) -> (i32, i32) {
    %c0_i32 = arith.constant 0 : i32
    %c0_i32_0 = arith.constant 0 : i32
    %c0_i32_1 = arith.constant 0 : i32
    return %c0_i32, %c0_i32_0 : i32, i32
  }
  func.func @transform_12(%arg0: i32) -> (i32, i32) {
    %c0_i32 = arith.constant 0 : i32
    %c0_i32_0 = arith.constant 0 : i32
    %c0_i32_1 = arith.constant 0 : i32
    return %c0_i32, %c0_i32_0 : i32, i32
  }
  func.func @transform_13(%arg0: i32) -> (i32, i32) {
    %c0_i32 = arith.constant 0 : i32
    %c0_i32_0 = arith.constant 0 : i32
    %c0_i32_1 = arith.constant 0 : i32
    return %c0_i32, %c0_i32_0 : i32, i32
  }
  func.func @transform_14(%arg0: i32) -> (i32, i32) {
    %c0_i32 = arith.constant 0 : i32
    %c0_i32_0 = arith.constant 0 : i32
    %c0_i32_1 = arith.constant 0 : i32
    return %c0_i32, %c0_i32_0 : i32, i32
  }
  func.func @transform_15(%arg0: i32) -> (i32, i32, i32) {
    %c0_i32 = arith.constant 0 : i32
    %c0_i32_0 = arith.constant 0 : i32
    %c0_i32_1 = arith.constant 0 : i32
    return %arg0, %c0_i32, %c0_i32_0 : i32, i32, i32
  }
}

</mosaic_0001>

<llo_original>
// kernel: lenet_forward.1
$region0: #{lenet_forward.1}
  #allocation0 [shape = 'u32[]', space=smem, size = 0x4, offset = 0x4, fixed_abs, tag = 'smem constant byte address 0x4 - core index']
  #allocation1 [shape = 'u32[144,128]{1,0:T(1,128)}', space=vmem, size = 0x12000, scoped, tag = 'internal scratch']
  %s0 = inlined_call_operand.vmem [shape: f32[2,32,128], index: 0, kind: input, shape index: {}]
  %s1 = inlined_call_operand.vmem [shape: f32[5,128,224], index: 1, kind: input, shape index: {}]
  %s2 = inlined_call_operand.vmem [shape: f32[1,224], index: 2, kind: input, shape index: {}]
  %s3 = inlined_call_operand.vmem [shape: f32[216,112], index: 3, kind: input, shape index: {}]
  %s4 = inlined_call_operand.vmem [shape: f32[14,27], index: 4, kind: input, shape index: {}]
  %s5 = inlined_call_operand.vmem [shape: f32[5,112,160], index: 5, kind: input, shape index: {}]
  %s6 = inlined_call_operand.vmem [shape: f32[1,160], index: 6, kind: input, shape index: {}]
  %s7 = inlined_call_operand.vmem [shape: f32[144,80], index: 7, kind: input, shape index: {}]
  %s8 = inlined_call_operand.vmem [shape: f32[5,9], index: 8, kind: input, shape index: {}]
  %s9 = inlined_call_operand.vmem [shape: f32[5,80,128], index: 9, kind: input, shape index: {}]
  %s10 = inlined_call_operand.vmem [shape: f32[1,128], index: 10, kind: input, shape index: {}]
  %s11 = inlined_call_operand.vmem [shape: f32[128,128], index: 11, kind: input, shape index: {}]
  %s12 = inlined_call_operand.vmem [shape: f32[1,128], index: 12, kind: input, shape index: {}]
  %s13 = inlined_call_operand.vmem [shape: f32[128,128], index: 13, kind: input, shape index: {}]
  %s14 = inlined_call_operand.vmem [shape: f32[1,128], index: 14, kind: input, shape index: {}]
  %s15 = inlined_call_operand.hbm [shape: f32[2,1,10], index: 15, kind: output, shape index: {}]
  %s16 = sld [smem:[#allocation0]]
  $region93: #{lenet_forward.1} parent=0
    _
  %s18 = ssub.s32 1, %s16
  %s19 = scalar_select 0, %s18, %s16
  $region1: #{lenet_forward.1} parent=0
    #allocation2 [shape = 'u8[1024]{0}', space=vmem, size = 0x400, scoped, tag = 'output window, operand 0']
    #allocation3 [shape = 's32[2]{0}', space=sflag, size = 0x8, scoped, tag = 'scoped memory for lenet_forward.1']
    %20 = vsyncpa [#allocation3], 0
    %s21 = scalar_lea.sflag [#allocation3], 1
    %22 = vsyncpa %s21, 0
    loop: start=0, step=1, limit=4
    $region2: #{lenet_forward.1} parent=1 // loop_pre_header
      _
    $region3: #{lenet_forward.1} parent=1 // loop_header
      %s24 = sphi 0, %s28
      %p25 = scmp.ge.s32.totalorder %s24, 4
      %s34 = sphi 0, %s36
      %s37 = sphi 0, %s34
      %s38 = sphi 0, %s37
      %s54 = sphi 0, %s38
      %s58 = sphi 0, %s58
      %s60 = sphi 0, %s58
      %s61 = sphi 0, %s60
      %s75 = sphi 0, %s61
      %s79 = sphi 0, %s79
      %s81 = sphi 0, %s79
      %s82 = sphi 0, %s81
      %s96 = sphi 0, %s82
      %s100 = sphi 0, %s100
      %s102 = sphi 0, %s100
      %s103 = sphi 0, %s102
      %s117 = sphi 0, %s103
      %s121 = sphi 0, %s121
      %s123 = sphi 0, %s121
      %s124 = sphi 0, %s123
      %s138 = sphi 0, %s124
      %s142 = sphi 0, %s142
      %s144 = sphi 0, %s142
      %s145 = sphi 0, %s144
      %s159 = sphi 0, %s145
      %s163 = sphi 0, %s163
      %s165 = sphi 0, %s163
      %s166 = sphi 0, %s165
      %s180 = sphi 0, %s166
      %s184 = sphi 0, %s184
      %s186 = sphi 0, %s184
      %s187 = sphi 0, %s186
      %s201 = sphi 0, %s187
      %s205 = sphi 0, %s205
      %s207 = sphi 0, %s205
      %s208 = sphi 0, %s207
      %s222 = sphi 0, %s208
      %s226 = sphi 0, %s226
      %s228 = sphi 0, %s226
      %s229 = sphi 0, %s228
      %s243 = sphi 0, %s229
      %s247 = sphi 0, %s247
      %s249 = sphi 0, %s247
      %s250 = sphi 0, %s249
      %s264 = sphi 0, %s250
      %s268 = sphi 0, %s268
      %s270 = sphi 0, %s268
      %s271 = sphi 0, %s270
      %s285 = sphi 0, %s271
      %s289 = sphi 0, %s289
      %s291 = sphi 0, %s289
      %s292 = sphi 0, %s291
      %s306 = sphi 0, %s292
      %s310 = sphi 0, %s310
      %s312 = sphi 0, %s310
      %s313 = sphi 0, %s312
      %s327 = sphi 0, %s313
      %s331 = sphi 0, %s331
      %s333 = sphi 0, %s331
      %s334 = sphi 0, %s333
      %s348 = sphi 0, %s334
      %s354 = sphi 0, %s356
      %s357 = sphi 0, %s354
      %s358 = sphi 0, %s357
      %s374 = sphi 0, %s358
    $region4: #{lenet_forward.1} parent=1 // loop_header_branch
      %27 = sbr.rel (%p25) target = $region8
    $region5: #{lenet_forward.1} parent=1 // loop_body
      %s29 = ssub.s32 %s24, 1
      %s30 = ssub.s32 %s24, 2
      %s31 = sadd.s32 %s24, 1
      %s32 = ssub.s32 %s24, %s31
      %p33 = scmp.eq.s32.totalorder %s32, 0
      %s35 = sadd.s32 %s34, 1
      %s36 = scalar_select %p33, %s34, %s35
      %p39 = pneg %p33
      %p40 = scmp.eq.s32.totalorder %s24, 1
      %p41 = por %p39, %p40
      %p42 = scmp.ne.s32.totalorder %s34, %s37
      %p43 = scmp.eq.s32.totalorder %s24, 0
      %p44 = por %p42, %p43
      %p45 = scmp.ne.s32.totalorder %s34, %s37
      %p46 = scmp.eq.s32.totalorder %s29, 1
      %p47 = por %p45, %p46
      %p48 = scmp.ne.s32.totalorder %s37, %s38
      %p49 = scmp.eq.s32.totalorder %s29, 0
      %p50 = por %p48, %p49
      %p51 = scmp.ne.s32.totalorder %s37, %s38
      %p52 = scmp.eq.s32.totalorder %s30, 1
      %p53 = por %p51, %p52
      %p55 = scmp.ne.s32.totalorder %s38, %s54
      %p56 = scmp.eq.s32.totalorder %s30, 0
      %p57 = por %p55, %p56
      %s59 = sadd.s32 %s58, 1
      %p62 = scmp.eq.s32.totalorder %s24, 1
      %p63 = scmp.ne.s32.totalorder %s58, %s60
      %p64 = scmp.eq.s32.totalorder %s24, 0
      %p65 = por %p63, %p64
      %p66 = scmp.ne.s32.totalorder %s58, %s60
      %p67 = scmp.eq.s32.totalorder %s29, 1
      %p68 = por %p66, %p67
      %p69 = scmp.ne.s32.totalorder %s60, %s61
      %p70 = scmp.eq.s32.totalorder %s29, 0
      %p71 = por %p69, %p70
      %p72 = scmp.ne.s32.totalorder %s60, %s61
      %p73 = scmp.eq.s32.totalorder %s30, 1
      %p74 = por %p72, %p73
      %p76 = scmp.ne.s32.totalorder %s61, %s75
      %p77 = scmp.eq.s32.totalorder %s30, 0
      %p78 = por %p76, %p77
      %s80 = sadd.s32 %s79, 1
      %p83 = scmp.eq.s32.totalorder %s24, 1
      %p84 = scmp.ne.s32.totalorder %s79, %s81
      %p85 = scmp.eq.s32.totalorder %s24, 0
      %p86 = por %p84, %p85
      %p87 = scmp.ne.s32.totalorder %s79, %s81
      %p88 = scmp.eq.s32.totalorder %s29, 1
      %p89 = por %p87, %p88
      %p90 = scmp.ne.s32.totalorder %s81, %s82
      %p91 = scmp.eq.s32.totalorder %s29, 0
      %p92 = por %p90, %p91
      %p93 = scmp.ne.s32.totalorder %s81, %s82
      %p94 = scmp.eq.s32.totalorder %s30, 1
      %p95 = por %p93, %p94
      %p97 = scmp.ne.s32.totalorder %s82, %s96
      %p98 = scmp.eq.s32.totalorder %s30, 0
      %p99 = por %p97, %p98
      %s101 = sadd.s32 %s100, 1
      %p104 = scmp.eq.s32.totalorder %s24, 1
      %p105 = scmp.ne.s32.totalorder %s100, %s102
      %p106 = scmp.eq.s32.totalorder %s24, 0
      %p107 = por %p105, %p106
      %p108 = scmp.ne.s32.totalorder %s100, %s102
      %p109 = scmp.eq.s32.totalorder %s29, 1
      %p110 = por %p108, %p109
      %p111 = scmp.ne.s32.totalorder %s102, %s103
      %p112 = scmp.eq.s32.totalorder %s29, 0
      %p113 = por %p111, %p112
      %p114 = scmp.ne.s32.totalorder %s102, %s103
      %p115 = scmp.eq.s32.totalorder %s30, 1
      %p116 = por %p114, %p115
      %p118 = scmp.ne.s32.totalorder %s103, %s117
      %p119 = scmp.eq.s32.totalorder %s30, 0
      %p120 = por %p118, %p119
      %s122 = sadd.s32 %s121, 1
      %p125 = scmp.eq.s32.totalorder %s24, 1
      %p126 = scmp.ne.s32.totalorder %s121, %s123
      %p127 = scmp.eq.s32.totalorder %s24, 0
      %p128 = por %p126, %p127
      %p129 = scmp.ne.s32.totalorder %s121, %s123
      %p130 = scmp.eq.s32.totalorder %s29, 1
      %p131 = por %p129, %p130
      %p132 = scmp.ne.s32.totalorder %s123, %s124
      %p133 = scmp.eq.s32.totalorder %s29, 0
      %p134 = por %p132, %p133
      %p135 = scmp.ne.s32.totalorder %s123, %s124
      %p136 = scmp.eq.s32.totalorder %s30, 1
      %p137 = por %p135, %p136
      %p139 = scmp.ne.s32.totalorder %s124, %s138
      %p140 = scmp.eq.s32.totalorder %s30, 0
      %p141 = por %p139, %p140
      %s143 = sadd.s32 %s142, 1
      %p146 = scmp.eq.s32.totalorder %s24, 1
      %p147 = scmp.ne.s32.totalorder %s142, %s144
      %p148 = scmp.eq.s32.totalorder %s24, 0
      %p149 = por %p147, %p148
      %p150 = scmp.ne.s32.totalorder %s142, %s144
      %p151 = scmp.eq.s32.totalorder %s29, 1
      %p152 = por %p150, %p151
      %p153 = scmp.ne.s32.totalorder %s144, %s145
      %p154 = scmp.eq.s32.totalorder %s29, 0
      %p155 = por %p153, %p154
      %p156 = scmp.ne.s32.totalorder %s144, %s145
      %p157 = scmp.eq.s32.totalorder %s30, 1
      %p158 = por %p156, %p157
      %p160 = scmp.ne.s32.totalorder %s145, %s159
      %p161 = scmp.eq.s32.totalorder %s30, 0
      %p162 = por %p160, %p161
      %s164 = sadd.s32 %s163, 1
      %p167 = scmp.eq.s32.totalorder %s24, 1
      %p168 = scmp.ne.s32.totalorder %s163, %s165
      %p169 = scmp.eq.s32.totalorder %s24, 0
      %p170 = por %p168, %p169
      %p171 = scmp.ne.s32.totalorder %s163, %s165
      %p172 = scmp.eq.s32.totalorder %s29, 1
      %p173 = por %p171, %p172
      %p174 = scmp.ne.s32.totalorder %s165, %s166
      %p175 = scmp.eq.s32.totalorder %s29, 0
      %p176 = por %p174, %p175
      %p177 = scmp.ne.s32.totalorder %s165, %s166
      %p178 = scmp.eq.s32.totalorder %s30, 1
      %p179 = por %p177, %p178
      %p181 = scmp.ne.s32.totalorder %s166, %s180
      %p182 = scmp.eq.s32.totalorder %s30, 0
      %p183 = por %p181, %p182
      %s185 = sadd.s32 %s184, 1
      %p188 = scmp.eq.s32.totalorder %s24, 1
      %p189 = scmp.ne.s32.totalorder %s184, %s186
      %p190 = scmp.eq.s32.totalorder %s24, 0
      %p191 = por %p189, %p190
      %p192 = scmp.ne.s32.totalorder %s184, %s186
      %p193 = scmp.eq.s32.totalorder %s29, 1
      %p194 = por %p192, %p193
      %p195 = scmp.ne.s32.totalorder %s186, %s187
      %p196 = scmp.eq.s32.totalorder %s29, 0
      %p197 = por %p195, %p196
      %p198 = scmp.ne.s32.totalorder %s186, %s187
      %p199 = scmp.eq.s32.totalorder %s30, 1
      %p200 = por %p198, %p199
      %p202 = scmp.ne.s32.totalorder %s187, %s201
      %p203 = scmp.eq.s32.totalorder %s30, 0
      %p204 = por %p202, %p203
      %s206 = sadd.s32 %s205, 1
      %p209 = scmp.eq.s32.totalorder %s24, 1
      %p210 = scmp.ne.s32.totalorder %s205, %s207
      %p211 = scmp.eq.s32.totalorder %s24, 0
      %p212 = por %p210, %p211
      %p213 = scmp.ne.s32.totalorder %s205, %s207
      %p214 = scmp.eq.s32.totalorder %s29, 1
      %p215 = por %p213, %p214
      %p216 = scmp.ne.s32.totalorder %s207, %s208
      %p217 = scmp.eq.s32.totalorder %s29, 0
      %p218 = por %p216, %p217
      %p219 = scmp.ne.s32.totalorder %s207, %s208
      %p220 = scmp.eq.s32.totalorder %s30, 1
      %p221 = por %p219, %p220
      %p223 = scmp.ne.s32.totalorder %s208, %s222
      %p224 = scmp.eq.s32.totalorder %s30, 0
      %p225 = por %p223, %p224
      %s227 = sadd.s32 %s226, 1
      %p230 = scmp.eq.s32.totalorder %s24, 1
      %p231 = scmp.ne.s32.totalorder %s226, %s228
      %p232 = scmp.eq.s32.totalorder %s24, 0
      %p233 = por %p231, %p232
      %p234 = scmp.ne.s32.totalorder %s226, %s228
      %p235 = scmp.eq.s32.totalorder %s29, 1
      %p236 = por %p234, %p235
      %p237 = scmp.ne.s32.totalorder %s228, %s229
      %p238 = scmp.eq.s32.totalorder %s29, 0
      %p239 = por %p237, %p238
      %p240 = scmp.ne.s32.totalorder %s228, %s229
      %p241 = scmp.eq.s32.totalorder %s30, 1
      %p242 = por %p240, %p241
      %p244 = scmp.ne.s32.totalorder %s229, %s243
      %p245 = scmp.eq.s32.totalorder %s30, 0
      %p246 = por %p244, %p245
      %s248 = sadd.s32 %s247, 1
      %p251 = scmp.eq.s32.totalorder %s24, 1
      %p252 = scmp.ne.s32.totalorder %s247, %s249
      %p253 = scmp.eq.s32.totalorder %s24, 0
      %p254 = por %p252, %p253
      %p255 = scmp.ne.s32.totalorder %s247, %s249
      %p256 = scmp.eq.s32.totalorder %s29, 1
      %p257 = por %p255, %p256
      %p258 = scmp.ne.s32.totalorder %s249, %s250
      %p259 = scmp.eq.s32.totalorder %s29, 0
      %p260 = por %p258, %p259
      %p261 = scmp.ne.s32.totalorder %s249, %s250
      %p262 = scmp.eq.s32.totalorder %s30, 1
      %p263 = por %p261, %p262
      %p265 = scmp.ne.s32.totalorder %s250, %s264
      %p266 = scmp.eq.s32.totalorder %s30, 0
      %p267 = por %p265, %p266
      %s269 = sadd.s32 %s268, 1
      %p272 = scmp.eq.s32.totalorder %s24, 1
      %p273 = scmp.ne.s32.totalorder %s268, %s270
      %p274 = scmp.eq.s32.totalorder %s24, 0
      %p275 = por %p273, %p274
      %p276 = scmp.ne.s32.totalorder %s268, %s270
      %p277 = scmp.eq.s32.totalorder %s29, 1
      %p278 = por %p276, %p277
      %p279 = scmp.ne.s32.totalorder %s270, %s271
      %p280 = scmp.eq.s32.totalorder %s29, 0
      %p281 = por %p279, %p280
      %p282 = scmp.ne.s32.totalorder %s270, %s271
      %p283 = scmp.eq.s32.totalorder %s30, 1
      %p284 = por %p282, %p283
      %p286 = scmp.ne.s32.totalorder %s271, %s285
      %p287 = scmp.eq.s32.totalorder %s30, 0
      %p288 = por %p286, %p287
      %s290 = sadd.s32 %s289, 1
      %p293 = scmp.eq.s32.totalorder %s24, 1
      %p294 = scmp.ne.s32.totalorder %s289, %s291
      %p295 = scmp.eq.s32.totalorder %s24, 0
      %p296 = por %p294, %p295
      %p297 = scmp.ne.s32.totalorder %s289, %s291
      %p298 = scmp.eq.s32.totalorder %s29, 1
      %p299 = por %p297, %p298
      %p300 = scmp.ne.s32.totalorder %s291, %s292
      %p301 = scmp.eq.s32.totalorder %s29, 0
      %p302 = por %p300, %p301
      %p303 = scmp.ne.s32.totalorder %s291, %s292
      %p304 = scmp.eq.s32.totalorder %s30, 1
      %p305 = por %p303, %p304
      %p307 = scmp.ne.s32.totalorder %s292, %s306
      %p308 = scmp.eq.s32.totalorder %s30, 0
      %p309 = por %p307, %p308
      %s311 = sadd.s32 %s310, 1
      %p314 = scmp.eq.s32.totalorder %s24, 1
      %p315 = scmp.ne.s32.totalorder %s310, %s312
      %p316 = scmp.eq.s32.totalorder %s24, 0
      %p317 = por %p315, %p316
      %p318 = scmp.ne.s32.totalorder %s310, %s312
      %p319 = scmp.eq.s32.totalorder %s29, 1
      %p320 = por %p318, %p319
      %p321 = scmp.ne.s32.totalorder %s312, %s313
      %p322 = scmp.eq.s32.totalorder %s29, 0
      %p323 = por %p321, %p322
      %p324 = scmp.ne.s32.totalorder %s312, %s313
      %p325 = scmp.eq.s32.totalorder %s30, 1
      %p326 = por %p324, %p325
      %p328 = scmp.ne.s32.totalorder %s313, %s327
      %p329 = scmp.eq.s32.totalorder %s30, 0
      %p330 = por %p328, %p329
      %s332 = sadd.s32 %s331, 1
      %p335 = scmp.eq.s32.totalorder %s24, 1
      %p336 = scmp.ne.s32.totalorder %s331, %s333
      %p337 = scmp.eq.s32.totalorder %s24, 0
      %p338 = por %p336, %p337
      %p339 = scmp.ne.s32.totalorder %s331, %s333
      %p340 = scmp.eq.s32.totalorder %s29, 1
      %p341 = por %p339, %p340
      %p342 = scmp.ne.s32.totalorder %s333, %s334
      %p343 = scmp.eq.s32.totalorder %s29, 0
      %p344 = por %p342, %p343
      %p345 = scmp.ne.s32.totalorder %s333, %s334
      %p346 = scmp.eq.s32.totalorder %s30, 1
      %p347 = por %p345, %p346
      %p349 = scmp.ne.s32.totalorder %s334, %s348
      %p350 = scmp.eq.s32.totalorder %s30, 0
      %p351 = por %p349, %p350
      %s352 = ssub.s32 %s24, %s31
      %p353 = scmp.eq.s32.totalorder %s352, 0
      %s355 = sadd.s32 %s354, 1
      %s356 = scalar_select %p353, %s354, %s355
      %p359 = pneg %p353
      %p360 = scmp.eq.s32.totalorder %s24, 1
      %p361 = por %p359, %p360
      %p362 = scmp.ne.s32.totalorder %s354, %s357
      %p363 = scmp.eq.s32.totalorder %s24, 0
      %p364 = por %p362, %p363
      %p365 = scmp.ne.s32.totalorder %s354, %s357
      %p366 = scmp.eq.s32.totalorder %s29, 1
      %p367 = por %p365, %p366
      %p368 = scmp.ne.s32.totalorder %s357, %s358
      %p369 = scmp.eq.s32.totalorder %s29, 0
      %p370 = por %p368, %p369
      %p371 = scmp.ne.s32.totalorder %s357, %s358
      %p372 = scmp.eq.s32.totalorder %s30, 1
      %p373 = por %p371, %p372
      %p375 = scmp.ne.s32.totalorder %s358, %s374
      %p376 = scmp.eq.s32.totalorder %s30, 0
      %p377 = por %p375, %p376
      %p378 = scmp.le.s32.totalorder 1, %s24
      %p379 = scmp.lt.s32.totalorder %s24, 3
      %p380 = pnand %p378, %p379
      %p381 = pneg %p380
      // Predicated region
      $region9: #{lenet_forward.1} parent=5 // pred_check
        _
      $region10: #{lenet_forward.1} parent=5 // pred_check_branch
        %383 = sbr.rel (%p380) target = $region12
      $region11: #{lenet_forward.1} parent=5 // pred_region
        %s384 = ssub.s32 %s24, 1
        // Predicated region
        $region13: #{lenet_forward.1} parent=11 // pred_check
          %p385 = pneg %p71
        $region14: #{lenet_forward.1} parent=11 // pred_check_branch
          %387 = sbr.rel (%p385) target = $region16
        $region15: #{lenet_forward.1} parent=11 // pred_region
          _
        $region16: #{lenet_forward.1} parent=11 // pred_fallthru
          _
        // Predicated region
        $region17: #{lenet_forward.1} parent=11 // pred_check
          %p388 = pneg %p92
        $region18: #{lenet_forward.1} parent=11 // pred_check_branch
          %390 = sbr.rel (%p388) target = $region20
        $region19: #{lenet_forward.1} parent=11 // pred_region
          _
        $region20: #{lenet_forward.1} parent=11 // pred_fallthru
          _
        // Predicated region
        $region21: #{lenet_forward.1} parent=11 // pred_check
          %p391 = pneg %p113
        $region22: #{lenet_forward.1} parent=11 // pred_check_branch
          %393 = sbr.rel (%p391) target = $region24
        $region23: #{lenet_forward.1} parent=11 // pred_region
          _
        $region24: #{lenet_forward.1} parent=11 // pred_fallthru
          _
        // Predicated region
        $region25: #{lenet_forward.1} parent=11 // pred_check
          %p394 = pneg %p134
        $region26: #{lenet_forward.1} parent=11 // pred_check_branch
          %396 = sbr.rel (%p394) target = $region28
        $region27: #{lenet_forward.1} parent=11 // pred_region
          _
        $region28: #{lenet_forward.1} parent=11 // pred_fallthru
          _
        // Predicated region
        $region29: #{lenet_forward.1} parent=11 // pred_check
          %p397 = pneg %p155
        $region30: #{lenet_forward.1} parent=11 // pred_check_branch
          %399 = sbr.rel (%p397) target = $region32
        $region31: #{lenet_forward.1} parent=11 // pred_region
          _
        $region32: #{lenet_forward.1} parent=11 // pred_fallthru
          _
        // Predicated region
        $region33: #{lenet_forward.1} parent=11 // pred_check
          %p400 = pneg %p176
        $region34: #{lenet_forward.1} parent=11 // pred_check_branch
          %402 = sbr.rel (%p400) target = $region36
        $region35: #{lenet_forward.1} parent=11 // pred_region
          _
        $region36: #{lenet_forward.1} parent=11 // pred_fallthru
          _
        // Predicated region
        $region37: #{lenet_forward.1} parent=11 // pred_check
          %p403 = pneg %p197
        $region38: #{lenet_forward.1} parent=11 // pred_check_branch
          %405 = sbr.rel (%p403) target = $region40
        $region39: #{lenet_forward.1} parent=11 // pred_region
          _
        $region40: #{lenet_forward.1} parent=11 // pred_fallthru
          _
        // Predicated region
        $region41: #{lenet_forward.1} parent=11 // pred_check
          %p406 = pneg %p218
        $region42: #{lenet_forward.1} parent=11 // pred_check_branch
          %408 = sbr.rel (%p406) target = $region44
        $region43: #{lenet_forward.1} parent=11 // pred_region
          _
        $region44: #{lenet_forward.1} parent=11 // pred_fallthru
          _
        // Predicated region
        $region45: #{lenet_forward.1} parent=11 // pred_check
          %p409 = pneg %p239
        $region46: #{lenet_forward.1} parent=11 // pred_check_branch
          %411 = sbr.rel (%p409) target = $region48
        $region47: #{lenet_forward.1} parent=11 // pred_region
          _
        $region48: #{lenet_forward.1} parent=11 // pred_fallthru
          _
        // Predicated region
        $region49: #{lenet_forward.1} parent=11 // pred_check
          %p412 = pneg %p260
        $region50: #{lenet_forward.1} parent=11 // pred_check_branch
          %414 = sbr.rel (%p412) target = $region52
        $region51: #{lenet_forward.1} parent=11 // pred_region
          _
        $region52: #{lenet_forward.1} parent=11 // pred_fallthru
          _
        // Predicated region
        $region53: #{lenet_forward.1} parent=11 // pred_check
          %p415 = pneg %p281
        $region54: #{lenet_forward.1} parent=11 // pred_check_branch
          %417 = sbr.rel (%p415) target = $region56
        $region55: #{lenet_forward.1} parent=11 // pred_region
          _
        $region56: #{lenet_forward.1} parent=11 // pred_fallthru
          _
        // Predicated region
        $region57: #{lenet_forward.1} parent=11 // pred_check
          %p418 = pneg %p302
        $region58: #{lenet_forward.1} parent=11 // pred_check_branch
          %420 = sbr.rel (%p418) target = $region60
        $region59: #{lenet_forward.1} parent=11 // pred_region
          _
        $region60: #{lenet_forward.1} parent=11 // pred_fallthru
          _
        // Predicated region
        $region61: #{lenet_forward.1} parent=11 // pred_check
          %p421 = pneg %p323
        $region62: #{lenet_forward.1} parent=11 // pred_check_branch
          %423 = sbr.rel (%p421) target = $region64
        $region63: #{lenet_forward.1} parent=11 // pred_region
          _
        $region64: #{lenet_forward.1} parent=11 // pred_fallthru
          _
        // Predicated region
        $region65: #{lenet_forward.1} parent=11 // pred_check
          %p424 = pneg %p344
        $region66: #{lenet_forward.1} parent=11 // pred_check_branch
          %426 = sbr.rel (%p424) target = $region68
        $region67: #{lenet_forward.1} parent=11 // pred_region
          _
        $region68: #{lenet_forward.1} parent=11 // pred_fallthru
          _
      $region12: #{lenet_forward.1} parent=5 // pred_fallthru
        _
      %p427 = scmp.lt.s32.totalorder %s24, 2
      // Predicated region
      $region69: #{lenet_forward.1} parent=5 // pred_check
        %p428 = pneg %p427
      $region70: #{lenet_forward.1} parent=5 // pred_check_branch
        %430 = sbr.rel (%p428) target = $region72
      $region71: #{lenet_forward.1} parent=5 // pred_region
        // Predicated region
        $region73: #{lenet_forward.1} parent=71 // pred_check
          %p431 = pneg %p44
        $region74: #{lenet_forward.1} parent=71 // pred_check_branch
          %433 = sbr.rel (%p431) target = $region76
        $region75: #{lenet_forward.1} parent=71 // pred_region
          %p434 = scmp.lt.s32.totalorder %s24, 1
          %s435 = scalar_select %p434, %s24, 1
          %s436 = smul.addr %s435, 4
          %s437 = smul.addr %s436, 8
          %s438 = scalar_lea.vmem %s0, %s437
        $region76: #{lenet_forward.1} parent=71 // pred_fallthru
          _
      $region72: #{lenet_forward.1} parent=5 // pred_fallthru
        _
      %p439 = scmp.le.s32.totalorder 1, %s24
      %p440 = scmp.lt.s32.totalorder %s24, 3
      %p441 = pnand %p439, %p440
      %p442 = pneg %p441
      // Predicated region
      $region77: #{lenet_forward.1} parent=5 // pred_check
        _
      $region78: #{lenet_forward.1} parent=5 // pred_check_branch
        %444 = sbr.rel (%p441) target = $region80
      $region79: #{lenet_forward.1} parent=5 // pred_region
        %s445 = ssub.s32 %s24, 1
        %p446 = scmp.lt.s32.totalorder %s29, 1
        %s447 = scalar_select %p446, %s29, 1
        %s448 = smul.addr %s447, 4
        %s449 = smul.addr %s448, 8
        %s450 = scalar_lea.vmem %s0, %s449
        %p451 = pneg %p50
        %p452 = pneg %p47
        %p453 = pneg %p71
        %p454 = pneg %p68
        %p455 = pneg %p92
        %p456 = pneg %p89
        %p457 = pneg %p113
        %p458 = pneg %p110
        %p459 = pneg %p134
        %p460 = pneg %p131
        %p461 = pneg %p155
        %p462 = pneg %p152
        %p463 = pneg %p176
        %p464 = pneg %p173
        %p465 = pneg %p197
        %p466 = pneg %p194
        %p467 = pneg %p218
        %p468 = pneg %p215
        %p469 = pneg %p239
        %p470 = pneg %p236
        %p471 = pneg %p260
        %p472 = pneg %p257
        %p473 = pneg %p281
        %p474 = pneg %p278
        %p475 = pneg %p302
        %p476 = pneg %p299
        %p477 = pneg %p323
        %p478 = pneg %p320
        %p479 = pneg %p344
        %p480 = pneg %p341
        %p481 = pneg %p370
        %p482 = pneg %p367
        %s483 = sand.u32 %s357, 1
        %s484 = scalar_lea.sflag [#allocation3], %s483
        %s485 = sand.u32 %s357, 1
        %s486 = scalar_lea.vmem [#allocation2], %s485
        %p487 = scmp.lt.s32.totalorder %s29, 1
        %s488 = scalar_select %p487, %s29, 1
        %s489 = smul.addr %s488, 4
        %s490 = smul.addr %s489, 8
        %s491 = scalar_lea.vmem %s0, %s490
        %v492 = vld [vmem:[%s491] sm:$0xff]
        %v493 = vld [vmem:[%s491 + $0x8] sm:$0xff]
        %v494 = vld [vmem:[%s491 + $0x10] sm:$0xff]
        %v495 = vld [vmem:[%s491 + $0x18] sm:$0xff]
        %v496 = vld [vmem:[%s1] sm:$0xff]
        %v497 = vld [vmem:[%s1 + $0x8] sm:$0xff]
        %v498 = vld [vmem:[%s1 + $0x10] sm:$0xff]
        %v499 = vld [vmem:[%s1 + $0x18] sm:$0xff]
        %v500 = vld [vmem:[%s1 + $0x20] sm:$0xff]
        %v501 = vld [vmem:[%s1 + $0x28] sm:$0xff]
        %v502 = vld [vmem:[%s1 + $0x30] sm:$0xff]
        %v503 = vld [vmem:[%s1 + $0x38] sm:$0xff]
        %v504 = vld [vmem:[%s1 + $0x40] sm:$0xff]
        %v505 = vld [vmem:[%s1 + $0x48] sm:$0xff]
        %v506 = vld [vmem:[%s1 + $0x50] sm:$0xff]
        %v507 = vld [vmem:[%s1 + $0x58] sm:$0xff]
        %v508 = vld [vmem:[%s1 + $0x60] sm:$0xff]
        %v509 = vld [vmem:[%s1 + $0x68] sm:$0xff]
        %v510 = vld [vmem:[%s1 + $0x70] sm:$0xff]
        %v511 = vld [vmem:[%s1 + $0x78] sm:$0xff]
        %v512 = vld [vmem:[%s1 + $0x80] sm:$0xff]
        %v513 = vld [vmem:[%s1 + $0x88] sm:$0xff]
        %v514 = vld [vmem:[%s1 + $0x90] sm:$0xff]
        %v515 = vld [vmem:[%s1 + $0x98] sm:$0xff]
        %v516 = vld [vmem:[%s1 + $0xa0] sm:$0xff]
        %v517 = vld [vmem:[%s1 + $0xa8] sm:$0xff]
        %v518 = vld [vmem:[%s1 + $0xb0] sm:$0xff]
        %v519 = vld [vmem:[%s1 + $0xb8] sm:$0xff]
        %v520 = vld [vmem:[%s1 + $0xc0] sm:$0xff]
        %v521 = vld [vmem:[%s1 + $0xc8] sm:$0xff]
        %v522 = vld [vmem:[%s1 + $0xd0] sm:$0xff]
        %v523 = vld [vmem:[%s1 + $0xd8] sm:$0xff]
        %v524 = vld [vmem:[%s1 + $0xe0] sm:$0xff]
        %v525 = vld [vmem:[%s1 + $0xe8] sm:$0xff]
        %v526 = vld [vmem:[%s1 + $0xf0] sm:$0xff]
        %v527 = vld [vmem:[%s1 + $0xf8] sm:$0xff]
        %s528 = scalar_lea.vmem %s1, 256
        %v529 = vld [vmem:[%s528] sm:$0xff]
        %v530 = vld [vmem:[%s528 + $0x8] sm:$0xff]
        %v531 = vld [vmem:[%s528 + $0x10] sm:$0xff]
        %v532 = vld [vmem:[%s528 + $0x18] sm:$0xff]
        %v533 = vld [vmem:[%s528 + $0x20] sm:$0xff]
        %v534 = vld [vmem:[%s528 + $0x28] sm:$0xff]
        %v535 = vld [vmem:[%s528 + $0x30] sm:$0xff]
        %v536 = vld [vmem:[%s528 + $0x38] sm:$0xff]
        %v537 = vld [vmem:[%s528 + $0x40] sm:$0xff]
        %v538 = vld [vmem:[%s528 + $0x48] sm:$0xff]
        %v539 = vld [vmem:[%s528 + $0x50] sm:$0xff]
        %v540 = vld [vmem:[%s528 + $0x58] sm:$0xff]
        %v541 = vld [vmem:[%s528 + $0x60] sm:$0xff]
        %v542 = vld [vmem:[%s528 + $0x68] sm:$0xff]
        %v543 = vld [vmem:[%s528 + $0x70] sm:$0xff]
        %v544 = vld [vmem:[%s528 + $0x78] sm:$0xff]
        %v545 = vld [vmem:[%s528 + $0x80] sm:$0xff]
        %v546 = vld [vmem:[%s528 + $0x88] sm:$0xff]
        %v547 = vld [vmem:[%s528 + $0x90] sm:$0xff]
        %v548 = vld [vmem:[%s528 + $0x98] sm:$0xff]
        %v549 = vld [vmem:[%s528 + $0xa0] sm:$0xff]
        %v550 = vld [vmem:[%s528 + $0xa8] sm:$0xff]
        %v551 = vld [vmem:[%s528 + $0xb0] sm:$0xff]
        %v552 = vld [vmem:[%s528 + $0xb8] sm:$0xff]
        %v553 = vld [vmem:[%s528 + $0xc0] sm:$0xff]
        %v554 = vld [vmem:[%s528 + $0xc8] sm:$0xff]
        %v555 = vld [vmem:[%s528 + $0xd0] sm:$0xff]
        %v556 = vld [vmem:[%s528 + $0xd8] sm:$0xff]
        %v557 = vld [vmem:[%s528 + $0xe0] sm:$0xff]
        %v558 = vld [vmem:[%s528 + $0xe8] sm:$0xff]
        %v559 = vld [vmem:[%s528 + $0xf0] sm:$0xff]
        %v560 = vld [vmem:[%s528 + $0xf8] sm:$0xff]
        %vm565 = vcmask 1046528
        %v566 = vrot.slane %v492, 1
        %v567 = vrot.slane %v493, 1
        %v568 = vsel %vm565, %v566, %v567
        %v569 = vrot.slane %v494, 1
        %v570 = vsel %vm565, %v567, %v569
        %v571 = vrot.slane %v495, 1
        %v572 = vsel %vm565, %v569, %v571
        %577 = vmatprep.subr.mxu0 %v530
        %578 = vmatpush1.msra.mxu0 %v529
        %579 = vmatprep.subr.mxu0 %v532
        %580 = vmatpush1.msra.mxu0 %v531
        %581 = vmatprep.subr.mxu0 %v534
        %582 = vmatpush1.msra.mxu0 %v533
        %583 = vmatprep.subr.mxu0 %v536
        %584 = vmatpush1.msra.mxu0 %v535
        %585 = vmatprep.subr.mxu0 %v538
        %586 = vmatpush1.msra.mxu0 %v537
        %587 = vmatprep.subr.mxu0 %v540
        %588 = vmatpush1.msra.mxu0 %v539
        %589 = vmatprep.subr.mxu0 %v542
        %590 = vmatpush1.msra.mxu0 %v541
        %591 = vmatprep.subr.mxu0 %v544
        %592 = vmatpush1.msra.mxu0 %v543
        %593 = vmatprep.subr.mxu0 %v546
        %594 = vmatpush1.msra.mxu0 %v545
        %595 = vmatprep.subr.mxu0 %v548
        %596 = vmatpush1.msra.mxu0 %v547
        %597 = vmatprep.subr.mxu0 %v550
        %598 = vmatpush1.msra.mxu0 %v549
        %599 = vmatprep.subr.mxu0 %v552
        %600 = vmatpush1.msra.mxu0 %v551
        %601 = vmatprep.subr.mxu0 %v554
        %602 = vmatpush1.msra.mxu0 %v553
        %603 = vmatprep.subr.mxu0 %v556
        %604 = vmatpush1.msra.mxu0 %v555
        %605 = vmatprep.subr.mxu0 %v558
        %606 = vmatpush1.msra.mxu0 %v557
        %607 = vmatprep.subr.mxu0 %v560
        %608 = vmatpush1.msra.mxu0 %v559
        %609 = vmatprep.subr.mxu0 0.0
        %610 = vmatpush1.msra.mxu0 0.0
        %611 = vmatprep.subr.mxu0 0.0
        %612 = vmatpush1.msra.mxu0 0.0
        %613 = vmatprep.subr.mxu0 0.0
        %614 = vmatpush1.msra.mxu0 0.0
        %615 = vmatprep.subr.mxu0 0.0
        %616 = vmatpush1.msra.mxu0 0.0
        %617 = vmatprep.subr.mxu0 0.0
        %618 = vmatpush1.msra.mxu0 0.0
        %619 = vmatprep.subr.mxu0 0.0
        %620 = vmatpush1.msra.mxu0 0.0
        %621 = vmatprep.subr.mxu0 0.0
        %622 = vmatpush1.msra.mxu0 0.0
        %623 = vmatprep.subr.mxu0 0.0
        %624 = vmatpush1.msra.mxu0 0.0
        %625 = vmatprep.subr.mxu0 0.0
        %626 = vmatpush1.msra.mxu0 0.0
        %627 = vmatprep.subr.mxu0 0.0
        %628 = vmatpush1.msra.mxu0 0.0
        %629 = vmatprep.subr.mxu0 0.0
        %630 = vmatpush1.msra.mxu0 0.0
        %631 = vmatprep.subr.mxu0 0.0
        %632 = vmatpush1.msra.mxu0 0.0
        %633 = vmatprep.subr.mxu0 0.0
        %634 = vmatpush1.msra.mxu0 0.0
        %635 = vmatprep.subr.mxu0 0.0
        %636 = vmatpush1.msra.mxu0 0.0
        %637 = vmatprep.subr.mxu0 0.0
        %638 = vmatpush1.msra.mxu0 0.0
        %639 = vmatprep.subr.mxu0 0.0
        %640 = vmatpush1.msra.mxu0 0.0
        %641 = vmatprep.mubr.f32.mxu0 0.0
        %642 = vmatmul.mubr.f32.gmra.mrb[0].mxu0 %v568
        %v643 = vpop.f32.mrb[0].mxu0
        %v644 = vadd.f32 0.0, %v643
        %v645 = vpop.f32.mrb[0].mxu0
        %v646 = vadd.f32 0.0, %v645
        %647 = vmatprep.mubr.f32.mxu0 0.0
        %648 = vmatmul.mubr.f32.gmra.mrb[0].mxu0 %v570
        %v649 = vpop.f32.mrb[0].mxu0
        %v650 = vadd.f32 0.0, %v649
        %v651 = vpop.f32.mrb[0].mxu0
        %v652 = vadd.f32 0.0, %v651
        %653 = vmatprep.mubr.f32.mxu0 0.0
        %654 = vmatmul.mubr.f32.gmra.mrb[0].mxu0 %v572
        %v655 = vpop.f32.mrb[0].mxu0
        %v656 = vadd.f32 0.0, %v655
        %v657 = vpop.f32.mrb[0].mxu0
        %v658 = vadd.f32 0.0, %v657
        %659 = vmatprep.mubr.f32.mxu0 0.0
        %660 = vmatmul.mubr.f32.gmra.mrb[0].mxu0 %v571
        %v661 = vpop.f32.mrb[0].mxu0
        %v662 = vadd.f32 0.0, %v661
        %v663 = vpop.f32.mrb[0].mxu0
        %v664 = vadd.f32 0.0, %v663
        %665 = vdwg.mxu0
        %666 = vmatprep.subr.mxu0 %v497
        %667 = vmatpush1.msra.mxu0 %v496
        %668 = vmatprep.subr.mxu0 %v499
        %669 = vmatpush1.msra.mxu0 %v498
        %670 = vmatprep.subr.mxu0 %v501
        %671 = vmatpush1.msra.mxu0 %v500
        %672 = vmatprep.subr.mxu0 %v503
        %673 = vmatpush1.msra.mxu0 %v502
        %674 = vmatprep.subr.mxu0 %v505
        %675 = vmatpush1.msra.mxu0 %v504
        %676 = vmatprep.subr.mxu0 %v507
        %677 = vmatpush1.msra.mxu0 %v506
        %678 = vmatprep.subr.mxu0 %v509
        %679 = vmatpush1.msra.mxu0 %v508
        %680 = vmatprep.subr.mxu0 %v511
        %681 = vmatpush1.msra.mxu0 %v510
        %682 = vmatprep.subr.mxu0 %v513
        %683 = vmatpush1.msra.mxu0 %v512
        %684 = vmatprep.subr.mxu0 %v515
        %685 = vmatpush1.msra.mxu0 %v514
        %686 = vmatprep.subr.mxu0 %v517
        %687 = vmatpush1.msra.mxu0 %v516
        %688 = vmatprep.subr.mxu0 %v519
        %689 = vmatpush1.msra.mxu0 %v518
        %690 = vmatprep.subr.mxu0 %v521
        %691 = vmatpush1.msra.mxu0 %v520
        %692 = vmatprep.subr.mxu0 %v523
        %693 = vmatpush1.msra.mxu0 %v522
        %694 = vmatprep.subr.mxu0 %v525
        %695 = vmatpush1.msra.mxu0 %v524
        %696 = vmatprep.subr.mxu0 %v527
        %697 = vmatpush1.msra.mxu0 %v526
        %698 = vmatprep.subr.mxu0 0.0
        %699 = vmatpush1.msra.mxu0 0.0
        %700 = vmatprep.subr.mxu0 0.0
        %701 = vmatpush1.msra.mxu0 0.0
        %702 = vmatprep.subr.mxu0 0.0
        %703 = vmatpush1.msra.mxu0 0.0
        %704 = vmatprep.subr.mxu0 0.0
        %705 = vmatpush1.msra.mxu0 0.0
        %706 = vmatprep.subr.mxu0 0.0
        %707 = vmatpush1.msra.mxu0 0.0
        %708 = vmatprep.subr.mxu0 0.0
        %709 = vmatpush1.msra.mxu0 0.0
        %710 = vmatprep.subr.mxu0 0.0
        %711 = vmatpush1.msra.mxu0 0.0
        %712 = vmatprep.subr.mxu0 0.0
        %713 = vmatpush1.msra.mxu0 0.0
        %714 = vmatprep.subr.mxu0 0.0
        %715 = vmatpush1.msra.mxu0 0.0
        %716 = vmatprep.subr.mxu0 0.0
        %717 = vmatpush1.msra.mxu0 0.0
        %718 = vmatprep.subr.mxu0 0.0
        %719 = vmatpush1.msra.mxu0 0.0
        %720 = vmatprep.subr.mxu0 0.0
        %721 = vmatpush1.msra.mxu0 0.0
        %722 = vmatprep.subr.mxu0 0.0
        %723 = vmatpush1.msra.mxu0 0.0
        %724 = vmatprep.subr.mxu0 0.0
        %725 = vmatpush1.msra.mxu0 0.0
        %726 = vmatprep.subr.mxu0 0.0
        %727 = vmatpush1.msra.mxu0 0.0
        %728 = vmatprep.subr.mxu0 0.0
        %729 = vmatpush1.msra.mxu0 0.0
        %730 = vmatprep.mubr.f32.mxu0 0.0
        %731 = vmatmul.mubr.f32.gmra.mrb[0].mxu0 %v492
        %v732 = vpop.f32.mrb[0].mxu0
        %v733 = vadd.f32 %v644, %v732
        %v734 = vpop.f32.mrb[0].mxu0
        %v735 = vadd.f32 %v646, %v734
        %736 = vmatprep.mubr.f32.mxu0 0.0
        %737 = vmatmul.mubr.f32.gmra.mrb[0].mxu0 %v493
        %v738 = vpop.f32.mrb[0].mxu0
        %v739 = vadd.f32 %v650, %v738
        %v740 = vpop.f32.mrb[0].mxu0
        %v741 = vadd.f32 %v652, %v740
        %742 = vmatprep.mubr.f32.mxu0 0.0
        %743 = vmatmul.mubr.f32.gmra.mrb[0].mxu0 %v494
        %v744 = vpop.f32.mrb[0].mxu0
        %v745 = vadd.f32 %v656, %v744
        %v746 = vpop.f32.mrb[0].mxu0
        %v747 = vadd.f32 %v658, %v746
        %748 = vmatprep.mubr.f32.mxu0 0.0
        %749 = vmatmul.mubr.f32.gmra.mrb[0].mxu0 %v495
        %v750 = vpop.f32.mrb[0].mxu0
        %v751 = vadd.f32 %v662, %v750
        %v752 = vpop.f32.mrb[0].mxu0
        %v753 = vadd.f32 %v664, %v752
        %754 = vdwg.mxu0
        %s755 = scalar_lea.vmem %s1, 512
        %v756 = vld [vmem:[%s755] sm:$0xff]
        %v757 = vld [vmem:[%s755 + $0x8] sm:$0xff]
        %v758 = vld [vmem:[%s755 + $0x10] sm:$0xff]
        %v759 = vld [vmem:[%s755 + $0x18] sm:$0xff]
        %v760 = vld [vmem:[%s755 + $0x20] sm:$0xff]
        %v761 = vld [vmem:[%s755 + $0x28] sm:$0xff]
        %v762 = vld [vmem:[%s755 + $0x30] sm:$0xff]
        %v763 = vld [vmem:[%s755 + $0x38] sm:$0xff]
        %v764 = vld [vmem:[%s755 + $0x40] sm:$0xff]
        %v765 = vld [vmem:[%s755 + $0x48] sm:$0xff]
        %v766 = vld [vmem:[%s755 + $0x50] sm:$0xff]
        %v767 = vld [vmem:[%s755 + $0x58] sm:$0xff]
        %v768 = vld [vmem:[%s755 + $0x60] sm:$0xff]
        %v769 = vld [vmem:[%s755 + $0x68] sm:$0xff]
        %v770 = vld [vmem:[%s755 + $0x70] sm:$0xff]
        %v771 = vld [vmem:[%s755 + $0x78] sm:$0xff]
        %v772 = vld [vmem:[%s755 + $0x80] sm:$0xff]
        %v773 = vld [vmem:[%s755 + $0x88] sm:$0xff]
        %v774 = vld [vmem:[%s755 + $0x90] sm:$0xff]
        %v775 = vld [vmem:[%s755 + $0x98] sm:$0xff]
        %v776 = vld [vmem:[%s755 + $0xa0] sm:$0xff]
        %v777 = vld [vmem:[%s755 + $0xa8] sm:$0xff]
        %v778 = vld [vmem:[%s755 + $0xb0] sm:$0xff]
        %v779 = vld [vmem:[%s755 + $0xb8] sm:$0xff]
        %v780 = vld [vmem:[%s755 + $0xc0] sm:$0xff]
        %v781 = vld [vmem:[%s755 + $0xc8] sm:$0xff]
        %v782 = vld [vmem:[%s755 + $0xd0] sm:$0xff]
        %v783 = vld [vmem:[%s755 + $0xd8] sm:$0xff]
        %v784 = vld [vmem:[%s755 + $0xe0] sm:$0xff]
        %v785 = vld [vmem:[%s755 + $0xe8] sm:$0xff]
        %v786 = vld [vmem:[%s755 + $0xf0] sm:$0xff]
        %v787 = vld [vmem:[%s755 + $0xf8] sm:$0xff]
        %vm788 = vcmask 1045504
        %v789 = vrot.slane %v492, 2
        %v790 = vrot.slane %v493, 2
        %v791 = vsel %vm788, %v789, %v790
        %v792 = vrot.slane %v494, 2
        %v793 = vsel %vm788, %v790, %v792
        %v794 = vrot.slane %v495, 2
        %v795 = vsel %vm788, %v792, %v794
        %800 = vmatprep.subr.mxu0 %v757
        %801 = vmatpush1.msra.mxu0 %v756
        %802 = vmatprep.subr.mxu0 %v759
        %803 = vmatpush1.msra.mxu0 %v758
        %804 = vmatprep.subr.mxu0 %v761
        %805 = vmatpush1.msra.mxu0 %v760
        %806 = vmatprep.subr.mxu0 %v763
        %807 = vmatpush1.msra.mxu0 %v762
        %808 = vmatprep.subr.mxu0 %v765
        %809 = vmatpush1.msra.mxu0 %v764
        %810 = vmatprep.subr.mxu0 %v767
        %811 = vmatpush1.msra.mxu0 %v766
        %812 = vmatprep.subr.mxu0 %v769
        %813 = vmatpush1.msra.mxu0 %v768
        %814 = vmatprep.subr.mxu0 %v771
        %815 = vmatpush1.msra.mxu0 %v770
        %816 = vmatprep.subr.mxu0 %v773
        %817 = vmatpush1.msra.mxu0 %v772
        %818 = vmatprep.subr.mxu0 %v775
        %819 = vmatpush1.msra.mxu0 %v774
        %820 = vmatprep.subr.mxu0 %v777
        %821 = vmatpush1.msra.mxu0 %v776
        %822 = vmatprep.subr.mxu0 %v779
        %823 = vmatpush1.msra.mxu0 %v778
        %824 = vmatprep.subr.mxu0 %v781
        %825 = vmatpush1.msra.mxu0 %v780
        %826 = vmatprep.subr.mxu0 %v783
        %827 = vmatpush1.msra.mxu0 %v782
        %828 = vmatprep.subr.mxu0 %v785
        %829 = vmatpush1.msra.mxu0 %v784
        %830 = vmatprep.subr.mxu0 %v787
        %831 = vmatpush1.msra.mxu0 %v786
        %832 = vmatprep.subr.mxu0 0.0
        %833 = vmatpush1.msra.mxu0 0.0
        %834 = vmatprep.subr.mxu0 0.0
        %835 = vmatpush1.msra.mxu0 0.0
        %836 = vmatprep.subr.mxu0 0.0
        %837 = vmatpush1.msra.mxu0 0.0
        %838 = vmatprep.subr.mxu0 0.0
        %839 = vmatpush1.msra.mxu0 0.0
        %840 = vmatprep.subr.mxu0 0.0
        %841 = vmatpush1.msra.mxu0 0.0
        %842 = vmatprep.subr.mxu0 0.0
        %843 = vmatpush1.msra.mxu0 0.0
        %844 = vmatprep.subr.mxu0 0.0
        %845 = vmatpush1.msra.mxu0 0.0
        %846 = vmatprep.subr.mxu0 0.0
        %847 = vmatpush1.msra.mxu0 0.0
        %848 = vmatprep.subr.mxu0 0.0
        %849 = vmatpush1.msra.mxu0 0.0
        %850 = vmatprep.subr.mxu0 0.0
        %851 = vmatpush1.msra.mxu0 0.0
        %852 = vmatprep.subr.mxu0 0.0
        %853 = vmatpush1.msra.mxu0 0.0
        %854 = vmatprep.subr.mxu0 0.0
        %855 = vmatpush1.msra.mxu0 0.0
        %856 = vmatprep.subr.mxu0 0.0
        %857 = vmatpush1.msra.mxu0 0.0
        %858 = vmatprep.subr.mxu0 0.0
        %859 = vmatpush1.msra.mxu0 0.0
        %860 = vmatprep.subr.mxu0 0.0
        %861 = vmatpush1.msra.mxu0 0.0
        %862 = vmatprep.subr.mxu0 0.0
        %863 = vmatpush1.msra.mxu0 0.0
        %864 = vmatprep.mubr.f32.mxu0 0.0
        %865 = vmatmul.mubr.f32.gmra.mrb[0].mxu0 %v791
        %v866 = vpop.f32.mrb[0].mxu0
        %v867 = vadd.f32 0.0, %v866
        %v868 = vpop.f32.mrb[0].mxu0
        %v869 = vadd.f32 0.0, %v868
        %870 = vmatprep.mubr.f32.mxu0 0.0
        %871 = vmatmul.mubr.f32.gmra.mrb[0].mxu0 %v793
        %v872 = vpop.f32.mrb[0].mxu0
        %v873 = vadd.f32 0.0, %v872
        %v874 = vpop.f32.mrb[0].mxu0
        %v875 = vadd.f32 0.0, %v874
        %876 = vmatprep.mubr.f32.mxu0 0.0
        %877 = vmatmul.mubr.f32.gmra.mrb[0].mxu0 %v795
        %v878 = vpop.f32.mrb[0].mxu0
        %v879 = vadd.f32 0.0, %v878
        %v880 = vpop.f32.mrb[0].mxu0
        %v881 = vadd.f32 0.0, %v880
        %882 = vmatprep.mubr.f32.mxu0 0.0
        %883 = vmatmul.mubr.f32.gmra.mrb[0].mxu0 %v794
        %v884 = vpop.f32.mrb[0].mxu0
        %v885 = vadd.f32 0.0, %v884
        %v886 = vpop.f32.mrb[0].mxu0
        %v887 = vadd.f32 0.0, %v886
        %888 = vdwg.mxu0
        %v889 = vadd.f32 %v733, %v867
        %v890 = vadd.f32 %v735, %v869
        %v891 = vadd.f32 %v739, %v873
        %v892 = vadd.f32 %v741, %v875
        %v893 = vadd.f32 %v745, %v879
        %v894 = vadd.f32 %v747, %v881
        %v895 = vadd.f32 %v751, %v885
        %v896 = vadd.f32 %v753, %v887
        %s897 = scalar_lea.vmem %s1, 768
        %v898 = vld [vmem:[%s897] sm:$0xff]
        %v899 = vld [vmem:[%s897 + $0x8] sm:$0xff]
        %v900 = vld [vmem:[%s897 + $0x10] sm:$0xff]
        %v901 = vld [vmem:[%s897 + $0x18] sm:$0xff]
        %v902 = vld [vmem:[%s897 + $0x20] sm:$0xff]
        %v903 = vld [vmem:[%s897 + $0x28] sm:$0xff]
        %v904 = vld [vmem:[%s897 + $0x30] sm:$0xff]
        %v905 = vld [vmem:[%s897 + $0x38] sm:$0xff]
        %v906 = vld [vmem:[%s897 + $0x40] sm:$0xff]
        %v907 = vld [vmem:[%s897 + $0x48] sm:$0xff]
        %v908 = vld [vmem:[%s897 + $0x50] sm:$0xff]
        %v909 = vld [vmem:[%s897 + $0x58] sm:$0xff]
        %v910 = vld [vmem:[%s897 + $0x60] sm:$0xff]
        %v911 = vld [vmem:[%s897 + $0x68] sm:$0xff]
        %v912 = vld [vmem:[%s897 + $0x70] sm:$0xff]
        %v913 = vld [vmem:[%s897 + $0x78] sm:$0xff]
        %v914 = vld [vmem:[%s897 + $0x80] sm:$0xff]
        %v915 = vld [vmem:[%s897 + $0x88] sm:$0xff]
        %v916 = vld [vmem:[%s897 + $0x90] sm:$0xff]
        %v917 = vld [vmem:[%s897 + $0x98] sm:$0xff]
        %v918 = vld [vmem:[%s897 + $0xa0] sm:$0xff]
        %v919 = vld [vmem:[%s897 + $0xa8] sm:$0xff]
        %v920 = vld [vmem:[%s897 + $0xb0] sm:$0xff]
        %v921 = vld [vmem:[%s897 + $0xb8] sm:$0xff]
        %v922 = vld [vmem:[%s897 + $0xc0] sm:$0xff]
        %v923 = vld [vmem:[%s897 + $0xc8] sm:$0xff]
        %v924 = vld [vmem:[%s897 + $0xd0] sm:$0xff]
        %v925 = vld [vmem:[%s897 + $0xd8] sm:$0xff]
        %v926 = vld [vmem:[%s897 + $0xe0] sm:$0xff]
        %v927 = vld [vmem:[%s897 + $0xe8] sm:$0xff]
        %v928 = vld [vmem:[%s897 + $0xf0] sm:$0xff]
        %v929 = vld [vmem:[%s897 + $0xf8] sm:$0xff]
        %vm930 = vcmask 1044480
        %v931 = vrot.slane %v492, 3
        %v932 = vrot.slane %v493, 3
        %v933 = vsel %vm930, %v931, %v932
        %v934 = vrot.slane %v494, 3
        %v935 = vsel %vm930, %v932, %v934
        %v936 = vrot.slane %v495, 3
        %v937 = vsel %vm930, %v934, %v936
        %942 = vmatprep.subr.mxu0 %v899
        %943 = vmatpush1.msra.mxu0 %v898
        %944 = vmatprep.subr.mxu0 %v901
        %945 = vmatpush1.msra.mxu0 %v900
        %946 = vmatprep.subr.mxu0 %v903
        %947 = vmatpush1.msra.mxu0 %v902
        %948 = vmatprep.subr.mxu0 %v905
        %949 = vmatpush1.msra.mxu0 %v904
        %950 = vmatprep.subr.mxu0 %v907
        %951 = vmatpush1.msra.mxu0 %v906
        %952 = vmatprep.subr.mxu0 %v909
        %953 = vmatpush1.msra.mxu0 %v908
        %954 = vmatprep.subr.mxu0 %v911
        %955 = vmatpush1.msra.mxu0 %v910
        %956 = vmatprep.subr.mxu0 %v913
        %957 = vmatpush1.msra.mxu0 %v912
        %958 = vmatprep.subr.mxu0 %v915
        %959 = vmatpush1.msra.mxu0 %v914
        %960 = vmatprep.subr.mxu0 %v917
        %961 = vmatpush1.msra.mxu0 %v916
        %962 = vmatprep.subr.mxu0 %v919
        %963 = vmatpush1.msra.mxu0 %v918
        %964 = vmatprep.subr.mxu0 %v921
        %965 = vmatpush1.msra.mxu0 %v920
        %966 = vmatprep.subr.mxu0 %v923
        %967 = vmatpush1.msra.mxu0 %v922
        %968 = vmatprep.subr.mxu0 %v925
        %969 = vmatpush1.msra.mxu0 %v924
        %970 = vmatprep.subr.mxu0 %v927
        %971 = vmatpush1.msra.mxu0 %v926
        %972 = vmatprep.subr.mxu0 %v929
        %973 = vmatpush1.msra.mxu0 %v928
        %974 = vmatprep.subr.mxu0 0.0
        %975 = vmatpush1.msra.mxu0 0.0
        %976 = vmatprep.subr.mxu0 0.0
        %977 = vmatpush1.msra.mxu0 0.0
        %978 = vmatprep.subr.mxu0 0.0
        %979 = vmatpush1.msra.mxu0 0.0
        %980 = vmatprep.subr.mxu0 0.0
        %981 = vmatpush1.msra.mxu0 0.0
        %982 = vmatprep.subr.mxu0 0.0
        %983 = vmatpush1.msra.mxu0 0.0
        %984 = vmatprep.subr.mxu0 0.0
        %985 = vmatpush1.msra.mxu0 0.0
        %986 = vmatprep.subr.mxu0 0.0
        %987 = vmatpush1.msra.mxu0 0.0
        %988 = vmatprep.subr.mxu0 0.0
        %989 = vmatpush1.msra.mxu0 0.0
        %990 = vmatprep.subr.mxu0 0.0
        %991 = vmatpush1.msra.mxu0 0.0
        %992 = vmatprep.subr.mxu0 0.0
        %993 = vmatpush1.msra.mxu0 0.0
        %994 = vmatprep.subr.mxu0 0.0
        %995 = vmatpush1.msra.mxu0 0.0
        %996 = vmatprep.subr.mxu0 0.0
        %997 = vmatpush1.msra.mxu0 0.0
        %998 = vmatprep.subr.mxu0 0.0
        %999 = vmatpush1.msra.mxu0 0.0
        %1000 = vmatprep.subr.mxu0 0.0
        %1001 = vmatpush1.msra.mxu0 0.0
        %1002 = vmatprep.subr.mxu0 0.0
        %1003 = vmatpush1.msra.mxu0 0.0
        %1004 = vmatprep.subr.mxu0 0.0
        %1005 = vmatpush1.msra.mxu0 0.0
        %1006 = vmatprep.mubr.f32.mxu0 0.0
        %1007 = vmatmul.mubr.f32.gmra.mrb[0].mxu0 %v933
        %v1008 = vpop.f32.mrb[0].mxu0
        %v1009 = vadd.f32 0.0, %v1008
        %v1010 = vpop.f32.mrb[0].mxu0
        %v1011 = vadd.f32 0.0, %v1010
        %1012 = vmatprep.mubr.f32.mxu0 0.0
        %1013 = vmatmul.mubr.f32.gmra.mrb[0].mxu0 %v935
        %v1014 = vpop.f32.mrb[0].mxu0
        %v1015 = vadd.f32 0.0, %v1014
        %v1016 = vpop.f32.mrb[0].mxu0
        %v1017 = vadd.f32 0.0, %v1016
        %1018 = vmatprep.mubr.f32.mxu0 0.0
        %1019 = vmatmul.mubr.f32.gmra.mrb[0].mxu0 %v937
        %v1020 = vpop.f32.mrb[0].mxu0
        %v1021 = vadd.f32 0.0, %v1020
        %v1022 = vpop.f32.mrb[0].mxu0
        %v1023 = vadd.f32 0.0, %v1022
        %1024 = vmatprep.mubr.f32.mxu0 0.0
        %1025 = vmatmul.mubr.f32.gmra.mrb[0].mxu0 %v936
        %v1026 = vpop.f32.mrb[0].mxu0
        %v1027 = vadd.f32 0.0, %v1026
        %v1028 = vpop.f32.mrb[0].mxu0
        %v1029 = vadd.f32 0.0, %v1028
        %1030 = vdwg.mxu0
        %v1031 = vadd.f32 %v889, %v1009
        %v1032 = vadd.f32 %v890, %v1011
        %v1033 = vadd.f32 %v891, %v1015
        %v1034 = vadd.f32 %v892, %v1017
        %v1035 = vadd.f32 %v893, %v1021
        %v1036 = vadd.f32 %v894, %v1023
        %v1037 = vadd.f32 %v895, %v1027
        %v1038 = vadd.f32 %v896, %v1029
        %s1039 = scalar_lea.vmem %s1, 1024
        %v1040 = vld [vmem:[%s1039] sm:$0xff]
        %v1041 = vld [vmem:[%s1039 + $0x8] sm:$0xff]
        %v1042 = vld [vmem:[%s1039 + $0x10] sm:$0xff]
        %v1043 = vld [vmem:[%s1039 + $0x18] sm:$0xff]
        %v1044 = vld [vmem:[%s1039 + $0x20] sm:$0xff]
        %v1045 = vld [vmem:[%s1039 + $0x28] sm:$0xff]
        %v1046 = vld [vmem:[%s1039 + $0x30] sm:$0xff]
        %v1047 = vld [vmem:[%s1039 + $0x38] sm:$0xff]
        %v1048 = vld [vmem:[%s1039 + $0x40] sm:$0xff]
        %v1049 = vld [vmem:[%s1039 + $0x48] sm:$0xff]
        %v1050 = vld [vmem:[%s1039 + $0x50] sm:$0xff]
        %v1051 = vld [vmem:[%s1039 + $0x58] sm:$0xff]
        %v1052 = vld [vmem:[%s1039 + $0x60] sm:$0xff]
        %v1053 = vld [vmem:[%s1039 + $0x68] sm:$0xff]
        %v1054 = vld [vmem:[%s1039 + $0x70] sm:$0xff]
        %v1055 = vld [vmem:[%s1039 + $0x78] sm:$0xff]
        %v1056 = vld [vmem:[%s1039 + $0x80] sm:$0xff]
        %v1057 = vld [vmem:[%s1039 + $0x88] sm:$0xff]
        %v1058 = vld [vmem:[%s1039 + $0x90] sm:$0xff]
        %v1059 = vld [vmem:[%s1039 + $0x98] sm:$0xff]
        %v1060 = vld [vmem:[%s1039 + $0xa0] sm:$0xff]
        %v1061 = vld [vmem:[%s1039 + $0xa8] sm:$0xff]
        %v1062 = vld [vmem:[%s1039 + $0xb0] sm:$0xff]
        %v1063 = vld [vmem:[%s1039 + $0xb8] sm:$0xff]
        %v1064 = vld [vmem:[%s1039 + $0xc0] sm:$0xff]
        %v1065 = vld [vmem:[%s1039 + $0xc8] sm:$0xff]
        %v1066 = vld [vmem:[%s1039 + $0xd0] sm:$0xff]
        %v1067 = vld [vmem:[%s1039 + $0xd8] sm:$0xff]
        %v1068 = vld [vmem:[%s1039 + $0xe0] sm:$0xff]
        %v1069 = vld [vmem:[%s1039 + $0xe8] sm:$0xff]
        %v1070 = vld [vmem:[%s1039 + $0xf0] sm:$0xff]
        %v1071 = vld [vmem:[%s1039 + $0xf8] sm:$0xff]
        %vm1072 = vcmask 1043456
        %v1073 = vrot.slane %v492, 4
        %v1074 = vrot.slane %v493, 4
        %v1075 = vsel %vm1072, %v1073, %v1074
        %v1076 = vrot.slane %v494, 4
        %v1077 = vsel %vm1072, %v1074, %v1076
        %v1078 = vrot.slane %v495, 4
        %v1079 = vsel %vm1072, %v1076, %v1078
        %1084 = vmatprep.subr.mxu0 %v1041
        %1085 = vmatpush1.msra.mxu0 %v1040
        %1086 = vmatprep.subr.mxu0 %v1043
        %1087 = vmatpush1.msra.mxu0 %v1042
        %1088 = vmatprep.subr.mxu0 %v1045
        %1089 = vmatpush1.msra.mxu0 %v1044
        %1090 = vmatprep.subr.mxu0 %v1047
        %1091 = vmatpush1.msra.mxu0 %v1046
        %1092 = vmatprep.subr.mxu0 %v1049
        %1093 = vmatpush1.msra.mxu0 %v1048
        %1094 = vmatprep.subr.mxu0 %v1051
        %1095 = vmatpush1.msra.mxu0 %v1050
        %1096 = vmatprep.subr.mxu0 %v1053
        %1097 = vmatpush1.msra.mxu0 %v1052
        %1098 = vmatprep.subr.mxu0 %v1055
        %1099 = vmatpush1.msra.mxu0 %v1054
        %1100 = vmatprep.subr.mxu0 %v1057
        %1101 = vmatpush1.msra.mxu0 %v1056
        %1102 = vmatprep.subr.mxu0 %v1059
        %1103 = vmatpush1.msra.mxu0 %v1058
        %1104 = vmatprep.subr.mxu0 %v1061
        %1105 = vmatpush1.msra.mxu0 %v1060
        %1106 = vmatprep.subr.mxu0 %v1063
        %1107 = vmatpush1.msra.mxu0 %v1062
        %1108 = vmatprep.subr.mxu0 %v1065
        %1109 = vmatpush1.msra.mxu0 %v1064
        %1110 = vmatprep.subr.mxu0 %v1067
        %1111 = vmatpush1.msra.mxu0 %v1066
        %1112 = vmatprep.subr.mxu0 %v1069
        %1113 = vmatpush1.msra.mxu0 %v1068
        %1114 = vmatprep.subr.mxu0 %v1071
        %1115 = vmatpush1.msra.mxu0 %v1070
        %1116 = vmatprep.subr.mxu0 0.0
        %1117 = vmatpush1.msra.mxu0 0.0
        %1118 = vmatprep.subr.mxu0 0.0
        %1119 = vmatpush1.msra.mxu0 0.0
        %1120 = vmatprep.subr.mxu0 0.0
        %1121 = vmatpush1.msra.mxu0 0.0
        %1122 = vmatprep.subr.mxu0 0.0
        %1123 = vmatpush1.msra.mxu0 0.0
        %1124 = vmatprep.subr.mxu0 0.0
        %1125 = vmatpush1.msra.mxu0 0.0
        %1126 = vmatprep.subr.mxu0 0.0
        %1127 = vmatpush1.msra.mxu0 0.0
        %1128 = vmatprep.subr.mxu0 0.0
        %1129 = vmatpush1.msra.mxu0 0.0
        %1130 = vmatprep.subr.mxu0 0.0
        %1131 = vmatpush1.msra.mxu0 0.0
        %1132 = vmatprep.subr.mxu0 0.0
        %1133 = vmatpush1.msra.mxu0 0.0
        %1134 = vmatprep.subr.mxu0 0.0
        %1135 = vmatpush1.msra.mxu0 0.0
        %1136 = vmatprep.subr.mxu0 0.0
        %1137 = vmatpush1.msra.mxu0 0.0
        %1138 = vmatprep.subr.mxu0 0.0
        %1139 = vmatpush1.msra.mxu0 0.0
        %1140 = vmatprep.subr.mxu0 0.0
        %1141 = vmatpush1.msra.mxu0 0.0
        %1142 = vmatprep.subr.mxu0 0.0
        %1143 = vmatpush1.msra.mxu0 0.0
        %1144 = vmatprep.subr.mxu0 0.0
        %1145 = vmatpush1.msra.mxu0 0.0
        %1146 = vmatprep.subr.mxu0 0.0
        %1147 = vmatpush1.msra.mxu0 0.0
        %1148 = vmatprep.mubr.f32.mxu0 0.0
        %1149 = vmatmul.mubr.f32.gmra.mrb[0].mxu0 %v1075
        %v1150 = vpop.f32.mrb[0].mxu0
        %v1151 = vadd.f32 0.0, %v1150
        %v1152 = vpop.f32.mrb[0].mxu0
        %v1153 = vadd.f32 0.0, %v1152
        %1154 = vmatprep.mubr.f32.mxu0 0.0
        %1155 = vmatmul.mubr.f32.gmra.mrb[0].mxu0 %v1077
        %v1156 = vpop.f32.mrb[0].mxu0
        %v1157 = vadd.f32 0.0, %v1156
        %v1158 = vpop.f32.mrb[0].mxu0
        %v1159 = vadd.f32 0.0, %v1158
        %1160 = vmatprep.mubr.f32.mxu0 0.0
        %1161 = vmatmul.mubr.f32.gmra.mrb[0].mxu0 %v1079
        %v1162 = vpop.f32.mrb[0].mxu0
        %v1163 = vadd.f32 0.0, %v1162
        %v1164 = vpop.f32.mrb[0].mxu0
        %v1165 = vadd.f32 0.0, %v1164
        %1166 = vmatprep.mubr.f32.mxu0 0.0
        %1167 = vmatmul.mubr.f32.gmra.mrb[0].mxu0 %v1078
        %v1168 = vpop.f32.mrb[0].mxu0
        %v1169 = vadd.f32 0.0, %v1168
        %v1170 = vpop.f32.mrb[0].mxu0
        %v1171 = vadd.f32 0.0, %v1170
        %1172 = vdwg.mxu0
        %v1173 = vadd.f32 %v1031, %v1151
        %v1174 = vadd.f32 %v1032, %v1153
        %v1175 = vadd.f32 %v1033, %v1157
        %v1176 = vadd.f32 %v1034, %v1159
        %v1177 = vadd.f32 %v1035, %v1163
        %v1178 = vadd.f32 %v1036, %v1165
        %v1179 = vadd.f32 %v1037, %v1169
        %v1180 = vadd.f32 %v1038, %v1171
        %v1181 = vld [vmem:[%s2] sm:$0x3]
        %v1183 = vlaneseq
        %v1184 = vshrl.u32 %v1183, 7
        %v1185 = vsub.s32 0, %v1184
        %v1186 = vrot.slane %v1181, %v1185
        %v1187 = vlaneseq
        %v1188 = vshrl.u32 %v1187, 7
        %v1189 = vsub.s32 1, %v1188
        %v1190 = vrot.slane %v1181, %v1189
        %v1193 = vadd.f32 %v1173, %v1186
        %v1194 = vadd.f32 %v1174, %v1190
        %v1195 = vadd.f32 %v1175, %v1186
        %v1196 = vadd.f32 %v1176, %v1190
        %v1197 = vadd.f32 %v1177, %v1186
        %v1198 = vadd.f32 %v1178, %v1190
        %v1199 = vadd.f32 %v1179, %v1186
        %v1200 = vadd.f32 %v1180, %v1190
        %v1201 = vmax.f32 %v1193, 0.0
        %v1202 = vmax.f32 %v1194, 0.0
        %v1203 = vmax.f32 %v1195, 0.0
        %v1204 = vmax.f32 %v1196, 0.0
        %v1205 = vmax.f32 %v1197, 0.0
        %v1206 = vmax.f32 %v1198, 0.0
        %v1207 = vmax.f32 %v1199, 0.0
        %v1208 = vmax.f32 %v1200, 0.0
        %1217 = vrot.lane.b32.xlu0 %v1201, 120
        %v1218 = vpop.permute.xlu0 %1217
        %1219 = vrot.lane.b32.xlu0 %v1202, 120
        %v1220 = vpop.permute.xlu0 %1219
        %1221 = vrot.lane.b32.xlu0 %v1203, 120
        %v1222 = vpop.permute.xlu0 %1221
        %1223 = vrot.lane.b32.xlu0 %v1204, 120
        %v1224 = vpop.permute.xlu0 %1223
        %1225 = vrot.lane.b32.xlu0 %v1205, 120
        %v1226 = vpop.permute.xlu0 %1225
        %1227 = vrot.lane.b32.xlu0 %v1206, 120
        %v1228 = vpop.permute.xlu0 %1227
        %1229 = vrot.lane.b32.xlu0 %v1207, 120
        %v1230 = vpop.permute.xlu0 %1229
        %1231 = vrot.lane.b32.xlu0 %v1208, 120
        %v1232 = vpop.permute.xlu0 %1231
        %vm1233 = vcmask 982016
        %v1234 = vsel %vm1233, %v1218, %v1220
        %v1235 = vsel %vm1233, %v1222, %v1224
        %v1236 = vsel %vm1233, %v1226, %v1228
        %v1237 = vsel %vm1233, %v1230, %v1232
        %v1246 = vmax.f32 %v1201, %v1234
        %v1247 = vmax.f32 %v1202, %v1220
        %v1248 = vmax.f32 %v1203, %v1235
        %v1249 = vmax.f32 %v1204, %v1224
        %v1250 = vmax.f32 %v1205, %v1236
        %v1251 = vmax.f32 %v1206, %v1228
        %v1252 = vmax.f32 %v1207, %v1237
        %v1253 = vmax.f32 %v1208, %v1232
        %v1254 = vld [vmem:[%s3] sm:$0xff]
        %v1255 = vld [vmem:[%s3 + $0x8] sm:$0xff]
        %v1256 = vld [vmem:[%s3 + $0x10] sm:$0xff]
        %v1257 = vld [vmem:[%s3 + $0x18] sm:$0xff]
        %v1258 = vld [vmem:[%s3 + $0x20] sm:$0xff]
        %v1259 = vld [vmem:[%s3 + $0x28] sm:$0xff]
        %v1260 = vld [vmem:[%s3 + $0x30] sm:$0xff]
        %v1261 = vld [vmem:[%s3 + $0x38] sm:$0xff]
        %v1262 = vld [vmem:[%s3 + $0x40] sm:$0xff]
        %v1263 = vld [vmem:[%s3 + $0x48] sm:$0xff]
        %v1264 = vld [vmem:[%s3 + $0x50] sm:$0xff]
        %v1265 = vld [vmem:[%s3 + $0x58] sm:$0xff]
        %v1266 = vld [vmem:[%s3 + $0x60] sm:$0xff]
        %v1267 = vld [vmem:[%s3 + $0x68] sm:$0xff]
        %v1268 = vld [vmem:[%s3 + $0x70] sm:$0xff]
        %v1269 = vld [vmem:[%s3 + $0x78] sm:$0xff]
        %v1270 = vld [vmem:[%s3 + $0x80] sm:$0xff]
        %v1271 = vld [vmem:[%s3 + $0x88] sm:$0xff]
        %v1272 = vld [vmem:[%s3 + $0x90] sm:$0xff]
        %v1273 = vld [vmem:[%s3 + $0x98] sm:$0xff]
        %v1274 = vld [vmem:[%s3 + $0xa0] sm:$0xff]
        %v1275 = vld [vmem:[%s3 + $0xa8] sm:$0xff]
        %v1276 = vld [vmem:[%s3 + $0xb0] sm:$0xff]
        %v1277 = vld [vmem:[%s3 + $0xb8] sm:$0xff]
        %v1278 = vld [vmem:[%s3 + $0xc0] sm:$0xff]
        %v1279 = vld [vmem:[%s3 + $0xc8] sm:$0xff]
        %v1280 = vld [vmem:[%s3 + $0xd0] sm:$0xff]
        %vm1281 = vcmask 719872
        %v1283 = vsel %vm1281, %v1247, 0
        %v1286 = vsel %vm1281, %v1249, 0
        %v1289 = vsel %vm1281, %v1251, 0
        %v1292 = vsel %vm1281, %v1253, 0
        %1294 = vmatprep.subr.mxu0 0.0
        %1295 = vmatpush1.msra.mxu0 %v1254
        %1296 = vmatprep.subr.mxu0 0.0
        %1297 = vmatpush1.msra.mxu0 %v1255
        %1298 = vmatprep.subr.mxu0 0.0
        %1299 = vmatpush1.msra.mxu0 %v1256
        %1300 = vmatprep.subr.mxu0 0.0
        %1301 = vmatpush1.msra.mxu0 %v1257
        %1302 = vmatprep.subr.mxu0 0.0
        %1303 = vmatpush1.msra.mxu0 %v1258
        %1304 = vmatprep.subr.mxu0 0.0
        %1305 = vmatpush1.msra.mxu0 %v1259
        %1306 = vmatprep.subr.mxu0 0.0
        %1307 = vmatpush1.msra.mxu0 %v1260
        %1308 = vmatprep.subr.mxu0 0.0
        %1309 = vmatpush1.msra.mxu0 %v1261
        %1310 = vmatprep.subr.mxu0 0.0
        %1311 = vmatpush1.msra.mxu0 %v1262
        %1312 = vmatprep.subr.mxu0 0.0
        %1313 = vmatpush1.msra.mxu0 %v1263
        %1314 = vmatprep.subr.mxu0 0.0
        %1315 = vmatpush1.msra.mxu0 %v1264
        %1316 = vmatprep.subr.mxu0 0.0
        %1317 = vmatpush1.msra.mxu0 %v1265
        %1318 = vmatprep.subr.mxu0 0.0
        %1319 = vmatpush1.msra.mxu0 %v1266
        %1320 = vmatprep.subr.mxu0 0.0
        %1321 = vmatpush1.msra.mxu0 %v1267
        %1322 = vmatprep.subr.mxu0 0.0
        %1323 = vmatpush1.msra.mxu0 %v1268
        %1324 = vmatprep.subr.mxu0 0.0
        %1325 = vmatpush1.msra.mxu0 %v1269
        %1326 = vmatprep.subr.mxu0 0.0
        %1327 = vmatpush1.msra.mxu0 %v1270
        %1328 = vmatprep.subr.mxu0 0.0
        %1329 = vmatpush1.msra.mxu0 %v1271
        %1330 = vmatprep.subr.mxu0 0.0
        %1331 = vmatpush1.msra.mxu0 %v1272
        %1332 = vmatprep.subr.mxu0 0.0
        %1333 = vmatpush1.msra.mxu0 %v1273
        %1334 = vmatprep.subr.mxu0 0.0
        %1335 = vmatpush1.msra.mxu0 %v1274
        %1336 = vmatprep.subr.mxu0 0.0
        %1337 = vmatpush1.msra.mxu0 %v1275
        %1338 = vmatprep.subr.mxu0 0.0
        %1339 = vmatpush1.msra.mxu0 %v1276
        %1340 = vmatprep.subr.mxu0 0.0
        %1341 = vmatpush1.msra.mxu0 %v1277
        %1342 = vmatprep.subr.mxu0 0.0
        %1343 = vmatpush1.msra.mxu0 %v1278
        %1344 = vmatprep.subr.mxu0 0.0
        %1345 = vmatpush1.msra.mxu0 %v1279
        %1346 = vmatprep.subr.mxu0 0.0
        %1347 = vmatpush1.msra.mxu0 %v1280
        %1348 = vmatprep.subr.mxu0 0.0
        %1349 = vmatpush1.msra.mxu0 0.0
        %1350 = vmatprep.subr.mxu0 0.0
        %1351 = vmatpush1.msra.mxu0 0.0
        %1352 = vmatprep.subr.mxu0 0.0
        %1353 = vmatpush1.msra.mxu0 0.0
        %1354 = vmatprep.subr.mxu0 0.0
        %1355 = vmatpush1.msra.mxu0 0.0
        %1356 = vmatprep.subr.mxu0 0.0
        %1357 = vmatpush1.msra.mxu0 0.0
        %1358 = vmatprep.mubr.f32.mxu0 %v1283
        %1359 = vmatmul.mubr.f32.gmra.mrb[0].mxu0 %v1246
        %v1360 = vpop.f32.mrb[0].mxu0
        %v1361 = vadd.f32 0.0, %v1360
        %v1362 = vpop.f32.mrb[0].mxu0
        %1363 = vmatprep.mubr.f32.mxu0 %v1286
        %1364 = vmatmul.mubr.f32.gmra.mrb[0].mxu0 %v1248
        %v1365 = vpop.f32.mrb[0].mxu0
        %v1366 = vadd.f32 0.0, %v1365
        %v1367 = vpop.f32.mrb[0].mxu0
        %1368 = vmatprep.mubr.f32.mxu0 %v1289
        %1369 = vmatmul.mubr.f32.gmra.mrb[0].mxu0 %v1250
        %v1370 = vpop.f32.mrb[0].mxu0
        %v1371 = vadd.f32 0.0, %v1370
        %v1372 = vpop.f32.mrb[0].mxu0
        %1373 = vmatprep.mubr.f32.mxu0 %v1292
        %1374 = vmatmul.mubr.f32.gmra.mrb[0].mxu0 %v1252
        %v1375 = vpop.f32.mrb[0].mxu0
        %v1376 = vadd.f32 0.0, %v1375
        %v1377 = vpop.f32.mrb[0].mxu0
        %1378 = vdwg.mxu0
        %v1383 = vrot.slane %v1361, 1
        %v1384 = vrot.slane %v1366, 1
        %v1385 = vsel %vm565, %v1383, %v1384
        %v1386 = vrot.slane %v1371, 1
        %v1387 = vsel %vm565, %v1384, %v1386
        %v1388 = vrot.slane %v1376, 1
        %v1389 = vsel %vm565, %v1386, %v1388
        %v1394 = vmax.f32 %v1361, %v1385
        %v1395 = vmax.f32 %v1366, %v1387
        %v1396 = vmax.f32 %v1371, %v1389
        %v1397 = vmax.f32 %v1376, %v1388
        %v1398 = vld [vmem:[%s4] sm:$0xff]
        %v1399 = vld [vmem:[%s4 + $0x8] sm:$0x3f]
        %vm1400 = vcmask 220160
        %v1402 = vsel %vm1400, %v1398, 0
        %v1405 = vsel %vm1400, %v1399, 0
        %vm1407 = vcmask 1042432
        %v1409 = vsel %vm1407, %v1397, 0
        %1411 = vmatprep.subr.mxu0 0.0
        %1412 = vmatpush1.msra.mxu0 %v1394
        %1413 = vmatprep.subr.mxu0 0.0
        %1414 = vmatpush1.msra.mxu0 %v1395
        %1415 = vmatprep.subr.mxu0 0.0
        %1416 = vmatpush1.msra.mxu0 %v1396
        %1417 = vmatprep.subr.mxu0 0.0
        %1418 = vmatpush1.msra.mxu0 %v1409
        %1419 = vmatprep.subr.mxu0 0.0
        %1420 = vmatpush1.msra.mxu0 0.0
        %1421 = vmatprep.subr.mxu0 0.0
        %1422 = vmatpush1.msra.mxu0 0.0
        %1423 = vmatprep.subr.mxu0 0.0
        %1424 = vmatpush1.msra.mxu0 0.0
        %1425 = vmatprep.subr.mxu0 0.0
        %1426 = vmatpush1.msra.mxu0 0.0
        %1427 = vmatprep.subr.mxu0 0.0
        %1428 = vmatpush1.msra.mxu0 0.0
        %1429 = vmatprep.subr.mxu0 0.0
        %1430 = vmatpush1.msra.mxu0 0.0
        %1431 = vmatprep.subr.mxu0 0.0
        %1432 = vmatpush1.msra.mxu0 0.0
        %1433 = vmatprep.subr.mxu0 0.0
        %1434 = vmatpush1.msra.mxu0 0.0
        %1435 = vmatprep.subr.mxu0 0.0
        %1436 = vmatpush1.msra.mxu0 0.0
        %1437 = vmatprep.subr.mxu0 0.0
        %1438 = vmatpush1.msra.mxu0 0.0
        %1439 = vmatprep.subr.mxu0 0.0
        %1440 = vmatpush1.msra.mxu0 0.0
        %1441 = vmatprep.subr.mxu0 0.0
        %1442 = vmatpush1.msra.mxu0 0.0
        %1443 = vmatprep.subr.mxu0 0.0
        %1444 = vmatpush1.msra.mxu0 0.0
        %1445 = vmatprep.subr.mxu0 0.0
        %1446 = vmatpush1.msra.mxu0 0.0
        %1447 = vmatprep.subr.mxu0 0.0
        %1448 = vmatpush1.msra.mxu0 0.0
        %1449 = vmatprep.subr.mxu0 0.0
        %1450 = vmatpush1.msra.mxu0 0.0
        %1451 = vmatprep.subr.mxu0 0.0
        %1452 = vmatpush1.msra.mxu0 0.0
        %1453 = vmatprep.subr.mxu0 0.0
        %1454 = vmatpush1.msra.mxu0 0.0
        %1455 = vmatprep.subr.mxu0 0.0
        %1456 = vmatpush1.msra.mxu0 0.0
        %1457 = vmatprep.subr.mxu0 0.0
        %1458 = vmatpush1.msra.mxu0 0.0
        %1459 = vmatprep.subr.mxu0 0.0
        %1460 = vmatpush1.msra.mxu0 0.0
        %1461 = vmatprep.subr.mxu0 0.0
        %1462 = vmatpush1.msra.mxu0 0.0
        %1463 = vmatprep.subr.mxu0 0.0
        %1464 = vmatpush1.msra.mxu0 0.0
        %1465 = vmatprep.subr.mxu0 0.0
        %1466 = vmatpush1.msra.mxu0 0.0
        %1467 = vmatprep.subr.mxu0 0.0
        %1468 = vmatpush1.msra.mxu0 0.0
        %1469 = vmatprep.subr.mxu0 0.0
        %1470 = vmatpush1.msra.mxu0 0.0
        %1471 = vmatprep.subr.mxu0 0.0
        %1472 = vmatpush1.msra.mxu0 0.0
        %1473 = vmatprep.subr.mxu0 0.0
        %1474 = vmatpush1.msra.mxu0 0.0
        %1475 = vmatprep.mubr.f32.mxu0 0.0
        %1476 = vmatmul.mubr.f32.gmra.mrb[0].mxu0 %v1402
        %v1477 = vpop.f32.mrb[0].mxu0
        %v1478 = vadd.f32 0.0, %v1477
        %v1479 = vpop.f32.mrb[0].mxu0
        %1480 = vmatprep.mubr.f32.mxu0 0.0
        %1481 = vmatmul.mubr.f32.gmra.mrb[0].mxu0 %v1405
        %v1482 = vpop.f32.mrb[0].mxu0
        %v1483 = vadd.f32 0.0, %v1482
        %v1484 = vpop.f32.mrb[0].mxu0
        %1485 = vdwg.mxu0
        %v1486 = vld [vmem:[%s5] sm:$0xff]
        %v1487 = vld [vmem:[%s5 + $0x8] sm:$0xff]
        %v1488 = vld [vmem:[%s5 + $0x10] sm:$0xff]
        %v1489 = vld [vmem:[%s5 + $0x18] sm:$0xff]
        %v1490 = vld [vmem:[%s5 + $0x20] sm:$0xff]
        %v1491 = vld [vmem:[%s5 + $0x28] sm:$0xff]
        %v1492 = vld [vmem:[%s5 + $0x30] sm:$0xff]
        %v1493 = vld [vmem:[%s5 + $0x38] sm:$0xff]
        %v1494 = vld [vmem:[%s5 + $0x40] sm:$0xff]
        %v1495 = vld [vmem:[%s5 + $0x48] sm:$0xff]
        %v1496 = vld [vmem:[%s5 + $0x50] sm:$0xff]
        %v1497 = vld [vmem:[%s5 + $0x58] sm:$0xff]
        %v1498 = vld [vmem:[%s5 + $0x60] sm:$0xff]
        %v1499 = vld [vmem:[%s5 + $0x68] sm:$0xff]
        %v1500 = vld [vmem:[%s5 + $0x70] sm:$0xff]
        %v1501 = vld [vmem:[%s5 + $0x78] sm:$0xff]
        %v1502 = vld [vmem:[%s5 + $0x80] sm:$0xff]
        %v1503 = vld [vmem:[%s5 + $0x88] sm:$0xff]
        %v1504 = vld [vmem:[%s5 + $0x90] sm:$0xff]
        %v1505 = vld [vmem:[%s5 + $0x98] sm:$0xff]
        %v1506 = vld [vmem:[%s5 + $0xa0] sm:$0xff]
        %v1507 = vld [vmem:[%s5 + $0xa8] sm:$0xff]
        %v1508 = vld [vmem:[%s5 + $0xb0] sm:$0xff]
        %v1509 = vld [vmem:[%s5 + $0xb8] sm:$0xff]
        %v1510 = vld [vmem:[%s5 + $0xc0] sm:$0xff]
        %v1511 = vld [vmem:[%s5 + $0xc8] sm:$0xff]
        %v1512 = vld [vmem:[%s5 + $0xd0] sm:$0xff]
        %v1513 = vld [vmem:[%s5 + $0xd8] sm:$0xff]
        %s1514 = scalar_lea.vmem %s5, 224
        %v1515 = vld [vmem:[%s1514] sm:$0xff]
        %v1516 = vld [vmem:[%s1514 + $0x8] sm:$0xff]
        %v1517 = vld [vmem:[%s1514 + $0x10] sm:$0xff]
        %v1518 = vld [vmem:[%s1514 + $0x18] sm:$0xff]
        %v1519 = vld [vmem:[%s1514 + $0x20] sm:$0xff]
        %v1520 = vld [vmem:[%s1514 + $0x28] sm:$0xff]
        %v1521 = vld [vmem:[%s1514 + $0x30] sm:$0xff]
        %v1522 = vld [vmem:[%s1514 + $0x38] sm:$0xff]
        %v1523 = vld [vmem:[%s1514 + $0x40] sm:$0xff]
        %v1524 = vld [vmem:[%s1514 + $0x48] sm:$0xff]
        %v1525 = vld [vmem:[%s1514 + $0x50] sm:$0xff]
        %v1526 = vld [vmem:[%s1514 + $0x58] sm:$0xff]
        %v1527 = vld [vmem:[%s1514 + $0x60] sm:$0xff]
        %v1528 = vld [vmem:[%s1514 + $0x68] sm:$0xff]
        %v1529 = vld [vmem:[%s1514 + $0x70] sm:$0xff]
        %v1530 = vld [vmem:[%s1514 + $0x78] sm:$0xff]
        %v1531 = vld [vmem:[%s1514 + $0x80] sm:$0xff]
        %v1532 = vld [vmem:[%s1514 + $0x88] sm:$0xff]
        %v1533 = vld [vmem:[%s1514 + $0x90] sm:$0xff]
        %v1534 = vld [vmem:[%s1514 + $0x98] sm:$0xff]
        %v1535 = vld [vmem:[%s1514 + $0xa0] sm:$0xff]
        %v1536 = vld [vmem:[%s1514 + $0xa8] sm:$0xff]
        %v1537 = vld [vmem:[%s1514 + $0xb0] sm:$0xff]
        %v1538 = vld [vmem:[%s1514 + $0xb8] sm:$0xff]
        %v1539 = vld [vmem:[%s1514 + $0xc0] sm:$0xff]
        %v1540 = vld [vmem:[%s1514 + $0xc8] sm:$0xff]
        %v1541 = vld [vmem:[%s1514 + $0xd0] sm:$0xff]
        %v1542 = vld [vmem:[%s1514 + $0xd8] sm:$0xff]
        %v1545 = vrot.slane %v1478, 1
        %v1546 = vrot.slane %v1483, 1
        %v1547 = vsel %vm565, %v1545, %v1546
        %vm1548 = vcmask 916480
        %v1549 = vsel %vm1548, %v1547, 0
        %v1551 = vsel %vm1548, %v1546, 0
        %1553 = vmatprep.subr.mxu0 %v1516
        %1554 = vmatpush1.msra.mxu0 %v1515
        %1555 = vmatprep.subr.mxu0 %v1518
        %1556 = vmatpush1.msra.mxu0 %v1517
        %1557 = vmatprep.subr.mxu0 %v1520
        %1558 = vmatpush1.msra.mxu0 %v1519
        %1559 = vmatprep.subr.mxu0 %v1522
        %1560 = vmatpush1.msra.mxu0 %v1521
        %1561 = vmatprep.subr.mxu0 %v1524
        %1562 = vmatpush1.msra.mxu0 %v1523
        %1563 = vmatprep.subr.mxu0 %v1526
        %1564 = vmatpush1.msra.mxu0 %v1525
        %1565 = vmatprep.subr.mxu0 %v1528
        %1566 = vmatpush1.msra.mxu0 %v1527
        %1567 = vmatprep.subr.mxu0 %v1530
        %1568 = vmatpush1.msra.mxu0 %v1529
        %1569 = vmatprep.subr.mxu0 %v1532
        %1570 = vmatpush1.msra.mxu0 %v1531
        %1571 = vmatprep.subr.mxu0 %v1534
        %1572 = vmatpush1.msra.mxu0 %v1533
        %1573 = vmatprep.subr.mxu0 %v1536
        %1574 = vmatpush1.msra.mxu0 %v1535
        %1575 = vmatprep.subr.mxu0 %v1538
        %1576 = vmatpush1.msra.mxu0 %v1537
        %1577 = vmatprep.subr.mxu0 %v1540
        %1578 = vmatpush1.msra.mxu0 %v1539
        %1579 = vmatprep.subr.mxu0 %v1542
        %1580 = vmatpush1.msra.mxu0 %v1541
        %1581 = vmatprep.subr.mxu0 0.0
        %1582 = vmatpush1.msra.mxu0 0.0
        %1583 = vmatprep.subr.mxu0 0.0
        %1584 = vmatpush1.msra.mxu0 0.0
        %1585 = vmatprep.subr.mxu0 0.0
        %1586 = vmatpush1.msra.mxu0 0.0
        %1587 = vmatprep.subr.mxu0 0.0
        %1588 = vmatpush1.msra.mxu0 0.0
        %1589 = vmatprep.subr.mxu0 0.0
        %1590 = vmatpush1.msra.mxu0 0.0
        %1591 = vmatprep.subr.mxu0 0.0
        %1592 = vmatpush1.msra.mxu0 0.0
        %1593 = vmatprep.subr.mxu0 0.0
        %1594 = vmatpush1.msra.mxu0 0.0
        %1595 = vmatprep.subr.mxu0 0.0
        %1596 = vmatpush1.msra.mxu0 0.0
        %1597 = vmatprep.subr.mxu0 0.0
        %1598 = vmatpush1.msra.mxu0 0.0
        %1599 = vmatprep.subr.mxu0 0.0
        %1600 = vmatpush1.msra.mxu0 0.0
        %1601 = vmatprep.subr.mxu0 0.0
        %1602 = vmatpush1.msra.mxu0 0.0
        %1603 = vmatprep.subr.mxu0 0.0
        %1604 = vmatpush1.msra.mxu0 0.0
        %1605 = vmatprep.subr.mxu0 0.0
        %1606 = vmatpush1.msra.mxu0 0.0
        %1607 = vmatprep.subr.mxu0 0.0
        %1608 = vmatpush1.msra.mxu0 0.0
        %1609 = vmatprep.subr.mxu0 0.0
        %1610 = vmatpush1.msra.mxu0 0.0
        %1611 = vmatprep.subr.mxu0 0.0
        %1612 = vmatpush1.msra.mxu0 0.0
        %1613 = vmatprep.subr.mxu0 0.0
        %1614 = vmatpush1.msra.mxu0 0.0
        %1615 = vmatprep.subr.mxu0 0.0
        %1616 = vmatpush1.msra.mxu0 0.0
        %1617 = vmatprep.mubr.f32.mxu0 0.0
        %1618 = vmatmul.mubr.f32.gmra.mrb[0].mxu0 %v1549
        %v1619 = vpop.f32.mrb[0].mxu0
        %v1620 = vadd.f32 0.0, %v1619
        %v1621 = vpop.f32.mrb[0].mxu0
        %v1622 = vadd.f32 0.0, %v1621
        %1623 = vmatprep.mubr.f32.mxu0 0.0
        %1624 = vmatmul.mubr.f32.gmra.mrb[0].mxu0 %v1551
        %v1625 = vpop.f32.mrb[0].mxu0
        %v1626 = vadd.f32 0.0, %v1625
        %v1627 = vpop.f32.mrb[0].mxu0
        %v1628 = vadd.f32 0.0, %v1627
        %1629 = vdwg.mxu0
        %v1630 = vsel %vm1548, %v1478, 0
        %v1632 = vsel %vm1548, %v1483, 0
        %1634 = vmatprep.subr.mxu0 %v1487
        %1635 = vmatpush1.msra.mxu0 %v1486
        %1636 = vmatprep.subr.mxu0 %v1489
        %1637 = vmatpush1.msra.mxu0 %v1488
        %1638 = vmatprep.subr.mxu0 %v1491
        %1639 = vmatpush1.msra.mxu0 %v1490
        %1640 = vmatprep.subr.mxu0 %v1493
        %1641 = vmatpush1.msra.mxu0 %v1492
        %1642 = vmatprep.subr.mxu0 %v1495
        %1643 = vmatpush1.msra.mxu0 %v1494
        %1644 = vmatprep.subr.mxu0 %v1497
        %1645 = vmatpush1.msra.mxu0 %v1496
        %1646 = vmatprep.subr.mxu0 %v1499
        %1647 = vmatpush1.msra.mxu0 %v1498
        %1648 = vmatprep.subr.mxu0 %v1501
        %1649 = vmatpush1.msra.mxu0 %v1500
        %1650 = vmatprep.subr.mxu0 %v1503
        %1651 = vmatpush1.msra.mxu0 %v1502
        %1652 = vmatprep.subr.mxu0 %v1505
        %1653 = vmatpush1.msra.mxu0 %v1504
        %1654 = vmatprep.subr.mxu0 %v1507
        %1655 = vmatpush1.msra.mxu0 %v1506
        %1656 = vmatprep.subr.mxu0 %v1509
        %1657 = vmatpush1.msra.mxu0 %v1508
        %1658 = vmatprep.subr.mxu0 %v1511
        %1659 = vmatpush1.msra.mxu0 %v1510
        %1660 = vmatprep.subr.mxu0 %v1513
        %1661 = vmatpush1.msra.mxu0 %v1512
        %1662 = vmatprep.subr.mxu0 0.0
        %1663 = vmatpush1.msra.mxu0 0.0
        %1664 = vmatprep.subr.mxu0 0.0
        %1665 = vmatpush1.msra.mxu0 0.0
        %1666 = vmatprep.subr.mxu0 0.0
        %1667 = vmatpush1.msra.mxu0 0.0
        %1668 = vmatprep.subr.mxu0 0.0
        %1669 = vmatpush1.msra.mxu0 0.0
        %1670 = vmatprep.subr.mxu0 0.0
        %1671 = vmatpush1.msra.mxu0 0.0
        %1672 = vmatprep.subr.mxu0 0.0
        %1673 = vmatpush1.msra.mxu0 0.0
        %1674 = vmatprep.subr.mxu0 0.0
        %1675 = vmatpush1.msra.mxu0 0.0
        %1676 = vmatprep.subr.mxu0 0.0
        %1677 = vmatpush1.msra.mxu0 0.0
        %1678 = vmatprep.subr.mxu0 0.0
        %1679 = vmatpush1.msra.mxu0 0.0
        %1680 = vmatprep.subr.mxu0 0.0
        %1681 = vmatpush1.msra.mxu0 0.0
        %1682 = vmatprep.subr.mxu0 0.0
        %1683 = vmatpush1.msra.mxu0 0.0
        %1684 = vmatprep.subr.mxu0 0.0
        %1685 = vmatpush1.msra.mxu0 0.0
        %1686 = vmatprep.subr.mxu0 0.0
        %1687 = vmatpush1.msra.mxu0 0.0
        %1688 = vmatprep.subr.mxu0 0.0
        %1689 = vmatpush1.msra.mxu0 0.0
        %1690 = vmatprep.subr.mxu0 0.0
        %1691 = vmatpush1.msra.mxu0 0.0
        %1692 = vmatprep.subr.mxu0 0.0
        %1693 = vmatpush1.msra.mxu0 0.0
        %1694 = vmatprep.subr.mxu0 0.0
        %1695 = vmatpush1.msra.mxu0 0.0
        %1696 = vmatprep.subr.mxu0 0.0
        %1697 = vmatpush1.msra.mxu0 0.0
        %1698 = vmatprep.mubr.f32.mxu0 0.0
        %1699 = vmatmul.mubr.f32.gmra.mrb[0].mxu0 %v1630
        %v1700 = vpop.f32.mrb[0].mxu0
        %v1701 = vadd.f32 %v1620, %v1700
        %v1702 = vpop.f32.mrb[0].mxu0
        %v1703 = vadd.f32 %v1622, %v1702
        %1704 = vmatprep.mubr.f32.mxu0 0.0
        %1705 = vmatmul.mubr.f32.gmra.mrb[0].mxu0 %v1632
        %v1706 = vpop.f32.mrb[0].mxu0
        %v1707 = vadd.f32 %v1626, %v1706
        %v1708 = vpop.f32.mrb[0].mxu0
        %v1709 = vadd.f32 %v1628, %v1708
        %1710 = vdwg.mxu0
        %s1711 = scalar_lea.vmem %s5, 448
        %v1712 = vld [vmem:[%s1711] sm:$0xff]
        %v1713 = vld [vmem:[%s1711 + $0x8] sm:$0xff]
        %v1714 = vld [vmem:[%s1711 + $0x10] sm:$0xff]
        %v1715 = vld [vmem:[%s1711 + $0x18] sm:$0xff]
        %v1716 = vld [vmem:[%s1711 + $0x20] sm:$0xff]
        %v1717 = vld [vmem:[%s1711 + $0x28] sm:$0xff]
        %v1718 = vld [vmem:[%s1711 + $0x30] sm:$0xff]
        %v1719 = vld [vmem:[%s1711 + $0x38] sm:$0xff]
        %v1720 = vld [vmem:[%s1711 + $0x40] sm:$0xff]
        %v1721 = vld [vmem:[%s1711 + $0x48] sm:$0xff]
        %v1722 = vld [vmem:[%s1711 + $0x50] sm:$0xff]
        %v1723 = vld [vmem:[%s1711 + $0x58] sm:$0xff]
        %v1724 = vld [vmem:[%s1711 + $0x60] sm:$0xff]
        %v1725 = vld [vmem:[%s1711 + $0x68] sm:$0xff]
        %v1726 = vld [vmem:[%s1711 + $0x70] sm:$0xff]
        %v1727 = vld [vmem:[%s1711 + $0x78] sm:$0xff]
        %v1728 = vld [vmem:[%s1711 + $0x80] sm:$0xff]
        %v1729 = vld [vmem:[%s1711 + $0x88] sm:$0xff]
        %v1730 = vld [vmem:[%s1711 + $0x90] sm:$0xff]
        %v1731 = vld [vmem:[%s1711 + $0x98] sm:$0xff]
        %v1732 = vld [vmem:[%s1711 + $0xa0] sm:$0xff]
        %v1733 = vld [vmem:[%s1711 + $0xa8] sm:$0xff]
        %v1734 = vld [vmem:[%s1711 + $0xb0] sm:$0xff]
        %v1735 = vld [vmem:[%s1711 + $0xb8] sm:$0xff]
        %v1736 = vld [vmem:[%s1711 + $0xc0] sm:$0xff]
        %v1737 = vld [vmem:[%s1711 + $0xc8] sm:$0xff]
        %v1738 = vld [vmem:[%s1711 + $0xd0] sm:$0xff]
        %v1739 = vld [vmem:[%s1711 + $0xd8] sm:$0xff]
        %v1740 = vrot.slane %v1478, 2
        %v1741 = vrot.slane %v1483, 2
        %v1742 = vsel %vm788, %v1740, %v1741
        %v1743 = vsel %vm1548, %v1742, 0
        %v1745 = vsel %vm1548, %v1741, 0
        %1747 = vmatprep.subr.mxu0 %v1713
        %1748 = vmatpush1.msra.mxu0 %v1712
        %1749 = vmatprep.subr.mxu0 %v1715
        %1750 = vmatpush1.msra.mxu0 %v1714
        %1751 = vmatprep.subr.mxu0 %v1717
        %1752 = vmatpush1.msra.mxu0 %v1716
        %1753 = vmatprep.subr.mxu0 %v1719
        %1754 = vmatpush1.msra.mxu0 %v1718
        %1755 = vmatprep.subr.mxu0 %v1721
        %1756 = vmatpush1.msra.mxu0 %v1720
        %1757 = vmatprep.subr.mxu0 %v1723
        %1758 = vmatpush1.msra.mxu0 %v1722
        %1759 = vmatprep.subr.mxu0 %v1725
        %1760 = vmatpush1.msra.mxu0 %v1724
        %1761 = vmatprep.subr.mxu0 %v1727
        %1762 = vmatpush1.msra.mxu0 %v1726
        %1763 = vmatprep.subr.mxu0 %v1729
        %1764 = vmatpush1.msra.mxu0 %v1728
        %1765 = vmatprep.subr.mxu0 %v1731
        %1766 = vmatpush1.msra.mxu0 %v1730
        %1767 = vmatprep.subr.mxu0 %v1733
        %1768 = vmatpush1.msra.mxu0 %v1732
        %1769 = vmatprep.subr.mxu0 %v1735
        %1770 = vmatpush1.msra.mxu0 %v1734
        %1771 = vmatprep.subr.mxu0 %v1737
        %1772 = vmatpush1.msra.mxu0 %v1736
        %1773 = vmatprep.subr.mxu0 %v1739
        %1774 = vmatpush1.msra.mxu0 %v1738
        %1775 = vmatprep.subr.mxu0 0.0
        %1776 = vmatpush1.msra.mxu0 0.0
        %1777 = vmatprep.subr.mxu0 0.0
        %1778 = vmatpush1.msra.mxu0 0.0
        %1779 = vmatprep.subr.mxu0 0.0
        %1780 = vmatpush1.msra.mxu0 0.0
        %1781 = vmatprep.subr.mxu0 0.0
        %1782 = vmatpush1.msra.mxu0 0.0
        %1783 = vmatprep.subr.mxu0 0.0
        %1784 = vmatpush1.msra.mxu0 0.0
        %1785 = vmatprep.subr.mxu0 0.0
        %1786 = vmatpush1.msra.mxu0 0.0
        %1787 = vmatprep.subr.mxu0 0.0
        %1788 = vmatpush1.msra.mxu0 0.0
        %1789 = vmatprep.subr.mxu0 0.0
        %1790 = vmatpush1.msra.mxu0 0.0
        %1791 = vmatprep.subr.mxu0 0.0
        %1792 = vmatpush1.msra.mxu0 0.0
        %1793 = vmatprep.subr.mxu0 0.0
        %1794 = vmatpush1.msra.mxu0 0.0
        %1795 = vmatprep.subr.mxu0 0.0
        %1796 = vmatpush1.msra.mxu0 0.0
        %1797 = vmatprep.subr.mxu0 0.0
        %1798 = vmatpush1.msra.mxu0 0.0
        %1799 = vmatprep.subr.mxu0 0.0
        %1800 = vmatpush1.msra.mxu0 0.0
        %1801 = vmatprep.subr.mxu0 0.0
        %1802 = vmatpush1.msra.mxu0 0.0
        %1803 = vmatprep.subr.mxu0 0.0
        %1804 = vmatpush1.msra.mxu0 0.0
        %1805 = vmatprep.subr.mxu0 0.0
        %1806 = vmatpush1.msra.mxu0 0.0
        %1807 = vmatprep.subr.mxu0 0.0
        %1808 = vmatpush1.msra.mxu0 0.0
        %1809 = vmatprep.subr.mxu0 0.0
        %1810 = vmatpush1.msra.mxu0 0.0
        %1811 = vmatprep.mubr.f32.mxu0 0.0
        %1812 = vmatmul.mubr.f32.gmra.mrb[0].mxu0 %v1743
        %v1813 = vpop.f32.mrb[0].mxu0
        %v1814 = vadd.f32 0.0, %v1813
        %v1815 = vpop.f32.mrb[0].mxu0
        %v1816 = vadd.f32 0.0, %v1815
        %1817 = vmatprep.mubr.f32.mxu0 0.0
        %1818 = vmatmul.mubr.f32.gmra.mrb[0].mxu0 %v1745
        %v1819 = vpop.f32.mrb[0].mxu0
        %v1820 = vadd.f32 0.0, %v1819
        %v1821 = vpop.f32.mrb[0].mxu0
        %v1822 = vadd.f32 0.0, %v1821
        %1823 = vdwg.mxu0
        %v1824 = vadd.f32 %v1701, %v1814
        %v1825 = vadd.f32 %v1703, %v1816
        %v1826 = vadd.f32 %v1707, %v1820
        %v1827 = vadd.f32 %v1709, %v1822
        %s1828 = scalar_lea.vmem %s5, 672
        %v1829 = vld [vmem:[%s1828] sm:$0xff]
        %v1830 = vld [vmem:[%s1828 + $0x8] sm:$0xff]
        %v1831 = vld [vmem:[%s1828 + $0x10] sm:$0xff]
        %v1832 = vld [vmem:[%s1828 + $0x18] sm:$0xff]
        %v1833 = vld [vmem:[%s1828 + $0x20] sm:$0xff]
        %v1834 = vld [vmem:[%s1828 + $0x28] sm:$0xff]
        %v1835 = vld [vmem:[%s1828 + $0x30] sm:$0xff]
        %v1836 = vld [vmem:[%s1828 + $0x38] sm:$0xff]
        %v1837 = vld [vmem:[%s1828 + $0x40] sm:$0xff]
        %v1838 = vld [vmem:[%s1828 + $0x48] sm:$0xff]
        %v1839 = vld [vmem:[%s1828 + $0x50] sm:$0xff]
        %v1840 = vld [vmem:[%s1828 + $0x58] sm:$0xff]
        %v1841 = vld [vmem:[%s1828 + $0x60] sm:$0xff]
        %v1842 = vld [vmem:[%s1828 + $0x68] sm:$0xff]
        %v1843 = vld [vmem:[%s1828 + $0x70] sm:$0xff]
        %v1844 = vld [vmem:[%s1828 + $0x78] sm:$0xff]
        %v1845 = vld [vmem:[%s1828 + $0x80] sm:$0xff]
        %v1846 = vld [vmem:[%s1828 + $0x88] sm:$0xff]
        %v1847 = vld [vmem:[%s1828 + $0x90] sm:$0xff]
        %v1848 = vld [vmem:[%s1828 + $0x98] sm:$0xff]
        %v1849 = vld [vmem:[%s1828 + $0xa0] sm:$0xff]
        %v1850 = vld [vmem:[%s1828 + $0xa8] sm:$0xff]
        %v1851 = vld [vmem:[%s1828 + $0xb0] sm:$0xff]
        %v1852 = vld [vmem:[%s1828 + $0xb8] sm:$0xff]
        %v1853 = vld [vmem:[%s1828 + $0xc0] sm:$0xff]
        %v1854 = vld [vmem:[%s1828 + $0xc8] sm:$0xff]
        %v1855 = vld [vmem:[%s1828 + $0xd0] sm:$0xff]
        %v1856 = vld [vmem:[%s1828 + $0xd8] sm:$0xff]
        %v1857 = vrot.slane %v1478, 3
        %v1858 = vrot.slane %v1483, 3
        %v1859 = vsel %vm930, %v1857, %v1858
        %v1860 = vsel %vm1548, %v1859, 0
        %v1862 = vsel %vm1548, %v1858, 0
        %1864 = vmatprep.subr.mxu0 %v1830
        %1865 = vmatpush1.msra.mxu0 %v1829
        %1866 = vmatprep.subr.mxu0 %v1832
        %1867 = vmatpush1.msra.mxu0 %v1831
        %1868 = vmatprep.subr.mxu0 %v1834
        %1869 = vmatpush1.msra.mxu0 %v1833
        %1870 = vmatprep.subr.mxu0 %v1836
        %1871 = vmatpush1.msra.mxu0 %v1835
        %1872 = vmatprep.subr.mxu0 %v1838
        %1873 = vmatpush1.msra.mxu0 %v1837
        %1874 = vmatprep.subr.mxu0 %v1840
        %1875 = vmatpush1.msra.mxu0 %v1839
        %1876 = vmatprep.subr.mxu0 %v1842
        %1877 = vmatpush1.msra.mxu0 %v1841
        %1878 = vmatprep.subr.mxu0 %v1844
        %1879 = vmatpush1.msra.mxu0 %v1843
        %1880 = vmatprep.subr.mxu0 %v1846
        %1881 = vmatpush1.msra.mxu0 %v1845
        %1882 = vmatprep.subr.mxu0 %v1848
        %1883 = vmatpush1.msra.mxu0 %v1847
        %1884 = vmatprep.subr.mxu0 %v1850
        %1885 = vmatpush1.msra.mxu0 %v1849
        %1886 = vmatprep.subr.mxu0 %v1852
        %1887 = vmatpush1.msra.mxu0 %v1851
        %1888 = vmatprep.subr.mxu0 %v1854
        %1889 = vmatpush1.msra.mxu0 %v1853
        %1890 = vmatprep.subr.mxu0 %v1856
        %1891 = vmatpush1.msra.mxu0 %v1855
        %1892 = vmatprep.subr.mxu0 0.0
        %1893 = vmatpush1.msra.mxu0 0.0
        %1894 = vmatprep.subr.mxu0 0.0
        %1895 = vmatpush1.msra.mxu0 0.0
        %1896 = vmatprep.subr.mxu0 0.0
        %1897 = vmatpush1.msra.mxu0 0.0
        %1898 = vmatprep.subr.mxu0 0.0
        %1899 = vmatpush1.msra.mxu0 0.0
        %1900 = vmatprep.subr.mxu0 0.0
        %1901 = vmatpush1.msra.mxu0 0.0
        %1902 = vmatprep.subr.mxu0 0.0
        %1903 = vmatpush1.msra.mxu0 0.0
        %1904 = vmatprep.subr.mxu0 0.0
        %1905 = vmatpush1.msra.mxu0 0.0
        %1906 = vmatprep.subr.mxu0 0.0
        %1907 = vmatpush1.msra.mxu0 0.0
        %1908 = vmatprep.subr.mxu0 0.0
        %1909 = vmatpush1.msra.mxu0 0.0
        %1910 = vmatprep.subr.mxu0 0.0
        %1911 = vmatpush1.msra.mxu0 0.0
        %1912 = vmatprep.subr.mxu0 0.0
        %1913 = vmatpush1.msra.mxu0 0.0
        %1914 = vmatprep.subr.mxu0 0.0
        %1915 = vmatpush1.msra.mxu0 0.0
        %1916 = vmatprep.subr.mxu0 0.0
        %1917 = vmatpush1.msra.mxu0 0.0
        %1918 = vmatprep.subr.mxu0 0.0
        %1919 = vmatpush1.msra.mxu0 0.0
        %1920 = vmatprep.subr.mxu0 0.0
        %1921 = vmatpush1.msra.mxu0 0.0
        %1922 = vmatprep.subr.mxu0 0.0
        %1923 = vmatpush1.msra.mxu0 0.0
        %1924 = vmatprep.subr.mxu0 0.0
        %1925 = vmatpush1.msra.mxu0 0.0
        %1926 = vmatprep.subr.mxu0 0.0
        %1927 = vmatpush1.msra.mxu0 0.0
        %1928 = vmatprep.mubr.f32.mxu0 0.0
        %1929 = vmatmul.mubr.f32.gmra.mrb[0].mxu0 %v1860
        %v1930 = vpop.f32.mrb[0].mxu0
        %v1931 = vadd.f32 0.0, %v1930
        %v1932 = vpop.f32.mrb[0].mxu0
        %v1933 = vadd.f32 0.0, %v1932
        %1934 = vmatprep.mubr.f32.mxu0 0.0
        %1935 = vmatmul.mubr.f32.gmra.mrb[0].mxu0 %v1862
        %v1936 = vpop.f32.mrb[0].mxu0
        %v1937 = vadd.f32 0.0, %v1936
        %v1938 = vpop.f32.mrb[0].mxu0
        %v1939 = vadd.f32 0.0, %v1938
        %1940 = vdwg.mxu0
        %v1941 = vadd.f32 %v1824, %v1931
        %v1942 = vadd.f32 %v1825, %v1933
        %v1943 = vadd.f32 %v1826, %v1937
        %v1944 = vadd.f32 %v1827, %v1939
        %s1945 = scalar_lea.vmem %s5, 896
        %v1946 = vld [vmem:[%s1945] sm:$0xff]
        %v1947 = vld [vmem:[%s1945 + $0x8] sm:$0xff]
        %v1948 = vld [vmem:[%s1945 + $0x10] sm:$0xff]
        %v1949 = vld [vmem:[%s1945 + $0x18] sm:$0xff]
        %v1950 = vld [vmem:[%s1945 + $0x20] sm:$0xff]
        %v1951 = vld [vmem:[%s1945 + $0x28] sm:$0xff]
        %v1952 = vld [vmem:[%s1945 + $0x30] sm:$0xff]
        %v1953 = vld [vmem:[%s1945 + $0x38] sm:$0xff]
        %v1954 = vld [vmem:[%s1945 + $0x40] sm:$0xff]
        %v1955 = vld [vmem:[%s1945 + $0x48] sm:$0xff]
        %v1956 = vld [vmem:[%s1945 + $0x50] sm:$0xff]
        %v1957 = vld [vmem:[%s1945 + $0x58] sm:$0xff]
        %v1958 = vld [vmem:[%s1945 + $0x60] sm:$0xff]
        %v1959 = vld [vmem:[%s1945 + $0x68] sm:$0xff]
        %v1960 = vld [vmem:[%s1945 + $0x70] sm:$0xff]
        %v1961 = vld [vmem:[%s1945 + $0x78] sm:$0xff]
        %v1962 = vld [vmem:[%s1945 + $0x80] sm:$0xff]
        %v1963 = vld [vmem:[%s1945 + $0x88] sm:$0xff]
        %v1964 = vld [vmem:[%s1945 + $0x90] sm:$0xff]
        %v1965 = vld [vmem:[%s1945 + $0x98] sm:$0xff]
        %v1966 = vld [vmem:[%s1945 + $0xa0] sm:$0xff]
        %v1967 = vld [vmem:[%s1945 + $0xa8] sm:$0xff]
        %v1968 = vld [vmem:[%s1945 + $0xb0] sm:$0xff]
        %v1969 = vld [vmem:[%s1945 + $0xb8] sm:$0xff]
        %v1970 = vld [vmem:[%s1945 + $0xc0] sm:$0xff]
        %v1971 = vld [vmem:[%s1945 + $0xc8] sm:$0xff]
        %v1972 = vld [vmem:[%s1945 + $0xd0] sm:$0xff]
        %v1973 = vld [vmem:[%s1945 + $0xd8] sm:$0xff]
        %v1974 = vrot.slane %v1478, 4
        %v1975 = vrot.slane %v1483, 4
        %v1976 = vsel %vm1072, %v1974, %v1975
        %v1977 = vsel %vm1548, %v1976, 0
        %v1979 = vsel %vm1548, %v1975, 0
        %1981 = vmatprep.subr.mxu0 %v1947
        %1982 = vmatpush1.msra.mxu0 %v1946
        %1983 = vmatprep.subr.mxu0 %v1949
        %1984 = vmatpush1.msra.mxu0 %v1948
        %1985 = vmatprep.subr.mxu0 %v1951
        %1986 = vmatpush1.msra.mxu0 %v1950
        %1987 = vmatprep.subr.mxu0 %v1953
        %1988 = vmatpush1.msra.mxu0 %v1952
        %1989 = vmatprep.subr.mxu0 %v1955
        %1990 = vmatpush1.msra.mxu0 %v1954
        %1991 = vmatprep.subr.mxu0 %v1957
        %1992 = vmatpush1.msra.mxu0 %v1956
        %1993 = vmatprep.subr.mxu0 %v1959
        %1994 = vmatpush1.msra.mxu0 %v1958
        %1995 = vmatprep.subr.mxu0 %v1961
        %1996 = vmatpush1.msra.mxu0 %v1960
        %1997 = vmatprep.subr.mxu0 %v1963
        %1998 = vmatpush1.msra.mxu0 %v1962
        %1999 = vmatprep.subr.mxu0 %v1965
        %2000 = vmatpush1.msra.mxu0 %v1964
        %2001 = vmatprep.subr.mxu0 %v1967
        %2002 = vmatpush1.msra.mxu0 %v1966
        %2003 = vmatprep.subr.mxu0 %v1969
        %2004 = vmatpush1.msra.mxu0 %v1968
        %2005 = vmatprep.subr.mxu0 %v1971
        %2006 = vmatpush1.msra.mxu0 %v1970
        %2007 = vmatprep.subr.mxu0 %v1973
        %2008 = vmatpush1.msra.mxu0 %v1972
        %2009 = vmatprep.subr.mxu0 0.0
        %2010 = vmatpush1.msra.mxu0 0.0
        %2011 = vmatprep.subr.mxu0 0.0
        %2012 = vmatpush1.msra.mxu0 0.0
        %2013 = vmatprep.subr.mxu0 0.0
        %2014 = vmatpush1.msra.mxu0 0.0
        %2015 = vmatprep.subr.mxu0 0.0
        %2016 = vmatpush1.msra.mxu0 0.0
        %2017 = vmatprep.subr.mxu0 0.0
        %2018 = vmatpush1.msra.mxu0 0.0
        %2019 = vmatprep.subr.mxu0 0.0
        %2020 = vmatpush1.msra.mxu0 0.0
        %2021 = vmatprep.subr.mxu0 0.0
        %2022 = vmatpush1.msra.mxu0 0.0
        %2023 = vmatprep.subr.mxu0 0.0
        %2024 = vmatpush1.msra.mxu0 0.0
        %2025 = vmatprep.subr.mxu0 0.0
        %2026 = vmatpush1.msra.mxu0 0.0
        %2027 = vmatprep.subr.mxu0 0.0
        %2028 = vmatpush1.msra.mxu0 0.0
        %2029 = vmatprep.subr.mxu0 0.0
        %2030 = vmatpush1.msra.mxu0 0.0
        %2031 = vmatprep.subr.mxu0 0.0
        %2032 = vmatpush1.msra.mxu0 0.0
        %2033 = vmatprep.subr.mxu0 0.0
        %2034 = vmatpush1.msra.mxu0 0.0
        %2035 = vmatprep.subr.mxu0 0.0
        %2036 = vmatpush1.msra.mxu0 0.0
        %2037 = vmatprep.subr.mxu0 0.0
        %2038 = vmatpush1.msra.mxu0 0.0
        %2039 = vmatprep.subr.mxu0 0.0
        %2040 = vmatpush1.msra.mxu0 0.0
        %2041 = vmatprep.subr.mxu0 0.0
        %2042 = vmatpush1.msra.mxu0 0.0
        %2043 = vmatprep.subr.mxu0 0.0
        %2044 = vmatpush1.msra.mxu0 0.0
        %2045 = vmatprep.mubr.f32.mxu0 0.0
        %2046 = vmatmul.mubr.f32.gmra.mrb[0].mxu0 %v1977
        %v2047 = vpop.f32.mrb[0].mxu0
        %v2048 = vadd.f32 0.0, %v2047
        %v2049 = vpop.f32.mrb[0].mxu0
        %v2050 = vadd.f32 0.0, %v2049
        %2051 = vmatprep.mubr.f32.mxu0 0.0
        %2052 = vmatmul.mubr.f32.gmra.mrb[0].mxu0 %v1979
        %v2053 = vpop.f32.mrb[0].mxu0
        %v2054 = vadd.f32 0.0, %v2053
        %v2055 = vpop.f32.mrb[0].mxu0
        %v2056 = vadd.f32 0.0, %v2055
        %2057 = vdwg.mxu0
        %v2058 = vadd.f32 %v1941, %v2048
        %v2059 = vadd.f32 %v1942, %v2050
        %v2060 = vadd.f32 %v1943, %v2054
        %v2061 = vadd.f32 %v1944, %v2056
        %v2062 = vld [vmem:[%s6] sm:$0x3]
        %v2064 = vlaneseq
        %v2065 = vshrl.u32 %v2064, 7
        %v2066 = vsub.s32 0, %v2065
        %v2067 = vrot.slane %v2062, %v2066
        %v2068 = vlaneseq
        %v2069 = vshrl.u32 %v2068, 7
        %v2070 = vsub.s32 1, %v2069
        %v2071 = vrot.slane %v2062, %v2070
        %v2074 = vadd.f32 %v2058, %v2067
        %v2075 = vadd.f32 %v2059, %v2071
        %v2076 = vadd.f32 %v2060, %v2067
        %v2077 = vadd.f32 %v2061, %v2071
        %v2078 = vmax.f32 %v2074, 0.0
        %v2079 = vmax.f32 %v2075, 0.0
        %v2080 = vmax.f32 %v2076, 0.0
        %v2081 = vmax.f32 %v2077, 0.0
        %2086 = vrot.lane.b32.xlu0 %v2078, 112
        %v2087 = vpop.permute.xlu0 %2086
        %2088 = vrot.lane.b32.xlu0 %v2079, 112
        %v2089 = vpop.permute.xlu0 %2088
        %2090 = vrot.lane.b32.xlu0 %v2080, 112
        %v2091 = vpop.permute.xlu0 %2090
        %2092 = vrot.lane.b32.xlu0 %v2081, 112
        %v2093 = vpop.permute.xlu0 %2092
        %v2094 = vsel %vm1548, %v2087, %v2089
        %v2095 = vsel %vm1548, %v2091, %v2093
        %v2100 = vmax.f32 %v2078, %v2094
        %v2101 = vmax.f32 %v2079, %v2089
        %v2102 = vmax.f32 %v2080, %v2095
        %v2103 = vmax.f32 %v2081, %v2093
        %v2104 = vld [vmem:[%s7] sm:$0xff]
        %v2105 = vld [vmem:[%s7 + $0x8] sm:$0xff]
        %v2106 = vld [vmem:[%s7 + $0x10] sm:$0xff]
        %v2107 = vld [vmem:[%s7 + $0x18] sm:$0xff]
        %v2108 = vld [vmem:[%s7 + $0x20] sm:$0xff]
        %v2109 = vld [vmem:[%s7 + $0x28] sm:$0xff]
        %v2110 = vld [vmem:[%s7 + $0x30] sm:$0xff]
        %v2111 = vld [vmem:[%s7 + $0x38] sm:$0xff]
        %v2112 = vld [vmem:[%s7 + $0x40] sm:$0xff]
        %v2113 = vld [vmem:[%s7 + $0x48] sm:$0xff]
        %v2114 = vld [vmem:[%s7 + $0x50] sm:$0xff]
        %v2115 = vld [vmem:[%s7 + $0x58] sm:$0xff]
        %v2116 = vld [vmem:[%s7 + $0x60] sm:$0xff]
        %v2117 = vld [vmem:[%s7 + $0x68] sm:$0xff]
        %v2118 = vld [vmem:[%s7 + $0x70] sm:$0xff]
        %v2119 = vld [vmem:[%s7 + $0x78] sm:$0xff]
        %v2120 = vld [vmem:[%s7 + $0x80] sm:$0xff]
        %v2121 = vld [vmem:[%s7 + $0x88] sm:$0xff]
        %vm2122 = vcmask 130048
        %v2124 = vsel %vm2122, %v2101, 0
        %v2127 = vsel %vm2122, %v2103, 0
        %2129 = vmatprep.subr.mxu0 0.0
        %2130 = vmatpush1.msra.mxu0 %v2104
        %2131 = vmatprep.subr.mxu0 0.0
        %2132 = vmatpush1.msra.mxu0 %v2105
        %2133 = vmatprep.subr.mxu0 0.0
        %2134 = vmatpush1.msra.mxu0 %v2106
        %2135 = vmatprep.subr.mxu0 0.0
        %2136 = vmatpush1.msra.mxu0 %v2107
        %2137 = vmatprep.subr.mxu0 0.0
        %2138 = vmatpush1.msra.mxu0 %v2108
        %2139 = vmatprep.subr.mxu0 0.0
        %2140 = vmatpush1.msra.mxu0 %v2109
        %2141 = vmatprep.subr.mxu0 0.0
        %2142 = vmatpush1.msra.mxu0 %v2110
        %2143 = vmatprep.subr.mxu0 0.0
        %2144 = vmatpush1.msra.mxu0 %v2111
        %2145 = vmatprep.subr.mxu0 0.0
        %2146 = vmatpush1.msra.mxu0 %v2112
        %2147 = vmatprep.subr.mxu0 0.0
        %2148 = vmatpush1.msra.mxu0 %v2113
        %2149 = vmatprep.subr.mxu0 0.0
        %2150 = vmatpush1.msra.mxu0 %v2114
        %2151 = vmatprep.subr.mxu0 0.0
        %2152 = vmatpush1.msra.mxu0 %v2115
        %2153 = vmatprep.subr.mxu0 0.0
        %2154 = vmatpush1.msra.mxu0 %v2116
        %2155 = vmatprep.subr.mxu0 0.0
        %2156 = vmatpush1.msra.mxu0 %v2117
        %2157 = vmatprep.subr.mxu0 0.0
        %2158 = vmatpush1.msra.mxu0 %v2118
        %2159 = vmatprep.subr.mxu0 0.0
        %2160 = vmatpush1.msra.mxu0 %v2119
        %2161 = vmatprep.subr.mxu0 0.0
        %2162 = vmatpush1.msra.mxu0 %v2120
        %2163 = vmatprep.subr.mxu0 0.0
        %2164 = vmatpush1.msra.mxu0 %v2121
        %2165 = vmatprep.subr.mxu0 0.0
        %2166 = vmatpush1.msra.mxu0 0.0
        %2167 = vmatprep.subr.mxu0 0.0
        %2168 = vmatpush1.msra.mxu0 0.0
        %2169 = vmatprep.subr.mxu0 0.0
        %2170 = vmatpush1.msra.mxu0 0.0
        %2171 = vmatprep.subr.mxu0 0.0
        %2172 = vmatpush1.msra.mxu0 0.0
        %2173 = vmatprep.subr.mxu0 0.0
        %2174 = vmatpush1.msra.mxu0 0.0
        %2175 = vmatprep.subr.mxu0 0.0
        %2176 = vmatpush1.msra.mxu0 0.0
        %2177 = vmatprep.subr.mxu0 0.0
        %2178 = vmatpush1.msra.mxu0 0.0
        %2179 = vmatprep.subr.mxu0 0.0
        %2180 = vmatpush1.msra.mxu0 0.0
        %2181 = vmatprep.subr.mxu0 0.0
        %2182 = vmatpush1.msra.mxu0 0.0
        %2183 = vmatprep.subr.mxu0 0.0
        %2184 = vmatpush1.msra.mxu0 0.0
        %2185 = vmatprep.subr.mxu0 0.0
        %2186 = vmatpush1.msra.mxu0 0.0
        %2187 = vmatprep.subr.mxu0 0.0
        %2188 = vmatpush1.msra.mxu0 0.0
        %2189 = vmatprep.subr.mxu0 0.0
        %2190 = vmatpush1.msra.mxu0 0.0
        %2191 = vmatprep.subr.mxu0 0.0
        %2192 = vmatpush1.msra.mxu0 0.0
        %2193 = vmatprep.mubr.f32.mxu0 %v2124
        %2194 = vmatmul.mubr.f32.gmra.mrb[0].mxu0 %v2100
        %v2195 = vpop.f32.mrb[0].mxu0
        %v2196 = vadd.f32 0.0, %v2195
        %v2197 = vpop.f32.mrb[0].mxu0
        %2198 = vmatprep.mubr.f32.mxu0 %v2127
        %2199 = vmatmul.mubr.f32.gmra.mrb[0].mxu0 %v2102
        %v2200 = vpop.f32.mrb[0].mxu0
        %v2201 = vadd.f32 0.0, %v2200
        %v2202 = vpop.f32.mrb[0].mxu0
        %2203 = vdwg.mxu0
        %v2206 = vrot.slane %v2196, 1
        %v2207 = vrot.slane %v2201, 1
        %v2208 = vsel %vm565, %v2206, %v2207
        %v2211 = vmax.f32 %v2196, %v2208
        %v2212 = vmax.f32 %v2201, %v2207
        %v2213 = vld [vmem:[%s8] sm:$0x1f]
        %vm2214 = vcmask 72704
        %v2216 = vsel %vm2214, %v2213, 0
        %vm2218 = vcmask 1040384
        %v2220 = vsel %vm2218, %v2212, 0
        %2222 = vmatprep.subr.mxu0 0.0
        %2223 = vmatpush1.msra.mxu0 %v2211
        %2224 = vmatprep.subr.mxu0 0.0
        %2225 = vmatpush1.msra.mxu0 %v2220
        %2226 = vmatprep.subr.mxu0 0.0
        %2227 = vmatpush1.msra.mxu0 0.0
        %2228 = vmatprep.subr.mxu0 0.0
        %2229 = vmatpush1.msra.mxu0 0.0
        %2230 = vmatprep.subr.mxu0 0.0
        %2231 = vmatpush1.msra.mxu0 0.0
        %2232 = vmatprep.subr.mxu0 0.0
        %2233 = vmatpush1.msra.mxu0 0.0
        %2234 = vmatprep.subr.mxu0 0.0
        %2235 = vmatpush1.msra.mxu0 0.0
        %2236 = vmatprep.subr.mxu0 0.0
        %2237 = vmatpush1.msra.mxu0 0.0
        %2238 = vmatprep.subr.mxu0 0.0
        %2239 = vmatpush1.msra.mxu0 0.0
        %2240 = vmatprep.subr.mxu0 0.0
        %2241 = vmatpush1.msra.mxu0 0.0
        %2242 = vmatprep.subr.mxu0 0.0
        %2243 = vmatpush1.msra.mxu0 0.0
        %2244 = vmatprep.subr.mxu0 0.0
        %2245 = vmatpush1.msra.mxu0 0.0
        %2246 = vmatprep.subr.mxu0 0.0
        %2247 = vmatpush1.msra.mxu0 0.0
        %2248 = vmatprep.subr.mxu0 0.0
        %2249 = vmatpush1.msra.mxu0 0.0
        %2250 = vmatprep.subr.mxu0 0.0
        %2251 = vmatpush1.msra.mxu0 0.0
        %2252 = vmatprep.subr.mxu0 0.0
        %2253 = vmatpush1.msra.mxu0 0.0
        %2254 = vmatprep.subr.mxu0 0.0
        %2255 = vmatpush1.msra.mxu0 0.0
        %2256 = vmatprep.subr.mxu0 0.0
        %2257 = vmatpush1.msra.mxu0 0.0
        %2258 = vmatprep.subr.mxu0 0.0
        %2259 = vmatpush1.msra.mxu0 0.0
        %2260 = vmatprep.subr.mxu0 0.0
        %2261 = vmatpush1.msra.mxu0 0.0
        %2262 = vmatprep.subr.mxu0 0.0
        %2263 = vmatpush1.msra.mxu0 0.0
        %2264 = vmatprep.subr.mxu0 0.0
        %2265 = vmatpush1.msra.mxu0 0.0
        %2266 = vmatprep.subr.mxu0 0.0
        %2267 = vmatpush1.msra.mxu0 0.0
        %2268 = vmatprep.subr.mxu0 0.0
        %2269 = vmatpush1.msra.mxu0 0.0
        %2270 = vmatprep.subr.mxu0 0.0
        %2271 = vmatpush1.msra.mxu0 0.0
        %2272 = vmatprep.subr.mxu0 0.0
        %2273 = vmatpush1.msra.mxu0 0.0
        %2274 = vmatprep.subr.mxu0 0.0
        %2275 = vmatpush1.msra.mxu0 0.0
        %2276 = vmatprep.subr.mxu0 0.0
        %2277 = vmatpush1.msra.mxu0 0.0
        %2278 = vmatprep.subr.mxu0 0.0
        %2279 = vmatpush1.msra.mxu0 0.0
        %2280 = vmatprep.subr.mxu0 0.0
        %2281 = vmatpush1.msra.mxu0 0.0
        %2282 = vmatprep.subr.mxu0 0.0
        %2283 = vmatpush1.msra.mxu0 0.0
        %2284 = vmatprep.subr.mxu0 0.0
        %2285 = vmatpush1.msra.mxu0 0.0
        %2286 = vmatprep.mubr.f32.mxu0 0.0
        %2287 = vmatmul.mubr.f32.gmra.mrb[0].mxu0 %v2216
        %v2288 = vpop.f32.mrb[0].mxu0
        %v2289 = vadd.f32 0.0, %v2288
        %v2290 = vpop.f32.mrb[0].mxu0
        %2291 = vdwg.mxu0
        %v2292 = vld [vmem:[%s9] sm:$0xff]
        %v2293 = vld [vmem:[%s9 + $0x8] sm:$0xff]
        %v2294 = vld [vmem:[%s9 + $0x10] sm:$0xff]
        %v2295 = vld [vmem:[%s9 + $0x18] sm:$0xff]
        %v2296 = vld [vmem:[%s9 + $0x20] sm:$0xff]
        %v2297 = vld [vmem:[%s9 + $0x28] sm:$0xff]
        %v2298 = vld [vmem:[%s9 + $0x30] sm:$0xff]
        %v2299 = vld [vmem:[%s9 + $0x38] sm:$0xff]
        %v2300 = vld [vmem:[%s9 + $0x40] sm:$0xff]
        %v2301 = vld [vmem:[%s9 + $0x48] sm:$0xff]
        %s2302 = scalar_lea.vmem %s9, 80
        %v2303 = vld [vmem:[%s2302] sm:$0xff]
        %v2304 = vld [vmem:[%s2302 + $0x8] sm:$0xff]
        %v2305 = vld [vmem:[%s2302 + $0x10] sm:$0xff]
        %v2306 = vld [vmem:[%s2302 + $0x18] sm:$0xff]
        %v2307 = vld [vmem:[%s2302 + $0x20] sm:$0xff]
        %v2308 = vld [vmem:[%s2302 + $0x28] sm:$0xff]
        %v2309 = vld [vmem:[%s2302 + $0x30] sm:$0xff]
        %v2310 = vld [vmem:[%s2302 + $0x38] sm:$0xff]
        %v2311 = vld [vmem:[%s2302 + $0x40] sm:$0xff]
        %v2312 = vld [vmem:[%s2302 + $0x48] sm:$0xff]
        %v2314 = vrot.slane %v2289, 1
        %vm2315 = vcmask 654336
        %v2316 = vsel %vm2315, %v2314, 0
        %2318 = vmatprep.subr.mxu0 0.0
        %2319 = vmatpush1.msra.mxu0 %v2303
        %2320 = vmatprep.subr.mxu0 0.0
        %2321 = vmatpush1.msra.mxu0 %v2304
        %2322 = vmatprep.subr.mxu0 0.0
        %2323 = vmatpush1.msra.mxu0 %v2305
        %2324 = vmatprep.subr.mxu0 0.0
        %2325 = vmatpush1.msra.mxu0 %v2306
        %2326 = vmatprep.subr.mxu0 0.0
        %2327 = vmatpush1.msra.mxu0 %v2307
        %2328 = vmatprep.subr.mxu0 0.0
        %2329 = vmatpush1.msra.mxu0 %v2308
        %2330 = vmatprep.subr.mxu0 0.0
        %2331 = vmatpush1.msra.mxu0 %v2309
        %2332 = vmatprep.subr.mxu0 0.0
        %2333 = vmatpush1.msra.mxu0 %v2310
        %2334 = vmatprep.subr.mxu0 0.0
        %2335 = vmatpush1.msra.mxu0 %v2311
        %2336 = vmatprep.subr.mxu0 0.0
        %2337 = vmatpush1.msra.mxu0 %v2312
        %2338 = vmatprep.subr.mxu0 0.0
        %2339 = vmatpush1.msra.mxu0 0.0
        %2340 = vmatprep.subr.mxu0 0.0
        %2341 = vmatpush1.msra.mxu0 0.0
        %2342 = vmatprep.subr.mxu0 0.0
        %2343 = vmatpush1.msra.mxu0 0.0
        %2344 = vmatprep.subr.mxu0 0.0
        %2345 = vmatpush1.msra.mxu0 0.0
        %2346 = vmatprep.subr.mxu0 0.0
        %2347 = vmatpush1.msra.mxu0 0.0
        %2348 = vmatprep.subr.mxu0 0.0
        %2349 = vmatpush1.msra.mxu0 0.0
        %2350 = vmatprep.subr.mxu0 0.0
        %2351 = vmatpush1.msra.mxu0 0.0
        %2352 = vmatprep.subr.mxu0 0.0
        %2353 = vmatpush1.msra.mxu0 0.0
        %2354 = vmatprep.subr.mxu0 0.0
        %2355 = vmatpush1.msra.mxu0 0.0
        %2356 = vmatprep.subr.mxu0 0.0
        %2357 = vmatpush1.msra.mxu0 0.0
        %2358 = vmatprep.subr.mxu0 0.0
        %2359 = vmatpush1.msra.mxu0 0.0
        %2360 = vmatprep.subr.mxu0 0.0
        %2361 = vmatpush1.msra.mxu0 0.0
        %2362 = vmatprep.subr.mxu0 0.0
        %2363 = vmatpush1.msra.mxu0 0.0
        %2364 = vmatprep.subr.mxu0 0.0
        %2365 = vmatpush1.msra.mxu0 0.0
        %2366 = vmatprep.subr.mxu0 0.0
        %2367 = vmatpush1.msra.mxu0 0.0
        %2368 = vmatprep.subr.mxu0 0.0
        %2369 = vmatpush1.msra.mxu0 0.0
        %2370 = vmatprep.subr.mxu0 0.0
        %2371 = vmatpush1.msra.mxu0 0.0
        %2372 = vmatprep.subr.mxu0 0.0
        %2373 = vmatpush1.msra.mxu0 0.0
        %2374 = vmatprep.subr.mxu0 0.0
        %2375 = vmatpush1.msra.mxu0 0.0
        %2376 = vmatprep.subr.mxu0 0.0
        %2377 = vmatpush1.msra.mxu0 0.0
        %2378 = vmatprep.subr.mxu0 0.0
        %2379 = vmatpush1.msra.mxu0 0.0
        %2380 = vmatprep.subr.mxu0 0.0
        %2381 = vmatpush1.msra.mxu0 0.0
        %2382 = vmatprep.mubr.f32.mxu0 0.0
        %2383 = vmatmul.mubr.f32.gmra.mrb[0].mxu0 %v2316
        %v2384 = vpop.f32.mrb[0].mxu0
        %v2385 = vadd.f32 0.0, %v2384
        %v2386 = vpop.f32.mrb[0].mxu0
        %2387 = vdwg.mxu0
        %v2388 = vsel %vm2315, %v2289, 0
        %2390 = vmatprep.subr.mxu0 0.0
        %2391 = vmatpush1.msra.mxu0 %v2292
        %2392 = vmatprep.subr.mxu0 0.0
        %2393 = vmatpush1.msra.mxu0 %v2293
        %2394 = vmatprep.subr.mxu0 0.0
        %2395 = vmatpush1.msra.mxu0 %v2294
        %2396 = vmatprep.subr.mxu0 0.0
        %2397 = vmatpush1.msra.mxu0 %v2295
        %2398 = vmatprep.subr.mxu0 0.0
        %2399 = vmatpush1.msra.mxu0 %v2296
        %2400 = vmatprep.subr.mxu0 0.0
        %2401 = vmatpush1.msra.mxu0 %v2297
        %2402 = vmatprep.subr.mxu0 0.0
        %2403 = vmatpush1.msra.mxu0 %v2298
        %2404 = vmatprep.subr.mxu0 0.0
        %2405 = vmatpush1.msra.mxu0 %v2299
        %2406 = vmatprep.subr.mxu0 0.0
        %2407 = vmatpush1.msra.mxu0 %v2300
        %2408 = vmatprep.subr.mxu0 0.0
        %2409 = vmatpush1.msra.mxu0 %v2301
        %2410 = vmatprep.subr.mxu0 0.0
        %2411 = vmatpush1.msra.mxu0 0.0
        %2412 = vmatprep.subr.mxu0 0.0
        %2413 = vmatpush1.msra.mxu0 0.0
        %2414 = vmatprep.subr.mxu0 0.0
        %2415 = vmatpush1.msra.mxu0 0.0
        %2416 = vmatprep.subr.mxu0 0.0
        %2417 = vmatpush1.msra.mxu0 0.0
        %2418 = vmatprep.subr.mxu0 0.0
        %2419 = vmatpush1.msra.mxu0 0.0
        %2420 = vmatprep.subr.mxu0 0.0
        %2421 = vmatpush1.msra.mxu0 0.0
        %2422 = vmatprep.subr.mxu0 0.0
        %2423 = vmatpush1.msra.mxu0 0.0
        %2424 = vmatprep.subr.mxu0 0.0
        %2425 = vmatpush1.msra.mxu0 0.0
        %2426 = vmatprep.subr.mxu0 0.0
        %2427 = vmatpush1.msra.mxu0 0.0
        %2428 = vmatprep.subr.mxu0 0.0
        %2429 = vmatpush1.msra.mxu0 0.0
        %2430 = vmatprep.subr.mxu0 0.0
        %2431 = vmatpush1.msra.mxu0 0.0
        %2432 = vmatprep.subr.mxu0 0.0
        %2433 = vmatpush1.msra.mxu0 0.0
        %2434 = vmatprep.subr.mxu0 0.0
        %2435 = vmatpush1.msra.mxu0 0.0
        %2436 = vmatprep.subr.mxu0 0.0
        %2437 = vmatpush1.msra.mxu0 0.0
        %2438 = vmatprep.subr.mxu0 0.0
        %2439 = vmatpush1.msra.mxu0 0.0
        %2440 = vmatprep.subr.mxu0 0.0
        %2441 = vmatpush1.msra.mxu0 0.0
        %2442 = vmatprep.subr.mxu0 0.0
        %2443 = vmatpush1.msra.mxu0 0.0
        %2444 = vmatprep.subr.mxu0 0.0
        %2445 = vmatpush1.msra.mxu0 0.0
        %2446 = vmatprep.subr.mxu0 0.0
        %2447 = vmatpush1.msra.mxu0 0.0
        %2448 = vmatprep.subr.mxu0 0.0
        %2449 = vmatpush1.msra.mxu0 0.0
        %2450 = vmatprep.subr.mxu0 0.0
        %2451 = vmatpush1.msra.mxu0 0.0
        %2452 = vmatprep.subr.mxu0 0.0
        %2453 = vmatpush1.msra.mxu0 0.0
        %2454 = vmatprep.mubr.f32.mxu0 0.0
        %2455 = vmatmul.mubr.f32.gmra.mrb[0].mxu0 %v2388
        %v2456 = vpop.f32.mrb[0].mxu0
        %v2457 = vadd.f32 %v2385, %v2456
        %v2458 = vpop.f32.mrb[0].mxu0
        %2459 = vdwg.mxu0
        %s2460 = scalar_lea.vmem %s9, 160
        %v2461 = vld [vmem:[%s2460] sm:$0xff]
        %v2462 = vld [vmem:[%s2460 + $0x8] sm:$0xff]
        %v2463 = vld [vmem:[%s2460 + $0x10] sm:$0xff]
        %v2464 = vld [vmem:[%s2460 + $0x18] sm:$0xff]
        %v2465 = vld [vmem:[%s2460 + $0x20] sm:$0xff]
        %v2466 = vld [vmem:[%s2460 + $0x28] sm:$0xff]
        %v2467 = vld [vmem:[%s2460 + $0x30] sm:$0xff]
        %v2468 = vld [vmem:[%s2460 + $0x38] sm:$0xff]
        %v2469 = vld [vmem:[%s2460 + $0x40] sm:$0xff]
        %v2470 = vld [vmem:[%s2460 + $0x48] sm:$0xff]
        %v2471 = vrot.slane %v2289, 2
        %v2472 = vsel %vm2315, %v2471, 0
        %2474 = vmatprep.subr.mxu0 0.0
        %2475 = vmatpush1.msra.mxu0 %v2461
        %2476 = vmatprep.subr.mxu0 0.0
        %2477 = vmatpush1.msra.mxu0 %v2462
        %2478 = vmatprep.subr.mxu0 0.0
        %2479 = vmatpush1.msra.mxu0 %v2463
        %2480 = vmatprep.subr.mxu0 0.0
        %2481 = vmatpush1.msra.mxu0 %v2464
        %2482 = vmatprep.subr.mxu0 0.0
        %2483 = vmatpush1.msra.mxu0 %v2465
        %2484 = vmatprep.subr.mxu0 0.0
        %2485 = vmatpush1.msra.mxu0 %v2466
        %2486 = vmatprep.subr.mxu0 0.0
        %2487 = vmatpush1.msra.mxu0 %v2467
        %2488 = vmatprep.subr.mxu0 0.0
        %2489 = vmatpush1.msra.mxu0 %v2468
        %2490 = vmatprep.subr.mxu0 0.0
        %2491 = vmatpush1.msra.mxu0 %v2469
        %2492 = vmatprep.subr.mxu0 0.0
        %2493 = vmatpush1.msra.mxu0 %v2470
        %2494 = vmatprep.subr.mxu0 0.0
        %2495 = vmatpush1.msra.mxu0 0.0
        %2496 = vmatprep.subr.mxu0 0.0
        %2497 = vmatpush1.msra.mxu0 0.0
        %2498 = vmatprep.subr.mxu0 0.0
        %2499 = vmatpush1.msra.mxu0 0.0
        %2500 = vmatprep.subr.mxu0 0.0
        %2501 = vmatpush1.msra.mxu0 0.0
        %2502 = vmatprep.subr.mxu0 0.0
        %2503 = vmatpush1.msra.mxu0 0.0
        %2504 = vmatprep.subr.mxu0 0.0
        %2505 = vmatpush1.msra.mxu0 0.0
        %2506 = vmatprep.subr.mxu0 0.0
        %2507 = vmatpush1.msra.mxu0 0.0
        %2508 = vmatprep.subr.mxu0 0.0
        %2509 = vmatpush1.msra.mxu0 0.0
        %2510 = vmatprep.subr.mxu0 0.0
        %2511 = vmatpush1.msra.mxu0 0.0
        %2512 = vmatprep.subr.mxu0 0.0
        %2513 = vmatpush1.msra.mxu0 0.0
        %2514 = vmatprep.subr.mxu0 0.0
        %2515 = vmatpush1.msra.mxu0 0.0
        %2516 = vmatprep.subr.mxu0 0.0
        %2517 = vmatpush1.msra.mxu0 0.0
        %2518 = vmatprep.subr.mxu0 0.0
        %2519 = vmatpush1.msra.mxu0 0.0
        %2520 = vmatprep.subr.mxu0 0.0
        %2521 = vmatpush1.msra.mxu0 0.0
        %2522 = vmatprep.subr.mxu0 0.0
        %2523 = vmatpush1.msra.mxu0 0.0
        %2524 = vmatprep.subr.mxu0 0.0
        %2525 = vmatpush1.msra.mxu0 0.0
        %2526 = vmatprep.subr.mxu0 0.0
        %2527 = vmatpush1.msra.mxu0 0.0
        %2528 = vmatprep.subr.mxu0 0.0
        %2529 = vmatpush1.msra.mxu0 0.0
        %2530 = vmatprep.subr.mxu0 0.0
        %2531 = vmatpush1.msra.mxu0 0.0
        %2532 = vmatprep.subr.mxu0 0.0
        %2533 = vmatpush1.msra.mxu0 0.0
        %2534 = vmatprep.subr.mxu0 0.0
        %2535 = vmatpush1.msra.mxu0 0.0
        %2536 = vmatprep.subr.mxu0 0.0
        %2537 = vmatpush1.msra.mxu0 0.0
        %2538 = vmatprep.mubr.f32.mxu0 0.0
        %2539 = vmatmul.mubr.f32.gmra.mrb[0].mxu0 %v2472
        %v2540 = vpop.f32.mrb[0].mxu0
        %v2541 = vadd.f32 0.0, %v2540
        %v2542 = vpop.f32.mrb[0].mxu0
        %2543 = vdwg.mxu0
        %v2544 = vadd.f32 %v2457, %v2541
        %s2545 = scalar_lea.vmem %s9, 240
        %v2546 = vld [vmem:[%s2545] sm:$0xff]
        %v2547 = vld [vmem:[%s2545 + $0x8] sm:$0xff]
        %v2548 = vld [vmem:[%s2545 + $0x10] sm:$0xff]
        %v2549 = vld [vmem:[%s2545 + $0x18] sm:$0xff]
        %v2550 = vld [vmem:[%s2545 + $0x20] sm:$0xff]
        %v2551 = vld [vmem:[%s2545 + $0x28] sm:$0xff]
        %v2552 = vld [vmem:[%s2545 + $0x30] sm:$0xff]
        %v2553 = vld [vmem:[%s2545 + $0x38] sm:$0xff]
        %v2554 = vld [vmem:[%s2545 + $0x40] sm:$0xff]
        %v2555 = vld [vmem:[%s2545 + $0x48] sm:$0xff]
        %v2556 = vrot.slane %v2289, 3
        %v2557 = vsel %vm2315, %v2556, 0
        %2559 = vmatprep.subr.mxu0 0.0
        %2560 = vmatpush1.msra.mxu0 %v2546
        %2561 = vmatprep.subr.mxu0 0.0
        %2562 = vmatpush1.msra.mxu0 %v2547
        %2563 = vmatprep.subr.mxu0 0.0
        %2564 = vmatpush1.msra.mxu0 %v2548
        %2565 = vmatprep.subr.mxu0 0.0
        %2566 = vmatpush1.msra.mxu0 %v2549
        %2567 = vmatprep.subr.mxu0 0.0
        %2568 = vmatpush1.msra.mxu0 %v2550
        %2569 = vmatprep.subr.mxu0 0.0
        %2570 = vmatpush1.msra.mxu0 %v2551
        %2571 = vmatprep.subr.mxu0 0.0
        %2572 = vmatpush1.msra.mxu0 %v2552
        %2573 = vmatprep.subr.mxu0 0.0
        %2574 = vmatpush1.msra.mxu0 %v2553
        %2575 = vmatprep.subr.mxu0 0.0
        %2576 = vmatpush1.msra.mxu0 %v2554
        %2577 = vmatprep.subr.mxu0 0.0
        %2578 = vmatpush1.msra.mxu0 %v2555
        %2579 = vmatprep.subr.mxu0 0.0
        %2580 = vmatpush1.msra.mxu0 0.0
        %2581 = vmatprep.subr.mxu0 0.0
        %2582 = vmatpush1.msra.mxu0 0.0
        %2583 = vmatprep.subr.mxu0 0.0
        %2584 = vmatpush1.msra.mxu0 0.0
        %2585 = vmatprep.subr.mxu0 0.0
        %2586 = vmatpush1.msra.mxu0 0.0
        %2587 = vmatprep.subr.mxu0 0.0
        %2588 = vmatpush1.msra.mxu0 0.0
        %2589 = vmatprep.subr.mxu0 0.0
        %2590 = vmatpush1.msra.mxu0 0.0
        %2591 = vmatprep.subr.mxu0 0.0
        %2592 = vmatpush1.msra.mxu0 0.0
        %2593 = vmatprep.subr.mxu0 0.0
        %2594 = vmatpush1.msra.mxu0 0.0
        %2595 = vmatprep.subr.mxu0 0.0
        %2596 = vmatpush1.msra.mxu0 0.0
        %2597 = vmatprep.subr.mxu0 0.0
        %2598 = vmatpush1.msra.mxu0 0.0
        %2599 = vmatprep.subr.mxu0 0.0
        %2600 = vmatpush1.msra.mxu0 0.0
        %2601 = vmatprep.subr.mxu0 0.0
        %2602 = vmatpush1.msra.mxu0 0.0
        %2603 = vmatprep.subr.mxu0 0.0
        %2604 = vmatpush1.msra.mxu0 0.0
        %2605 = vmatprep.subr.mxu0 0.0
        %2606 = vmatpush1.msra.mxu0 0.0
        %2607 = vmatprep.subr.mxu0 0.0
        %2608 = vmatpush1.msra.mxu0 0.0
        %2609 = vmatprep.subr.mxu0 0.0
        %2610 = vmatpush1.msra.mxu0 0.0
        %2611 = vmatprep.subr.mxu0 0.0
        %2612 = vmatpush1.msra.mxu0 0.0
        %2613 = vmatprep.subr.mxu0 0.0
        %2614 = vmatpush1.msra.mxu0 0.0
        %2615 = vmatprep.subr.mxu0 0.0
        %2616 = vmatpush1.msra.mxu0 0.0
        %2617 = vmatprep.subr.mxu0 0.0
        %2618 = vmatpush1.msra.mxu0 0.0
        %2619 = vmatprep.subr.mxu0 0.0
        %2620 = vmatpush1.msra.mxu0 0.0
        %2621 = vmatprep.subr.mxu0 0.0
        %2622 = vmatpush1.msra.mxu0 0.0
        %2623 = vmatprep.mubr.f32.mxu0 0.0
        %2624 = vmatmul.mubr.f32.gmra.mrb[0].mxu0 %v2557
        %v2625 = vpop.f32.mrb[0].mxu0
        %v2626 = vadd.f32 0.0, %v2625
        %v2627 = vpop.f32.mrb[0].mxu0
        %2628 = vdwg.mxu0
        %v2629 = vadd.f32 %v2544, %v2626
        %s2630 = scalar_lea.vmem %s9, 320
        %v2631 = vld [vmem:[%s2630] sm:$0xff]
        %v2632 = vld [vmem:[%s2630 + $0x8] sm:$0xff]
        %v2633 = vld [vmem:[%s2630 + $0x10] sm:$0xff]
        %v2634 = vld [vmem:[%s2630 + $0x18] sm:$0xff]
        %v2635 = vld [vmem:[%s2630 + $0x20] sm:$0xff]
        %v2636 = vld [vmem:[%s2630 + $0x28] sm:$0xff]
        %v2637 = vld [vmem:[%s2630 + $0x30] sm:$0xff]
        %v2638 = vld [vmem:[%s2630 + $0x38] sm:$0xff]
        %v2639 = vld [vmem:[%s2630 + $0x40] sm:$0xff]
        %v2640 = vld [vmem:[%s2630 + $0x48] sm:$0xff]
        %v2641 = vrot.slane %v2289, 4
        %v2642 = vsel %vm2315, %v2641, 0
        %2644 = vmatprep.subr.mxu0 0.0
        %2645 = vmatpush1.msra.mxu0 %v2631
        %2646 = vmatprep.subr.mxu0 0.0
        %2647 = vmatpush1.msra.mxu0 %v2632
        %2648 = vmatprep.subr.mxu0 0.0
        %2649 = vmatpush1.msra.mxu0 %v2633
        %2650 = vmatprep.subr.mxu0 0.0
        %2651 = vmatpush1.msra.mxu0 %v2634
        %2652 = vmatprep.subr.mxu0 0.0
        %2653 = vmatpush1.msra.mxu0 %v2635
        %2654 = vmatprep.subr.mxu0 0.0
        %2655 = vmatpush1.msra.mxu0 %v2636
        %2656 = vmatprep.subr.mxu0 0.0
        %2657 = vmatpush1.msra.mxu0 %v2637
        %2658 = vmatprep.subr.mxu0 0.0
        %2659 = vmatpush1.msra.mxu0 %v2638
        %2660 = vmatprep.subr.mxu0 0.0
        %2661 = vmatpush1.msra.mxu0 %v2639
        %2662 = vmatprep.subr.mxu0 0.0
        %2663 = vmatpush1.msra.mxu0 %v2640
        %2664 = vmatprep.subr.mxu0 0.0
        %2665 = vmatpush1.msra.mxu0 0.0
        %2666 = vmatprep.subr.mxu0 0.0
        %2667 = vmatpush1.msra.mxu0 0.0
        %2668 = vmatprep.subr.mxu0 0.0
        %2669 = vmatpush1.msra.mxu0 0.0
        %2670 = vmatprep.subr.mxu0 0.0
        %2671 = vmatpush1.msra.mxu0 0.0
        %2672 = vmatprep.subr.mxu0 0.0
        %2673 = vmatpush1.msra.mxu0 0.0
        %2674 = vmatprep.subr.mxu0 0.0
        %2675 = vmatpush1.msra.mxu0 0.0
        %2676 = vmatprep.subr.mxu0 0.0
        %2677 = vmatpush1.msra.mxu0 0.0
        %2678 = vmatprep.subr.mxu0 0.0
        %2679 = vmatpush1.msra.mxu0 0.0
        %2680 = vmatprep.subr.mxu0 0.0
        %2681 = vmatpush1.msra.mxu0 0.0
        %2682 = vmatprep.subr.mxu0 0.0
        %2683 = vmatpush1.msra.mxu0 0.0
        %2684 = vmatprep.subr.mxu0 0.0
        %2685 = vmatpush1.msra.mxu0 0.0
        %2686 = vmatprep.subr.mxu0 0.0
        %2687 = vmatpush1.msra.mxu0 0.0
        %2688 = vmatprep.subr.mxu0 0.0
        %2689 = vmatpush1.msra.mxu0 0.0
        %2690 = vmatprep.subr.mxu0 0.0
        %2691 = vmatpush1.msra.mxu0 0.0
        %2692 = vmatprep.subr.mxu0 0.0
        %2693 = vmatpush1.msra.mxu0 0.0
        %2694 = vmatprep.subr.mxu0 0.0
        %2695 = vmatpush1.msra.mxu0 0.0
        %2696 = vmatprep.subr.mxu0 0.0
        %2697 = vmatpush1.msra.mxu0 0.0
        %2698 = vmatprep.subr.mxu0 0.0
        %2699 = vmatpush1.msra.mxu0 0.0
        %2700 = vmatprep.subr.mxu0 0.0
        %2701 = vmatpush1.msra.mxu0 0.0
        %2702 = vmatprep.subr.mxu0 0.0
        %2703 = vmatpush1.msra.mxu0 0.0
        %2704 = vmatprep.subr.mxu0 0.0
        %2705 = vmatpush1.msra.mxu0 0.0
        %2706 = vmatprep.subr.mxu0 0.0
        %2707 = vmatpush1.msra.mxu0 0.0
        %2708 = vmatprep.mubr.f32.mxu0 0.0
        %2709 = vmatmul.mubr.f32.gmra.mrb[0].mxu0 %v2642
        %v2710 = vpop.f32.mrb[0].mxu0
        %v2711 = vadd.f32 0.0, %v2710
        %v2712 = vpop.f32.mrb[0].mxu0
        %2713 = vdwg.mxu0
        %v2714 = vadd.f32 %v2629, %v2711
        %v2715 = vld [vmem:[%s10] sm:$0x1]
        %v2716 = vadd.f32 %v2714, %v2715
        %v2717 = vmax.f32 %v2716, 0.0
        %v2718 = vld [vmem:[%s11] sm:$0xff]
        %v2719 = vld [vmem:[%s11 + $0x8] sm:$0xff]
        %v2720 = vld [vmem:[%s11 + $0x10] sm:$0xff]
        %v2721 = vld [vmem:[%s11 + $0x18] sm:$0xff]
        %v2722 = vld [vmem:[%s11 + $0x20] sm:$0xff]
        %v2723 = vld [vmem:[%s11 + $0x28] sm:$0xff]
        %v2724 = vld [vmem:[%s11 + $0x30] sm:$0xff]
        %v2725 = vld [vmem:[%s11 + $0x38] sm:$0xff]
        %v2726 = vld [vmem:[%s11 + $0x40] sm:$0xff]
        %v2727 = vld [vmem:[%s11 + $0x48] sm:$0xff]
        %v2728 = vld [vmem:[%s11 + $0x50] sm:$0xff]
        %v2729 = vld [vmem:[%s11 + $0x58] sm:$0xff]
        %v2730 = vld [vmem:[%s11 + $0x60] sm:$0xff]
        %v2731 = vld [vmem:[%s11 + $0x68] sm:$0xff]
        %v2732 = vld [vmem:[%s11 + $0x70] sm:$0xff]
        %v2733 = vld [vmem:[%s11 + $0x78] sm:$0xff]
        %v2734 = vld [vmem:[%s12] sm:$0x1]
        %2735 = vmatprep.subr.mxu0 0.0
        %2736 = vmatpush1.msra.mxu0 %v2718
        %2737 = vmatprep.subr.mxu0 0.0
        %2738 = vmatpush1.msra.mxu0 %v2719
        %2739 = vmatprep.subr.mxu0 0.0
        %2740 = vmatpush1.msra.mxu0 %v2720
        %2741 = vmatprep.subr.mxu0 0.0
        %2742 = vmatpush1.msra.mxu0 %v2721
        %2743 = vmatprep.subr.mxu0 0.0
        %2744 = vmatpush1.msra.mxu0 %v2722
        %2745 = vmatprep.subr.mxu0 0.0
        %2746 = vmatpush1.msra.mxu0 %v2723
        %2747 = vmatprep.subr.mxu0 0.0
        %2748 = vmatpush1.msra.mxu0 %v2724
        %2749 = vmatprep.subr.mxu0 0.0
        %2750 = vmatpush1.msra.mxu0 %v2725
        %2751 = vmatprep.subr.mxu0 0.0
        %2752 = vmatpush1.msra.mxu0 %v2726
        %2753 = vmatprep.subr.mxu0 0.0
        %2754 = vmatpush1.msra.mxu0 %v2727
        %2755 = vmatprep.subr.mxu0 0.0
        %2756 = vmatpush1.msra.mxu0 %v2728
        %2757 = vmatprep.subr.mxu0 0.0
        %2758 = vmatpush1.msra.mxu0 %v2729
        %2759 = vmatprep.subr.mxu0 0.0
        %2760 = vmatpush1.msra.mxu0 %v2730
        %2761 = vmatprep.subr.mxu0 0.0
        %2762 = vmatpush1.msra.mxu0 %v2731
        %2763 = vmatprep.subr.mxu0 0.0
        %2764 = vmatpush1.msra.mxu0 %v2732
        %2765 = vmatprep.subr.mxu0 0.0
        %2766 = vmatpush1.msra.mxu0 %v2733
        %2767 = vmatprep.subr.mxu0 0.0
        %2768 = vmatpush1.msra.mxu0 0.0
        %2769 = vmatprep.subr.mxu0 0.0
        %2770 = vmatpush1.msra.mxu0 0.0
        %2771 = vmatprep.subr.mxu0 0.0
        %2772 = vmatpush1.msra.mxu0 0.0
        %2773 = vmatprep.subr.mxu0 0.0
        %2774 = vmatpush1.msra.mxu0 0.0
        %2775 = vmatprep.subr.mxu0 0.0
        %2776 = vmatpush1.msra.mxu0 0.0
        %2777 = vmatprep.subr.mxu0 0.0
        %2778 = vmatpush1.msra.mxu0 0.0
        %2779 = vmatprep.subr.mxu0 0.0
        %2780 = vmatpush1.msra.mxu0 0.0
        %2781 = vmatprep.subr.mxu0 0.0
        %2782 = vmatpush1.msra.mxu0 0.0
        %2783 = vmatprep.subr.mxu0 0.0
        %2784 = vmatpush1.msra.mxu0 0.0
        %2785 = vmatprep.subr.mxu0 0.0
        %2786 = vmatpush1.msra.mxu0 0.0
        %2787 = vmatprep.subr.mxu0 0.0
        %2788 = vmatpush1.msra.mxu0 0.0
        %2789 = vmatprep.subr.mxu0 0.0
        %2790 = vmatpush1.msra.mxu0 0.0
        %2791 = vmatprep.subr.mxu0 0.0
        %2792 = vmatpush1.msra.mxu0 0.0
        %2793 = vmatprep.subr.mxu0 0.0
        %2794 = vmatpush1.msra.mxu0 0.0
        %2795 = vmatprep.subr.mxu0 0.0
        %2796 = vmatpush1.msra.mxu0 0.0
        %2797 = vmatprep.subr.mxu0 0.0
        %2798 = vmatpush1.msra.mxu0 0.0
        %2799 = vmatprep.mubr.f32.mxu0 0.0
        %2800 = vmatmul.mubr.f32.gmra.mrb[0].mxu0 %v2717
        %v2801 = vpop.f32.mrb[0].mxu0
        %v2802 = vadd.f32 %v2734, %v2801
        %v2803 = vpop.f32.mrb[0].mxu0
        %2804 = vdwg.mxu0
        %v2805 = vmax.f32 %v2802, 0.0
        %v2806 = vld [vmem:[%s13] sm:$0xff]
        %v2807 = vld [vmem:[%s13 + $0x8] sm:$0xff]
        %v2808 = vld [vmem:[%s13 + $0x10] sm:$0xff]
        %v2809 = vld [vmem:[%s13 + $0x18] sm:$0xff]
        %v2810 = vld [vmem:[%s13 + $0x20] sm:$0xff]
        %v2811 = vld [vmem:[%s13 + $0x28] sm:$0xff]
        %v2812 = vld [vmem:[%s13 + $0x30] sm:$0xff]
        %v2813 = vld [vmem:[%s13 + $0x38] sm:$0xff]
        %v2814 = vld [vmem:[%s13 + $0x40] sm:$0xff]
        %v2815 = vld [vmem:[%s13 + $0x48] sm:$0xff]
        %v2816 = vld [vmem:[%s13 + $0x50] sm:$0xff]
        %v2817 = vld [vmem:[%s13 + $0x58] sm:$0xff]
        %v2818 = vld [vmem:[%s13 + $0x60] sm:$0xff]
        %v2819 = vld [vmem:[%s13 + $0x68] sm:$0xff]
        %v2820 = vld [vmem:[%s13 + $0x70] sm:$0xff]
        %v2821 = vld [vmem:[%s13 + $0x78] sm:$0xff]
        %v2822 = vld [vmem:[%s14] sm:$0x1]
        %2823 = vmatprep.subr.mxu0 0.0
        %2824 = vmatpush1.msra.mxu0 %v2806
        %2825 = vmatprep.subr.mxu0 0.0
        %2826 = vmatpush1.msra.mxu0 %v2807
        %2827 = vmatprep.subr.mxu0 0.0
        %2828 = vmatpush1.msra.mxu0 %v2808
        %2829 = vmatprep.subr.mxu0 0.0
        %2830 = vmatpush1.msra.mxu0 %v2809
        %2831 = vmatprep.subr.mxu0 0.0
        %2832 = vmatpush1.msra.mxu0 %v2810
        %2833 = vmatprep.subr.mxu0 0.0
        %2834 = vmatpush1.msra.mxu0 %v2811
        %2835 = vmatprep.subr.mxu0 0.0
        %2836 = vmatpush1.msra.mxu0 %v2812
        %2837 = vmatprep.subr.mxu0 0.0
        %2838 = vmatpush1.msra.mxu0 %v2813
        %2839 = vmatprep.subr.mxu0 0.0
        %2840 = vmatpush1.msra.mxu0 %v2814
        %2841 = vmatprep.subr.mxu0 0.0
        %2842 = vmatpush1.msra.mxu0 %v2815
        %2843 = vmatprep.subr.mxu0 0.0
        %2844 = vmatpush1.msra.mxu0 %v2816
        %2845 = vmatprep.subr.mxu0 0.0
        %2846 = vmatpush1.msra.mxu0 %v2817
        %2847 = vmatprep.subr.mxu0 0.0
        %2848 = vmatpush1.msra.mxu0 %v2818
        %2849 = vmatprep.subr.mxu0 0.0
        %2850 = vmatpush1.msra.mxu0 %v2819
        %2851 = vmatprep.subr.mxu0 0.0
        %2852 = vmatpush1.msra.mxu0 %v2820
        %2853 = vmatprep.subr.mxu0 0.0
        %2854 = vmatpush1.msra.mxu0 %v2821
        %2855 = vmatprep.subr.mxu0 0.0
        %2856 = vmatpush1.msra.mxu0 0.0
        %2857 = vmatprep.subr.mxu0 0.0
        %2858 = vmatpush1.msra.mxu0 0.0
        %2859 = vmatprep.subr.mxu0 0.0
        %2860 = vmatpush1.msra.mxu0 0.0
        %2861 = vmatprep.subr.mxu0 0.0
        %2862 = vmatpush1.msra.mxu0 0.0
        %2863 = vmatprep.subr.mxu0 0.0
        %2864 = vmatpush1.msra.mxu0 0.0
        %2865 = vmatprep.subr.mxu0 0.0
        %2866 = vmatpush1.msra.mxu0 0.0
        %2867 = vmatprep.subr.mxu0 0.0
        %2868 = vmatpush1.msra.mxu0 0.0
        %2869 = vmatprep.subr.mxu0 0.0
        %2870 = vmatpush1.msra.mxu0 0.0
        %2871 = vmatprep.subr.mxu0 0.0
        %2872 = vmatpush1.msra.mxu0 0.0
        %2873 = vmatprep.subr.mxu0 0.0
        %2874 = vmatpush1.msra.mxu0 0.0
        %2875 = vmatprep.subr.mxu0 0.0
        %2876 = vmatpush1.msra.mxu0 0.0
        %2877 = vmatprep.subr.mxu0 0.0
        %2878 = vmatpush1.msra.mxu0 0.0
        %2879 = vmatprep.subr.mxu0 0.0
        %2880 = vmatpush1.msra.mxu0 0.0
        %2881 = vmatprep.subr.mxu0 0.0
        %2882 = vmatpush1.msra.mxu0 0.0
        %2883 = vmatprep.subr.mxu0 0.0
        %2884 = vmatpush1.msra.mxu0 0.0
        %2885 = vmatprep.subr.mxu0 0.0
        %2886 = vmatpush1.msra.mxu0 0.0
        %2887 = vmatprep.mubr.f32.mxu0 0.0
        %2888 = vmatmul.mubr.f32.gmra.mrb[0].mxu0 %v2805
        %v2889 = vpop.f32.mrb[0].mxu0
        %v2890 = vadd.f32 %v2822, %v2889
        %v2891 = vpop.f32.mrb[0].mxu0
        %2892 = vdwg.mxu0
        %vm2893 = vcmask 73728
        %2894 = vst.msk [vmem:[%s486] sm:$0x1] %vm2893, %v2890
        %s2895 = sand.u32 %s357, 1
        %s2896 = scalar_lea.sflag [#allocation3], %s2895
        %s2897 = sand.u32 %s357, 1
        %s2898 = scalar_lea.vmem [#allocation2], %s2897
        // Predicated region
        $region81: #{lenet_forward.1} parent=79 // pred_check
          %p2899 = pneg %p367
        $region82: #{lenet_forward.1} parent=79 // pred_check_branch
          %2901 = sbr.rel (%p2899) target = $region84
        $region83: #{lenet_forward.1} parent=79 // pred_region
          %s2903 = ssub.s32 16, 16
          %2904 = vsyncadd %s2896, %s2903
          %s2905 = smul.addr %s29, 16
          %s2906 = scalar_lea.hbm %s15, %s2905
          %s2908 = sshll.u32 %s2898, 4
          %s2909 = int_to_ptr.vmem [resolvable:$true] %s2908
          %2911 = dma.vmem_to_hbm [thread:$0]  %s2909, 16, %s2906, %s2896
        $region84: #{lenet_forward.1} parent=79 // pred_fallthru
          _
      $region80: #{lenet_forward.1} parent=5 // pred_fallthru
        _
      %p2912 = scmp.le.s32.totalorder 2, %s24
      // Predicated region
      $region85: #{lenet_forward.1} parent=5 // pred_check
        %p2913 = pneg %p2912
      $region86: #{lenet_forward.1} parent=5 // pred_check_branch
        %2915 = sbr.rel (%p2913) target = $region88
      $region87: #{lenet_forward.1} parent=5 // pred_region
        %s2916 = ssub.s32 %s24, 2
        // Predicated region
        $region89: #{lenet_forward.1} parent=87 // pred_check
          %p2917 = pneg %p373
        $region90: #{lenet_forward.1} parent=87 // pred_check_branch
          %2919 = sbr.rel (%p2917) target = $region92
        $region91: #{lenet_forward.1} parent=87 // pred_region
          %s2920 = sand.u32 %s358, 1
          %s2921 = scalar_lea.sflag [#allocation3], %s2920
          %s2922 = sand.u32 %s358, 1
          %s2923 = scalar_lea.vmem [#allocation2], %s2922
          %2924 = dma.done %s2921, 16
        $region92: #{lenet_forward.1} parent=87 // pred_fallthru
          _
      $region88: #{lenet_forward.1} parent=5 // pred_fallthru
        _
    $region6: #{lenet_forward.1} parent=1 // loop_footer
      %s28 = sadd.s32 1, %s24
    $region7: #{lenet_forward.1} parent=1 // loop_footer_branch
      %23 = sbr.rel target = $region3
    $region8: #{lenet_forward.1} parent=1 // loop_exit
      _
    %2925 = vsyncpa [#allocation3], 1
    %s2926 = scalar_lea.sflag [#allocation3], 1
    %2927 = vsyncpa %s2926, 1

</llo_original>
